<compile_context>
chip_gen: v6e
topology: v6e:2x2x1
jax: 0.10.0
libtpu: 0.0.40
codegen_flags: <defaults>
</compile_context>

<pallas_src>
import functools

import jax
import jax.numpy as jnp
from jax.experimental import pallas as pl
from jax.experimental.pallas import tpu as pltpu


# --------------------------------------------------------------------------
# Fused kernel: Laplacian + group conv + rrdb(3) + fused mask/hr + gated
# upsample(2, last conv trimmed to the 3 returned channels)
# --------------------------------------------------------------------------
def ieem_kernel(x_ref, masks_ref, gw_ref, gb_ref, ws_ref, bs_ref,
                mhw_ref, mhb_ref, u2w_ref, u2b_ref, o_ref, *, H, W):
    HW = H * W
    PAD = W + 1

    masks = masks_ref[...]            # (2, HW) f32
    mask_l = masks[0:1, :]            # zero where w == 0     (for kw == 0 taps)
    mask_r = masks[1:2, :]            # zero where w == W - 1 (for kw == 2 taps)

    def flat_pad(a):
        # a: (C, HW) -> (C, HW + 2*PAD); the zero halo covers +-1 row shifts.
        c = a.shape[0]
        z = jnp.zeros((c, PAD), jnp.float32)
        return jnp.concatenate([z, a, z], axis=1)

    def shift_tap(ap, kh, kw):
        # ap: flat-padded (C, HW + 2*PAD). Returns x[h+kh-1, w+kw-1] flattened,
        # zero outside the image (kh via the flat zero halo, kw via the
        # column-boundary masks).
        s = (kh - 1) * W + (kw - 1)
        y = ap[:, PAD + s:PAD + s + HW]
        if kw == 0:
            y = y * mask_l
        elif kw == 2:
            y = y * mask_r
        return y

    def im2col(a):
        ap = flat_pad(a)
        taps = [shift_tap(ap, kh, kw) for kh in range(3) for kw in range(3)]
        return jnp.concatenate(taps, axis=0)          # (9*C, HW)

    def matmul(w_mat, patches, b_col):
        # Single MXU matmul per conv: (Cout, 9*Cin) @ (9*Cin, HW) -> (Cout, HW)
        return jnp.dot(w_mat, patches,
                       preferred_element_type=jnp.float32) + b_col

    x = x_ref[0]                                      # (3, HW)

    # Depthwise 3x3 Laplacian [[-1,-1,-1],[-1,8,-1],[-1,-1,-1]], pad=1.
    xp = flat_pad(x)
    e_cat = 8.0 * x
    for kh in range(3):
        for kw in range(3):
            if kh == 1 and kw == 1:
                continue
            e_cat = e_cat - shift_tap(xp, kh, kw)

    # group_conv_block (grouped conv expanded to equivalent dense) + ReLU
    f = jnp.maximum(matmul(gw_ref[...], im2col(e_cat), gb_ref[...]), 0.0)

    # rrdb: 3 x (conv3x3 + ReLU)
    for i in range(3):
        f = jnp.maximum(matmul(ws_ref[i], im2col(f), bs_ref[i]), 0.0)

    # mask_conv_block + hr_conv_block fused: one shared im2col(f_d), one matmul
    mh = matmul(mhw_ref[...], im2col(f), mhb_ref[...])        # (24, HW)
    f_m = jax.nn.sigmoid(mh[0:12, :])
    f_h = mh[12:24, :]

    # upsample_block[0] + ReLU on the gated features
    u1 = jnp.maximum(matmul(ws_ref[3], im2col(f_h * f_m), bs_ref[3]), 0.0)

    # upsample_block[2], trimmed to the 3 channels actually returned
    # (torch returns the first 3 channels of cat([f_l, e_cat]) == f_l[:, :3]).
    o_ref[0] = matmul(u2w_ref[...], im2col(u1), u2b_ref[...])


# --------------------------------------------------------------------------
# Host-side wrapper
# --------------------------------------------------------------------------
def _w_to_mat(w_hwio):
    # (3, 3, Cin, Cout) HWIO -> (Cout, 9*Cin) with row order (kh*3 + kw)*Cin + ci,
    # matching the im2col tap/channel ordering inside the kernel.
    kh, kw, cin, cout = w_hwio.shape
    return jnp.transpose(w_hwio, (3, 0, 1, 2)).reshape(cout, kh * kw * cin)


def ieem_forward(images, params):
    # images: tuple of 3 NCHW tensors (B, 1, H, W), mirroring the PyTorch API.
    if images[0].shape[1] != 1:
        raise ValueError(
            "Input images should have 1 channel for Laplacian filtering.")
    B, _, H, W = images[0].shape
    HW = H * W

    # Channel-major, spatially flattened input: (B, 3, H*W); lane axis = H*W.
    x = jnp.concatenate(images, axis=1).reshape(B, 3, HW).astype(jnp.float32)

    # Column-boundary masks used by the in-kernel halo handling.
    w_idx = jnp.arange(HW, dtype=jnp.int32) % W
    masks = jnp.stack([(w_idx >= 1).astype(jnp.float32),
                       (w_idx <= W - 2).astype(jnp.float32)])    # (2, HW)

    gw_hwio, gb = params["g"]
    gw = _w_to_mat(gw_hwio)                                      # (12, 27)
    gbc = gb.reshape(12, 1)

    # Sequential convs sharing shape (12 -> 12): rrdb0, rrdb1, rrdb2, u1.
    seq = list(params["rrdb"]) + [params["u1"]]
    ws = jnp.stack([_w_to_mat(w) for w, _ in seq])               # (4, 12, 108)
    bs = jnp.stack([b for _, b in seq]).reshape(4, 12, 1)        # (4, 12, 1)

    # mask + hr conv fused (same input f_d): stack along output channels.
    (mw, mb), (hw_, hb) = params["mask"], params["hr"]
    mhw = jnp.concatenate([_w_to_mat(mw), _w_to_mat(hw_)], axis=0)   # (24, 108)
    mhb = jnp.concatenate([mb, hb]).reshape(24, 1)

    # Final conv: only the first 3 output channels are ever returned.
    u2w_full, u2b_full = params["u2"]
    u2w = _w_to_mat(u2w_full)[:3]                                # (3, 108)
    u2b = u2b_full[:3].reshape(3, 1)

    out = pl.pallas_call(
        functools.partial(ieem_kernel, H=H, W=W),
        out_shape=jax.ShapeDtypeStruct((B, 3, HW), jnp.float32),
        grid=(B,),
        in_specs=[
            pl.BlockSpec((1, 3, HW), lambda b: (b, 0, 0)),       # x (per batch)
            pl.BlockSpec((2, HW), lambda b: (0, 0)),             # boundary masks
            pl.BlockSpec((12, 27), lambda b: (0, 0)),            # group conv W
            pl.BlockSpec((12, 1), lambda b: (0, 0)),             # group conv b
            pl.BlockSpec((4, 12, 108), lambda b: (0, 0, 0)),     # rrdb0-2, u1 Ws
            pl.BlockSpec((4, 12, 1), lambda b: (0, 0, 0)),       # rrdb0-2, u1 bs
            pl.BlockSpec((24, 108), lambda b: (0, 0)),           # mask|hr W
            pl.BlockSpec((24, 1), lambda b: (0, 0)),             # mask|hr b
            pl.BlockSpec((3, 108), lambda b: (0, 0)),            # u2 W (trimmed)
            pl.BlockSpec((3, 1), lambda b: (0, 0)),              # u2 b (trimmed)
        ],
        out_specs=pl.BlockSpec((1, 3, HW), lambda b: (b, 0, 0)),
        compiler_params=pltpu.CompilerParams(
            dimension_semantics=("parallel",),
            vmem_limit_bytes=32 * 1024 * 1024),
    )(x, masks, gw, gbc, ws, bs, mhw, mhb, u2w, u2b)

    out = out.reshape(B, 3, H, W)
    return tuple(out[:, i:i + 1] for i in range(3))              # three (B,1,H,W)


# --------------------------------------------------------------------------
# Parameters (deterministic synthetic init; shapes match the PyTorch module)
# --------------------------------------------------------------------------
def init_params(key):
    keys = jax.random.split(key, 16)

    def mk(kw_key, kb_key, cin, cout):
        w = jax.random.normal(kw_key, (3, 3, cin, cout), jnp.float32) * 0.1
        b = jax.random.normal(kb_key, (cout,), jnp.float32) * 0.1
        return w, b

    # group_conv_block: Conv2d(3, 12, k=3, groups=3) expanded to an equivalent
    # block-diagonal dense (3 -> 12) HWIO weight: output channel co reads only
    # input channel co // 4 (identical math to the grouped conv).
    wg = jax.random.normal(keys[0], (3, 3, 12), jnp.float32) * 0.1
    dense = jnp.zeros((3, 3, 3, 12), jnp.float32)
    for co in range(12):
        dense = dense.at[:, :, co // 4, co].set(wg[:, :, co])

    return {
        "g": (dense, jax.random.normal(keys[1], (12,), jnp.float32) * 0.1),
        "rrdb": [mk(keys[2], keys[3], 12, 12),
                 mk(keys[4], keys[5], 12, 12),
                 mk(keys[6], keys[7], 12, 12)],
        "mask": mk(keys[8], keys[9], 12, 12),
        "hr": mk(keys[10], keys[11], 12, 12),
        "u1": mk(keys[12], keys[13], 12, 12),
        "u2": mk(keys[14], keys[15], 12, 12),
    }


# --------------------------------------------------------------------------
# Pure-JAX reference (for correctness check)
# --------------------------------------------------------------------------
def _conv_ref(x, w, b, activation=None):
    y = jax.lax.conv_general_dilated(
        x, w, (1, 1), "SAME", dimension_numbers=("NHWC", "HWIO", "NHWC"))
    y = y + b.reshape(1, 1, 1, -1)
    if activation == "relu":
        y = jnp.maximum(y, 0.0)
    elif activation == "sigmoid":
        y = jax.nn.sigmoid(y)
    return y


def _laplacian_ref(x):
    C = x.shape[-1]
    lap = jnp.array([[-1, -1, -1], [-1, 8, -1], [-1, -1, -1]], jnp.float32)
    w = jnp.zeros((3, 3, 1, C), jnp.float32).at[:, :, 0, :].set(lap[:, :, None])
    return jax.lax.conv_general_dilated(
        x, w, (1, 1), "SAME", dimension_numbers=("NHWC", "HWIO", "NHWC"),
        feature_group_count=C)


def ieem_reference(images, params):
    x = jnp.concatenate(
        [jnp.transpose(img, (0, 2, 3, 1)) for img in images], axis=-1)
    e_cat = _laplacian_ref(x)
    gw, gb = params["g"]
    f_d = _conv_ref(e_cat, gw, gb, "relu")
    for w, b in params["rrdb"]:
        f_d = _conv_ref(f_d, w, b, "relu")
    mw, mb = params["mask"]
    hw, hb = params["hr"]
    u1w, u1b = params["u1"]
    u2w, u2b = params["u2"]
    f_m = _conv_ref(f_d, mw, mb, "sigmoid")
    f_h = _conv_ref(f_d, hw, hb, None)
    u1 = _conv_ref(f_h * f_m, u1w, u1b, "relu")
    f_l = _conv_ref(u1, u2w, u2b, None)
    return tuple(
        jnp.transpose(f_l[..., i:i + 1], (0, 3, 1, 2)) for i in range(3))


# --------------------------------------------------------------------------
if __name__ == "__main__":
    B, H, W = 2, 16, 16
    key = jax.random.PRNGKey(0)
    k1, k2, k3, kp = jax.random.split(key, 4)
    images = tuple(
        jax.random.normal(k, (B, 1, H, W), jnp.float32) for k in (k1, k2, k3))
    params = init_params(kp)

    outs = jax.block_until_ready(ieem_forward(images, params))

    refs = ieem_reference(images, params)
    for o, r in zip(outs, refs):
        assert o.shape == (B, 1, H, W), o.shape
        err = float(jnp.max(jnp.abs(o - r)))
        assert jnp.allclose(o, r, atol=1e-3, rtol=1e-3), err

    print("KERNEL_OK")
</pallas_src>

<mosaic_0001>
module attributes {stable_mosaic.version = 11 : i64} {
  func.func @ieem_kernel(%arg0: i32, %arg1: memref<1x3x256xf32, #tpu.memory_space<vmem>>, %arg2: memref<2x256xf32, #tpu.memory_space<vmem>>, %arg3: memref<12x27xf32, #tpu.memory_space<vmem>>, %arg4: memref<12x1xf32, #tpu.memory_space<vmem>>, %arg5: memref<4x12x108xf32, #tpu.memory_space<vmem>>, %arg6: memref<4x12x1xf32, #tpu.memory_space<vmem>>, %arg7: memref<24x108xf32, #tpu.memory_space<vmem>>, %arg8: memref<24x1xf32, #tpu.memory_space<vmem>>, %arg9: memref<3x108xf32, #tpu.memory_space<vmem>>, %arg10: memref<3x1xf32, #tpu.memory_space<vmem>>, %arg11: memref<1x3x256xf32, #tpu.memory_space<vmem>>) attributes {dimension_semantics = [#tpu.dimension_semantics<parallel>], iteration_bounds = array<i64: 2>, scalar_prefetch = 0 : i64, scratch_operands = 0 : i64, tpu.core_type = #tpu.core_type<tc>, window_params = [{transform_indices = @transform_0, window_bounds = array<i64: 1, 3, 256>}, {pipeline_mode = #tpu.pipeline_mode<synchronous>, transform_indices = @transform_1, window_bounds = array<i64: 2, 256>}, {pipeline_mode = #tpu.pipeline_mode<synchronous>, transform_indices = @transform_2, window_bounds = array<i64: 12, 27>}, {pipeline_mode = #tpu.pipeline_mode<synchronous>, transform_indices = @transform_3, window_bounds = array<i64: 12, 1>}, {pipeline_mode = #tpu.pipeline_mode<synchronous>, transform_indices = @transform_4, window_bounds = array<i64: 4, 12, 108>}, {pipeline_mode = #tpu.pipeline_mode<synchronous>, transform_indices = @transform_5, window_bounds = array<i64: 4, 12, 1>}, {pipeline_mode = #tpu.pipeline_mode<synchronous>, transform_indices = @transform_6, window_bounds = array<i64: 24, 108>}, {pipeline_mode = #tpu.pipeline_mode<synchronous>, transform_indices = @transform_7, window_bounds = array<i64: 24, 1>}, {pipeline_mode = #tpu.pipeline_mode<synchronous>, transform_indices = @transform_8, window_bounds = array<i64: 3, 108>}, {pipeline_mode = #tpu.pipeline_mode<synchronous>, transform_indices = @transform_9, window_bounds = array<i64: 3, 1>}, {transform_indices = @transform_10, window_bounds = array<i64: 1, 3, 256>}]} {
    %c0 = arith.constant 0 : index
    %c0_0 = arith.constant 0 : index
    %0 = vector.load %arg2[%c0, %c0_0] : memref<2x256xf32, #tpu.memory_space<vmem>>, vector<2x256xf32>
    %1 = vector.extract_strided_slice %0 {offsets = [0, 0], sizes = [1, 256], strides = [1, 1]} : vector<2x256xf32> to vector<1x256xf32>
    %2 = vector.extract_strided_slice %0 {offsets = [1, 0], sizes = [1, 256], strides = [1, 1]} : vector<2x256xf32> to vector<1x256xf32>
    %c0_1 = arith.constant 0 : index
    %c0_2 = arith.constant 0 : index
    %c0_3 = arith.constant 0 : index
    %3 = vector.load %arg1[%c0_1, %c0_2, %c0_3] : memref<1x3x256xf32, #tpu.memory_space<vmem>>, vector<1x3x256xf32>
    %4 = vector.shape_cast %3 : vector<1x3x256xf32> to vector<3x256xf32>
    %cst = arith.constant 0.000000e+00 : f32
    %5 = vector.broadcast %cst : f32 to vector<3x17xf32>
    %6 = tpu.concatenate %5, %4, %5 in 1 : vector<3x17xf32>, vector<3x256xf32>, vector<3x17xf32> -> vector<3x290xf32>
    %cst_4 = arith.constant 8.000000e+00 : f32
    %7 = vector.broadcast %cst_4 : f32 to vector<3x256xf32>
    %8 = arith.mulf %7, %4 : vector<3x256xf32>
    %9 = vector.extract_strided_slice %6 {offsets = [0, 0], sizes = [3, 256], strides = [1, 1]} : vector<3x290xf32> to vector<3x256xf32>
    %10 = vector.broadcast %1 : vector<1x256xf32> to vector<3x256xf32>
    %11 = arith.mulf %9, %10 : vector<3x256xf32>
    %12 = arith.subf %8, %11 : vector<3x256xf32>
    %13 = vector.extract_strided_slice %6 {offsets = [0, 1], sizes = [3, 256], strides = [1, 1]} : vector<3x290xf32> to vector<3x256xf32>
    %14 = arith.subf %12, %13 : vector<3x256xf32>
    %15 = vector.extract_strided_slice %6 {offsets = [0, 2], sizes = [3, 256], strides = [1, 1]} : vector<3x290xf32> to vector<3x256xf32>
    %16 = vector.broadcast %2 : vector<1x256xf32> to vector<3x256xf32>
    %17 = arith.mulf %15, %16 : vector<3x256xf32>
    %18 = arith.subf %14, %17 : vector<3x256xf32>
    %19 = vector.extract_strided_slice %6 {offsets = [0, 16], sizes = [3, 256], strides = [1, 1]} : vector<3x290xf32> to vector<3x256xf32>
    %20 = vector.broadcast %1 : vector<1x256xf32> to vector<3x256xf32>
    %21 = arith.mulf %19, %20 : vector<3x256xf32>
    %22 = arith.subf %18, %21 : vector<3x256xf32>
    %23 = vector.extract_strided_slice %6 {offsets = [0, 18], sizes = [3, 256], strides = [1, 1]} : vector<3x290xf32> to vector<3x256xf32>
    %24 = vector.broadcast %2 : vector<1x256xf32> to vector<3x256xf32>
    %25 = arith.mulf %23, %24 : vector<3x256xf32>
    %26 = arith.subf %22, %25 : vector<3x256xf32>
    %27 = vector.extract_strided_slice %6 {offsets = [0, 32], sizes = [3, 256], strides = [1, 1]} : vector<3x290xf32> to vector<3x256xf32>
    %28 = vector.broadcast %1 : vector<1x256xf32> to vector<3x256xf32>
    %29 = arith.mulf %27, %28 : vector<3x256xf32>
    %30 = arith.subf %26, %29 : vector<3x256xf32>
    %31 = vector.extract_strided_slice %6 {offsets = [0, 33], sizes = [3, 256], strides = [1, 1]} : vector<3x290xf32> to vector<3x256xf32>
    %32 = arith.subf %30, %31 : vector<3x256xf32>
    %33 = vector.extract_strided_slice %6 {offsets = [0, 34], sizes = [3, 256], strides = [1, 1]} : vector<3x290xf32> to vector<3x256xf32>
    %34 = vector.broadcast %2 : vector<1x256xf32> to vector<3x256xf32>
    %35 = arith.mulf %33, %34 : vector<3x256xf32>
    %36 = arith.subf %32, %35 : vector<3x256xf32>
    %c0_5 = arith.constant 0 : index
    %c0_6 = arith.constant 0 : index
    %37 = vector.load %arg3[%c0_5, %c0_6] : memref<12x27xf32, #tpu.memory_space<vmem>>, vector<12x27xf32>
    %cst_7 = arith.constant 0.000000e+00 : f32
    %38 = vector.broadcast %cst_7 : f32 to vector<3x17xf32>
    %39 = tpu.concatenate %38, %36, %38 in 1 : vector<3x17xf32>, vector<3x256xf32>, vector<3x17xf32> -> vector<3x290xf32>
    %40 = vector.extract_strided_slice %39 {offsets = [0, 0], sizes = [3, 256], strides = [1, 1]} : vector<3x290xf32> to vector<3x256xf32>
    %41 = vector.broadcast %1 : vector<1x256xf32> to vector<3x256xf32>
    %42 = arith.mulf %40, %41 : vector<3x256xf32>
    %43 = vector.extract_strided_slice %39 {offsets = [0, 1], sizes = [3, 256], strides = [1, 1]} : vector<3x290xf32> to vector<3x256xf32>
    %44 = vector.extract_strided_slice %39 {offsets = [0, 2], sizes = [3, 256], strides = [1, 1]} : vector<3x290xf32> to vector<3x256xf32>
    %45 = vector.broadcast %2 : vector<1x256xf32> to vector<3x256xf32>
    %46 = arith.mulf %44, %45 : vector<3x256xf32>
    %47 = vector.extract_strided_slice %39 {offsets = [0, 16], sizes = [3, 256], strides = [1, 1]} : vector<3x290xf32> to vector<3x256xf32>
    %48 = vector.broadcast %1 : vector<1x256xf32> to vector<3x256xf32>
    %49 = arith.mulf %47, %48 : vector<3x256xf32>
    %50 = vector.extract_strided_slice %39 {offsets = [0, 17], sizes = [3, 256], strides = [1, 1]} : vector<3x290xf32> to vector<3x256xf32>
    %51 = vector.extract_strided_slice %39 {offsets = [0, 18], sizes = [3, 256], strides = [1, 1]} : vector<3x290xf32> to vector<3x256xf32>
    %52 = vector.broadcast %2 : vector<1x256xf32> to vector<3x256xf32>
    %53 = arith.mulf %51, %52 : vector<3x256xf32>
    %54 = vector.extract_strided_slice %39 {offsets = [0, 32], sizes = [3, 256], strides = [1, 1]} : vector<3x290xf32> to vector<3x256xf32>
    %55 = vector.broadcast %1 : vector<1x256xf32> to vector<3x256xf32>
    %56 = arith.mulf %54, %55 : vector<3x256xf32>
    %57 = vector.extract_strided_slice %39 {offsets = [0, 33], sizes = [3, 256], strides = [1, 1]} : vector<3x290xf32> to vector<3x256xf32>
    %58 = vector.extract_strided_slice %39 {offsets = [0, 34], sizes = [3, 256], strides = [1, 1]} : vector<3x290xf32> to vector<3x256xf32>
    %59 = vector.broadcast %2 : vector<1x256xf32> to vector<3x256xf32>
    %60 = arith.mulf %58, %59 : vector<3x256xf32>
    %61 = tpu.concatenate %42, %43, %46, %49, %50, %53, %56, %57, %60 in 0 : vector<3x256xf32>, vector<3x256xf32>, vector<3x256xf32>, vector<3x256xf32>, vector<3x256xf32>, vector<3x256xf32>, vector<3x256xf32>, vector<3x256xf32>, vector<3x256xf32> -> vector<27x256xf32>
    %c0_8 = arith.constant 0 : index
    %c0_9 = arith.constant 0 : index
    %62 = vector.load %arg4[%c0_8, %c0_9] : memref<12x1xf32, #tpu.memory_space<vmem>>, vector<12x1xf32>
    %cst_10 = arith.constant dense<0.000000e+00> : vector<12x256xf32>
    %63 = tpu.matmul %37, %61, %cst_10 {dimension_numbers = #tpu.dot_dimension_numbers<[1], [0], [0], [1], [0, 0, 1, 1], [], []>} : vector<12x27xf32>, vector<27x256xf32>, vector<12x256xf32> -> vector<12x256xf32>
    %64 = vector.broadcast %62 : vector<12x1xf32> to vector<12x256xf32>
    %65 = arith.addf %63, %64 : vector<12x256xf32>
    %cst_11 = arith.constant 0.000000e+00 : f32
    %66 = vector.broadcast %cst_11 : f32 to vector<12x256xf32>
    %67 = arith.maximumf %65, %66 : vector<12x256xf32>
    %c0_12 = arith.constant 0 : index
    %c0_13 = arith.constant 0 : index
    %c0_14 = arith.constant 0 : index
    %68 = vector.load %arg5[%c0_12, %c0_13, %c0_14] : memref<4x12x108xf32, #tpu.memory_space<vmem>>, vector<1x12x108xf32>
    %69 = vector.shape_cast %68 : vector<1x12x108xf32> to vector<12x108xf32>
    %cst_15 = arith.constant 0.000000e+00 : f32
    %70 = vector.broadcast %cst_15 : f32 to vector<12x17xf32>
    %71 = tpu.concatenate %70, %67, %70 in 1 : vector<12x17xf32>, vector<12x256xf32>, vector<12x17xf32> -> vector<12x290xf32>
    %72 = vector.extract_strided_slice %71 {offsets = [0, 0], sizes = [12, 256], strides = [1, 1]} : vector<12x290xf32> to vector<12x256xf32>
    %73 = vector.broadcast %1 : vector<1x256xf32> to vector<12x256xf32>
    %74 = arith.mulf %72, %73 : vector<12x256xf32>
    %75 = vector.extract_strided_slice %71 {offsets = [0, 1], sizes = [12, 256], strides = [1, 1]} : vector<12x290xf32> to vector<12x256xf32>
    %76 = vector.extract_strided_slice %71 {offsets = [0, 2], sizes = [12, 256], strides = [1, 1]} : vector<12x290xf32> to vector<12x256xf32>
    %77 = vector.broadcast %2 : vector<1x256xf32> to vector<12x256xf32>
    %78 = arith.mulf %76, %77 : vector<12x256xf32>
    %79 = vector.extract_strided_slice %71 {offsets = [0, 16], sizes = [12, 256], strides = [1, 1]} : vector<12x290xf32> to vector<12x256xf32>
    %80 = vector.broadcast %1 : vector<1x256xf32> to vector<12x256xf32>
    %81 = arith.mulf %79, %80 : vector<12x256xf32>
    %82 = vector.extract_strided_slice %71 {offsets = [0, 17], sizes = [12, 256], strides = [1, 1]} : vector<12x290xf32> to vector<12x256xf32>
    %83 = vector.extract_strided_slice %71 {offsets = [0, 18], sizes = [12, 256], strides = [1, 1]} : vector<12x290xf32> to vector<12x256xf32>
    %84 = vector.broadcast %2 : vector<1x256xf32> to vector<12x256xf32>
    %85 = arith.mulf %83, %84 : vector<12x256xf32>
    %86 = vector.extract_strided_slice %71 {offsets = [0, 32], sizes = [12, 256], strides = [1, 1]} : vector<12x290xf32> to vector<12x256xf32>
    %87 = vector.broadcast %1 : vector<1x256xf32> to vector<12x256xf32>
    %88 = arith.mulf %86, %87 : vector<12x256xf32>
    %89 = vector.extract_strided_slice %71 {offsets = [0, 33], sizes = [12, 256], strides = [1, 1]} : vector<12x290xf32> to vector<12x256xf32>
    %90 = vector.extract_strided_slice %71 {offsets = [0, 34], sizes = [12, 256], strides = [1, 1]} : vector<12x290xf32> to vector<12x256xf32>
    %91 = vector.broadcast %2 : vector<1x256xf32> to vector<12x256xf32>
    %92 = arith.mulf %90, %91 : vector<12x256xf32>
    %93 = tpu.concatenate %74, %75, %78, %81, %82, %85, %88, %89, %92 in 0 : vector<12x256xf32>, vector<12x256xf32>, vector<12x256xf32>, vector<12x256xf32>, vector<12x256xf32>, vector<12x256xf32>, vector<12x256xf32>, vector<12x256xf32>, vector<12x256xf32> -> vector<108x256xf32>
    %c0_16 = arith.constant 0 : index
    %c0_17 = arith.constant 0 : index
    %c0_18 = arith.constant 0 : index
    %94 = vector.load %arg6[%c0_16, %c0_17, %c0_18] : memref<4x12x1xf32, #tpu.memory_space<vmem>>, vector<1x12x1xf32>
    %95 = vector.shape_cast %94 : vector<1x12x1xf32> to vector<12x1xf32>
    %cst_19 = arith.constant dense<0.000000e+00> : vector<12x256xf32>
    %96 = tpu.matmul %69, %93, %cst_19 {dimension_numbers = #tpu.dot_dimension_numbers<[1], [0], [0], [1], [0, 0, 1, 1], [], []>} : vector<12x108xf32>, vector<108x256xf32>, vector<12x256xf32> -> vector<12x256xf32>
    %97 = vector.broadcast %95 : vector<12x1xf32> to vector<12x256xf32>
    %98 = arith.addf %96, %97 : vector<12x256xf32>
    %cst_20 = arith.constant 0.000000e+00 : f32
    %99 = vector.broadcast %cst_20 : f32 to vector<12x256xf32>
    %100 = arith.maximumf %98, %99 : vector<12x256xf32>
    %c1 = arith.constant 1 : index
    %c0_21 = arith.constant 0 : index
    %c0_22 = arith.constant 0 : index
    %101 = vector.load %arg5[%c1, %c0_21, %c0_22] : memref<4x12x108xf32, #tpu.memory_space<vmem>>, vector<1x12x108xf32>
    %102 = vector.shape_cast %101 : vector<1x12x108xf32> to vector<12x108xf32>
    %cst_23 = arith.constant 0.000000e+00 : f32
    %103 = vector.broadcast %cst_23 : f32 to vector<12x17xf32>
    %104 = tpu.concatenate %103, %100, %103 in 1 : vector<12x17xf32>, vector<12x256xf32>, vector<12x17xf32> -> vector<12x290xf32>
    %105 = vector.extract_strided_slice %104 {offsets = [0, 0], sizes = [12, 256], strides = [1, 1]} : vector<12x290xf32> to vector<12x256xf32>
    %106 = vector.broadcast %1 : vector<1x256xf32> to vector<12x256xf32>
    %107 = arith.mulf %105, %106 : vector<12x256xf32>
    %108 = vector.extract_strided_slice %104 {offsets = [0, 1], sizes = [12, 256], strides = [1, 1]} : vector<12x290xf32> to vector<12x256xf32>
    %109 = vector.extract_strided_slice %104 {offsets = [0, 2], sizes = [12, 256], strides = [1, 1]} : vector<12x290xf32> to vector<12x256xf32>
    %110 = vector.broadcast %2 : vector<1x256xf32> to vector<12x256xf32>
    %111 = arith.mulf %109, %110 : vector<12x256xf32>
    %112 = vector.extract_strided_slice %104 {offsets = [0, 16], sizes = [12, 256], strides = [1, 1]} : vector<12x290xf32> to vector<12x256xf32>
    %113 = vector.broadcast %1 : vector<1x256xf32> to vector<12x256xf32>
    %114 = arith.mulf %112, %113 : vector<12x256xf32>
    %115 = vector.extract_strided_slice %104 {offsets = [0, 17], sizes = [12, 256], strides = [1, 1]} : vector<12x290xf32> to vector<12x256xf32>
    %116 = vector.extract_strided_slice %104 {offsets = [0, 18], sizes = [12, 256], strides = [1, 1]} : vector<12x290xf32> to vector<12x256xf32>
    %117 = vector.broadcast %2 : vector<1x256xf32> to vector<12x256xf32>
    %118 = arith.mulf %116, %117 : vector<12x256xf32>
    %119 = vector.extract_strided_slice %104 {offsets = [0, 32], sizes = [12, 256], strides = [1, 1]} : vector<12x290xf32> to vector<12x256xf32>
    %120 = vector.broadcast %1 : vector<1x256xf32> to vector<12x256xf32>
    %121 = arith.mulf %119, %120 : vector<12x256xf32>
    %122 = vector.extract_strided_slice %104 {offsets = [0, 33], sizes = [12, 256], strides = [1, 1]} : vector<12x290xf32> to vector<12x256xf32>
    %123 = vector.extract_strided_slice %104 {offsets = [0, 34], sizes = [12, 256], strides = [1, 1]} : vector<12x290xf32> to vector<12x256xf32>
    %124 = vector.broadcast %2 : vector<1x256xf32> to vector<12x256xf32>
    %125 = arith.mulf %123, %124 : vector<12x256xf32>
    %126 = tpu.concatenate %107, %108, %111, %114, %115, %118, %121, %122, %125 in 0 : vector<12x256xf32>, vector<12x256xf32>, vector<12x256xf32>, vector<12x256xf32>, vector<12x256xf32>, vector<12x256xf32>, vector<12x256xf32>, vector<12x256xf32>, vector<12x256xf32> -> vector<108x256xf32>
    %c1_24 = arith.constant 1 : index
    %c0_25 = arith.constant 0 : index
    %c0_26 = arith.constant 0 : index
    %127 = vector.load %arg6[%c1_24, %c0_25, %c0_26] : memref<4x12x1xf32, #tpu.memory_space<vmem>>, vector<1x12x1xf32>
    %128 = vector.shape_cast %127 : vector<1x12x1xf32> to vector<12x1xf32>
    %cst_27 = arith.constant dense<0.000000e+00> : vector<12x256xf32>
    %129 = tpu.matmul %102, %126, %cst_27 {dimension_numbers = #tpu.dot_dimension_numbers<[1], [0], [0], [1], [0, 0, 1, 1], [], []>} : vector<12x108xf32>, vector<108x256xf32>, vector<12x256xf32> -> vector<12x256xf32>
    %130 = vector.broadcast %128 : vector<12x1xf32> to vector<12x256xf32>
    %131 = arith.addf %129, %130 : vector<12x256xf32>
    %cst_28 = arith.constant 0.000000e+00 : f32
    %132 = vector.broadcast %cst_28 : f32 to vector<12x256xf32>
    %133 = arith.maximumf %131, %132 : vector<12x256xf32>
    %c2 = arith.constant 2 : index
    %c0_29 = arith.constant 0 : index
    %c0_30 = arith.constant 0 : index
    %134 = vector.load %arg5[%c2, %c0_29, %c0_30] : memref<4x12x108xf32, #tpu.memory_space<vmem>>, vector<1x12x108xf32>
    %135 = vector.shape_cast %134 : vector<1x12x108xf32> to vector<12x108xf32>
    %cst_31 = arith.constant 0.000000e+00 : f32
    %136 = vector.broadcast %cst_31 : f32 to vector<12x17xf32>
    %137 = tpu.concatenate %136, %133, %136 in 1 : vector<12x17xf32>, vector<12x256xf32>, vector<12x17xf32> -> vector<12x290xf32>
    %138 = vector.extract_strided_slice %137 {offsets = [0, 0], sizes = [12, 256], strides = [1, 1]} : vector<12x290xf32> to vector<12x256xf32>
    %139 = vector.broadcast %1 : vector<1x256xf32> to vector<12x256xf32>
    %140 = arith.mulf %138, %139 : vector<12x256xf32>
    %141 = vector.extract_strided_slice %137 {offsets = [0, 1], sizes = [12, 256], strides = [1, 1]} : vector<12x290xf32> to vector<12x256xf32>
    %142 = vector.extract_strided_slice %137 {offsets = [0, 2], sizes = [12, 256], strides = [1, 1]} : vector<12x290xf32> to vector<12x256xf32>
    %143 = vector.broadcast %2 : vector<1x256xf32> to vector<12x256xf32>
    %144 = arith.mulf %142, %143 : vector<12x256xf32>
    %145 = vector.extract_strided_slice %137 {offsets = [0, 16], sizes = [12, 256], strides = [1, 1]} : vector<12x290xf32> to vector<12x256xf32>
    %146 = vector.broadcast %1 : vector<1x256xf32> to vector<12x256xf32>
    %147 = arith.mulf %145, %146 : vector<12x256xf32>
    %148 = vector.extract_strided_slice %137 {offsets = [0, 17], sizes = [12, 256], strides = [1, 1]} : vector<12x290xf32> to vector<12x256xf32>
    %149 = vector.extract_strided_slice %137 {offsets = [0, 18], sizes = [12, 256], strides = [1, 1]} : vector<12x290xf32> to vector<12x256xf32>
    %150 = vector.broadcast %2 : vector<1x256xf32> to vector<12x256xf32>
    %151 = arith.mulf %149, %150 : vector<12x256xf32>
    %152 = vector.extract_strided_slice %137 {offsets = [0, 32], sizes = [12, 256], strides = [1, 1]} : vector<12x290xf32> to vector<12x256xf32>
    %153 = vector.broadcast %1 : vector<1x256xf32> to vector<12x256xf32>
    %154 = arith.mulf %152, %153 : vector<12x256xf32>
    %155 = vector.extract_strided_slice %137 {offsets = [0, 33], sizes = [12, 256], strides = [1, 1]} : vector<12x290xf32> to vector<12x256xf32>
    %156 = vector.extract_strided_slice %137 {offsets = [0, 34], sizes = [12, 256], strides = [1, 1]} : vector<12x290xf32> to vector<12x256xf32>
    %157 = vector.broadcast %2 : vector<1x256xf32> to vector<12x256xf32>
    %158 = arith.mulf %156, %157 : vector<12x256xf32>
    %159 = tpu.concatenate %140, %141, %144, %147, %148, %151, %154, %155, %158 in 0 : vector<12x256xf32>, vector<12x256xf32>, vector<12x256xf32>, vector<12x256xf32>, vector<12x256xf32>, vector<12x256xf32>, vector<12x256xf32>, vector<12x256xf32>, vector<12x256xf32> -> vector<108x256xf32>
    %c2_32 = arith.constant 2 : index
    %c0_33 = arith.constant 0 : index
    %c0_34 = arith.constant 0 : index
    %160 = vector.load %arg6[%c2_32, %c0_33, %c0_34] : memref<4x12x1xf32, #tpu.memory_space<vmem>>, vector<1x12x1xf32>
    %161 = vector.shape_cast %160 : vector<1x12x1xf32> to vector<12x1xf32>
    %cst_35 = arith.constant dense<0.000000e+00> : vector<12x256xf32>
    %162 = tpu.matmul %135, %159, %cst_35 {dimension_numbers = #tpu.dot_dimension_numbers<[1], [0], [0], [1], [0, 0, 1, 1], [], []>} : vector<12x108xf32>, vector<108x256xf32>, vector<12x256xf32> -> vector<12x256xf32>
    %163 = vector.broadcast %161 : vector<12x1xf32> to vector<12x256xf32>
    %164 = arith.addf %162, %163 : vector<12x256xf32>
    %cst_36 = arith.constant 0.000000e+00 : f32
    %165 = vector.broadcast %cst_36 : f32 to vector<12x256xf32>
    %166 = arith.maximumf %164, %165 : vector<12x256xf32>
    %c0_37 = arith.constant 0 : index
    %c0_38 = arith.constant 0 : index
    %167 = vector.load %arg7[%c0_37, %c0_38] : memref<24x108xf32, #tpu.memory_space<vmem>>, vector<24x108xf32>
    %cst_39 = arith.constant 0.000000e+00 : f32
    %168 = vector.broadcast %cst_39 : f32 to vector<12x17xf32>
    %169 = tpu.concatenate %168, %166, %168 in 1 : vector<12x17xf32>, vector<12x256xf32>, vector<12x17xf32> -> vector<12x290xf32>
    %170 = vector.extract_strided_slice %169 {offsets = [0, 0], sizes = [12, 256], strides = [1, 1]} : vector<12x290xf32> to vector<12x256xf32>
    %171 = vector.broadcast %1 : vector<1x256xf32> to vector<12x256xf32>
    %172 = arith.mulf %170, %171 : vector<12x256xf32>
    %173 = vector.extract_strided_slice %169 {offsets = [0, 1], sizes = [12, 256], strides = [1, 1]} : vector<12x290xf32> to vector<12x256xf32>
    %174 = vector.extract_strided_slice %169 {offsets = [0, 2], sizes = [12, 256], strides = [1, 1]} : vector<12x290xf32> to vector<12x256xf32>
    %175 = vector.broadcast %2 : vector<1x256xf32> to vector<12x256xf32>
    %176 = arith.mulf %174, %175 : vector<12x256xf32>
    %177 = vector.extract_strided_slice %169 {offsets = [0, 16], sizes = [12, 256], strides = [1, 1]} : vector<12x290xf32> to vector<12x256xf32>
    %178 = vector.broadcast %1 : vector<1x256xf32> to vector<12x256xf32>
    %179 = arith.mulf %177, %178 : vector<12x256xf32>
    %180 = vector.extract_strided_slice %169 {offsets = [0, 17], sizes = [12, 256], strides = [1, 1]} : vector<12x290xf32> to vector<12x256xf32>
    %181 = vector.extract_strided_slice %169 {offsets = [0, 18], sizes = [12, 256], strides = [1, 1]} : vector<12x290xf32> to vector<12x256xf32>
    %182 = vector.broadcast %2 : vector<1x256xf32> to vector<12x256xf32>
    %183 = arith.mulf %181, %182 : vector<12x256xf32>
    %184 = vector.extract_strided_slice %169 {offsets = [0, 32], sizes = [12, 256], strides = [1, 1]} : vector<12x290xf32> to vector<12x256xf32>
    %185 = vector.broadcast %1 : vector<1x256xf32> to vector<12x256xf32>
    %186 = arith.mulf %184, %185 : vector<12x256xf32>
    %187 = vector.extract_strided_slice %169 {offsets = [0, 33], sizes = [12, 256], strides = [1, 1]} : vector<12x290xf32> to vector<12x256xf32>
    %188 = vector.extract_strided_slice %169 {offsets = [0, 34], sizes = [12, 256], strides = [1, 1]} : vector<12x290xf32> to vector<12x256xf32>
    %189 = vector.broadcast %2 : vector<1x256xf32> to vector<12x256xf32>
    %190 = arith.mulf %188, %189 : vector<12x256xf32>
    %191 = tpu.concatenate %172, %173, %176, %179, %180, %183, %186, %187, %190 in 0 : vector<12x256xf32>, vector<12x256xf32>, vector<12x256xf32>, vector<12x256xf32>, vector<12x256xf32>, vector<12x256xf32>, vector<12x256xf32>, vector<12x256xf32>, vector<12x256xf32> -> vector<108x256xf32>
    %c0_40 = arith.constant 0 : index
    %c0_41 = arith.constant 0 : index
    %192 = vector.load %arg8[%c0_40, %c0_41] : memref<24x1xf32, #tpu.memory_space<vmem>>, vector<24x1xf32>
    %cst_42 = arith.constant dense<0.000000e+00> : vector<24x256xf32>
    %193 = tpu.matmul %167, %191, %cst_42 {dimension_numbers = #tpu.dot_dimension_numbers<[1], [0], [0], [1], [0, 0, 1, 1], [], []>} : vector<24x108xf32>, vector<108x256xf32>, vector<24x256xf32> -> vector<24x256xf32>
    %194 = vector.broadcast %192 : vector<24x1xf32> to vector<24x256xf32>
    %195 = arith.addf %193, %194 : vector<24x256xf32>
    %196 = vector.extract_strided_slice %195 {offsets = [0, 0], sizes = [12, 256], strides = [1, 1]} : vector<24x256xf32> to vector<12x256xf32>
    %197 = arith.negf %196 : vector<12x256xf32>
    %198 = math.exp %197 : vector<12x256xf32>
    %cst_43 = arith.constant 1.000000e+00 : f32
    %199 = vector.broadcast %cst_43 : f32 to vector<12x256xf32>
    %200 = arith.addf %199, %198 : vector<12x256xf32>
    %201 = arith.divf %199, %200 : vector<12x256xf32>
    %202 = vector.extract_strided_slice %195 {offsets = [12, 0], sizes = [12, 256], strides = [1, 1]} : vector<24x256xf32> to vector<12x256xf32>
    %c3 = arith.constant 3 : index
    %c0_44 = arith.constant 0 : index
    %c0_45 = arith.constant 0 : index
    %203 = vector.load %arg5[%c3, %c0_44, %c0_45] : memref<4x12x108xf32, #tpu.memory_space<vmem>>, vector<1x12x108xf32>
    %204 = vector.shape_cast %203 : vector<1x12x108xf32> to vector<12x108xf32>
    %205 = arith.mulf %202, %201 : vector<12x256xf32>
    %cst_46 = arith.constant 0.000000e+00 : f32
    %206 = vector.broadcast %cst_46 : f32 to vector<12x17xf32>
    %207 = tpu.concatenate %206, %205, %206 in 1 : vector<12x17xf32>, vector<12x256xf32>, vector<12x17xf32> -> vector<12x290xf32>
    %208 = vector.extract_strided_slice %207 {offsets = [0, 0], sizes = [12, 256], strides = [1, 1]} : vector<12x290xf32> to vector<12x256xf32>
    %209 = vector.broadcast %1 : vector<1x256xf32> to vector<12x256xf32>
    %210 = arith.mulf %208, %209 : vector<12x256xf32>
    %211 = vector.extract_strided_slice %207 {offsets = [0, 1], sizes = [12, 256], strides = [1, 1]} : vector<12x290xf32> to vector<12x256xf32>
    %212 = vector.extract_strided_slice %207 {offsets = [0, 2], sizes = [12, 256], strides = [1, 1]} : vector<12x290xf32> to vector<12x256xf32>
    %213 = vector.broadcast %2 : vector<1x256xf32> to vector<12x256xf32>
    %214 = arith.mulf %212, %213 : vector<12x256xf32>
    %215 = vector.extract_strided_slice %207 {offsets = [0, 16], sizes = [12, 256], strides = [1, 1]} : vector<12x290xf32> to vector<12x256xf32>
    %216 = vector.broadcast %1 : vector<1x256xf32> to vector<12x256xf32>
    %217 = arith.mulf %215, %216 : vector<12x256xf32>
    %218 = vector.extract_strided_slice %207 {offsets = [0, 17], sizes = [12, 256], strides = [1, 1]} : vector<12x290xf32> to vector<12x256xf32>
    %219 = vector.extract_strided_slice %207 {offsets = [0, 18], sizes = [12, 256], strides = [1, 1]} : vector<12x290xf32> to vector<12x256xf32>
    %220 = vector.broadcast %2 : vector<1x256xf32> to vector<12x256xf32>
    %221 = arith.mulf %219, %220 : vector<12x256xf32>
    %222 = vector.extract_strided_slice %207 {offsets = [0, 32], sizes = [12, 256], strides = [1, 1]} : vector<12x290xf32> to vector<12x256xf32>
    %223 = vector.broadcast %1 : vector<1x256xf32> to vector<12x256xf32>
    %224 = arith.mulf %222, %223 : vector<12x256xf32>
    %225 = vector.extract_strided_slice %207 {offsets = [0, 33], sizes = [12, 256], strides = [1, 1]} : vector<12x290xf32> to vector<12x256xf32>
    %226 = vector.extract_strided_slice %207 {offsets = [0, 34], sizes = [12, 256], strides = [1, 1]} : vector<12x290xf32> to vector<12x256xf32>
    %227 = vector.broadcast %2 : vector<1x256xf32> to vector<12x256xf32>
    %228 = arith.mulf %226, %227 : vector<12x256xf32>
    %229 = tpu.concatenate %210, %211, %214, %217, %218, %221, %224, %225, %228 in 0 : vector<12x256xf32>, vector<12x256xf32>, vector<12x256xf32>, vector<12x256xf32>, vector<12x256xf32>, vector<12x256xf32>, vector<12x256xf32>, vector<12x256xf32>, vector<12x256xf32> -> vector<108x256xf32>
    %c3_47 = arith.constant 3 : index
    %c0_48 = arith.constant 0 : index
    %c0_49 = arith.constant 0 : index
    %230 = vector.load %arg6[%c3_47, %c0_48, %c0_49] : memref<4x12x1xf32, #tpu.memory_space<vmem>>, vector<1x12x1xf32>
    %231 = vector.shape_cast %230 : vector<1x12x1xf32> to vector<12x1xf32>
    %cst_50 = arith.constant dense<0.000000e+00> : vector<12x256xf32>
    %232 = tpu.matmul %204, %229, %cst_50 {dimension_numbers = #tpu.dot_dimension_numbers<[1], [0], [0], [1], [0, 0, 1, 1], [], []>} : vector<12x108xf32>, vector<108x256xf32>, vector<12x256xf32> -> vector<12x256xf32>
    %233 = vector.broadcast %231 : vector<12x1xf32> to vector<12x256xf32>
    %234 = arith.addf %232, %233 : vector<12x256xf32>
    %cst_51 = arith.constant 0.000000e+00 : f32
    %235 = vector.broadcast %cst_51 : f32 to vector<12x256xf32>
    %236 = arith.maximumf %234, %235 : vector<12x256xf32>
    %c0_52 = arith.constant 0 : index
    %c0_53 = arith.constant 0 : index
    %237 = vector.load %arg9[%c0_52, %c0_53] : memref<3x108xf32, #tpu.memory_space<vmem>>, vector<3x108xf32>
    %cst_54 = arith.constant 0.000000e+00 : f32
    %238 = vector.broadcast %cst_54 : f32 to vector<12x17xf32>
    %239 = tpu.concatenate %238, %236, %238 in 1 : vector<12x17xf32>, vector<12x256xf32>, vector<12x17xf32> -> vector<12x290xf32>
    %240 = vector.extract_strided_slice %239 {offsets = [0, 0], sizes = [12, 256], strides = [1, 1]} : vector<12x290xf32> to vector<12x256xf32>
    %241 = vector.broadcast %1 : vector<1x256xf32> to vector<12x256xf32>
    %242 = arith.mulf %240, %241 : vector<12x256xf32>
    %243 = vector.extract_strided_slice %239 {offsets = [0, 1], sizes = [12, 256], strides = [1, 1]} : vector<12x290xf32> to vector<12x256xf32>
    %244 = vector.extract_strided_slice %239 {offsets = [0, 2], sizes = [12, 256], strides = [1, 1]} : vector<12x290xf32> to vector<12x256xf32>
    %245 = vector.broadcast %2 : vector<1x256xf32> to vector<12x256xf32>
    %246 = arith.mulf %244, %245 : vector<12x256xf32>
    %247 = vector.extract_strided_slice %239 {offsets = [0, 16], sizes = [12, 256], strides = [1, 1]} : vector<12x290xf32> to vector<12x256xf32>
    %248 = vector.broadcast %1 : vector<1x256xf32> to vector<12x256xf32>
    %249 = arith.mulf %247, %248 : vector<12x256xf32>
    %250 = vector.extract_strided_slice %239 {offsets = [0, 17], sizes = [12, 256], strides = [1, 1]} : vector<12x290xf32> to vector<12x256xf32>
    %251 = vector.extract_strided_slice %239 {offsets = [0, 18], sizes = [12, 256], strides = [1, 1]} : vector<12x290xf32> to vector<12x256xf32>
    %252 = vector.broadcast %2 : vector<1x256xf32> to vector<12x256xf32>
    %253 = arith.mulf %251, %252 : vector<12x256xf32>
    %254 = vector.extract_strided_slice %239 {offsets = [0, 32], sizes = [12, 256], strides = [1, 1]} : vector<12x290xf32> to vector<12x256xf32>
    %255 = vector.broadcast %1 : vector<1x256xf32> to vector<12x256xf32>
    %256 = arith.mulf %254, %255 : vector<12x256xf32>
    %257 = vector.extract_strided_slice %239 {offsets = [0, 33], sizes = [12, 256], strides = [1, 1]} : vector<12x290xf32> to vector<12x256xf32>
    %258 = vector.extract_strided_slice %239 {offsets = [0, 34], sizes = [12, 256], strides = [1, 1]} : vector<12x290xf32> to vector<12x256xf32>
    %259 = vector.broadcast %2 : vector<1x256xf32> to vector<12x256xf32>
    %260 = arith.mulf %258, %259 : vector<12x256xf32>
    %261 = tpu.concatenate %242, %243, %246, %249, %250, %253, %256, %257, %260 in 0 : vector<12x256xf32>, vector<12x256xf32>, vector<12x256xf32>, vector<12x256xf32>, vector<12x256xf32>, vector<12x256xf32>, vector<12x256xf32>, vector<12x256xf32>, vector<12x256xf32> -> vector<108x256xf32>
    %c0_55 = arith.constant 0 : index
    %c0_56 = arith.constant 0 : index
    %262 = vector.load %arg10[%c0_55, %c0_56] : memref<3x1xf32, #tpu.memory_space<vmem>>, vector<3x1xf32>
    %cst_57 = arith.constant dense<0.000000e+00> : vector<3x256xf32>
    %263 = tpu.matmul %237, %261, %cst_57 {dimension_numbers = #tpu.dot_dimension_numbers<[1], [0], [0], [1], [0, 0, 1, 1], [], []>} : vector<3x108xf32>, vector<108x256xf32>, vector<3x256xf32> -> vector<3x256xf32>
    %264 = vector.broadcast %262 : vector<3x1xf32> to vector<3x256xf32>
    %265 = arith.addf %263, %264 : vector<3x256xf32>
    %c0_58 = arith.constant 0 : index
    %c0_59 = arith.constant 0 : index
    %c0_60 = arith.constant 0 : index
    %266 = vector.load %arg11[%c0_58, %c0_59, %c0_60] : memref<1x3x256xf32, #tpu.memory_space<vmem>>, vector<1x3x256xf32>
    %267 = vector.shape_cast %266 : vector<1x3x256xf32> to vector<3x256xf32>
    %268 = vector.shape_cast %265 : vector<3x256xf32> to vector<1x3x256xf32>
    tpu.vector_store %arg11[%c0_58, %c0_59, %c0_60], %268 {strides = array<i32>} : memref<1x3x256xf32, #tpu.memory_space<vmem>>, vector<1x3x256xf32>,
    return
  }
  func.func @transform_0(%arg0: i32) -> (i32, i32, i32) {
    %c0_i32 = arith.constant 0 : i32
    %c0_i32_0 = arith.constant 0 : i32
    %c0_i32_1 = arith.constant 0 : i32
    return %arg0, %c0_i32, %c0_i32_0 : i32, i32, i32
  }
  func.func @transform_1(%arg0: i32) -> (i32, i32) {
    %c0_i32 = arith.constant 0 : i32
    %c0_i32_0 = arith.constant 0 : i32
    %c0_i32_1 = arith.constant 0 : i32
    return %c0_i32, %c0_i32_0 : i32, i32
  }
  func.func @transform_2(%arg0: i32) -> (i32, i32) {
    %c0_i32 = arith.constant 0 : i32
    %c0_i32_0 = arith.constant 0 : i32
    %c0_i32_1 = arith.constant 0 : i32
    return %c0_i32, %c0_i32_0 : i32, i32
  }
  func.func @transform_3(%arg0: i32) -> (i32, i32) {
    %c0_i32 = arith.constant 0 : i32
    %c0_i32_0 = arith.constant 0 : i32
    %c0_i32_1 = arith.constant 0 : i32
    return %c0_i32, %c0_i32_0 : i32, i32
  }
  func.func @transform_4(%arg0: i32) -> (i32, i32, i32) {
    %c0_i32 = arith.constant 0 : i32
    %c0_i32_0 = arith.constant 0 : i32
    %c0_i32_1 = arith.constant 0 : i32
    %c0_i32_2 = arith.constant 0 : i32
    return %c0_i32, %c0_i32_0, %c0_i32_1 : i32, i32, i32
  }
  func.func @transform_5(%arg0: i32) -> (i32, i32, i32) {
    %c0_i32 = arith.constant 0 : i32
    %c0_i32_0 = arith.constant 0 : i32
    %c0_i32_1 = arith.constant 0 : i32
    %c0_i32_2 = arith.constant 0 : i32
    return %c0_i32, %c0_i32_0, %c0_i32_1 : i32, i32, i32
  }
  func.func @transform_6(%arg0: i32) -> (i32, i32) {
    %c0_i32 = arith.constant 0 : i32
    %c0_i32_0 = arith.constant 0 : i32
    %c0_i32_1 = arith.constant 0 : i32
    return %c0_i32, %c0_i32_0 : i32, i32
  }
  func.func @transform_7(%arg0: i32) -> (i32, i32) {
    %c0_i32 = arith.constant 0 : i32
    %c0_i32_0 = arith.constant 0 : i32
    %c0_i32_1 = arith.constant 0 : i32
    return %c0_i32, %c0_i32_0 : i32, i32
  }
  func.func @transform_8(%arg0: i32) -> (i32, i32) {
    %c0_i32 = arith.constant 0 : i32
    %c0_i32_0 = arith.constant 0 : i32
    %c0_i32_1 = arith.constant 0 : i32
    return %c0_i32, %c0_i32_0 : i32, i32
  }
  func.func @transform_9(%arg0: i32) -> (i32, i32) {
    %c0_i32 = arith.constant 0 : i32
    %c0_i32_0 = arith.constant 0 : i32
    %c0_i32_1 = arith.constant 0 : i32
    return %c0_i32, %c0_i32_0 : i32, i32
  }
  func.func @transform_10(%arg0: i32) -> (i32, i32, i32) {
    %c0_i32 = arith.constant 0 : i32
    %c0_i32_0 = arith.constant 0 : i32
    %c0_i32_1 = arith.constant 0 : i32
    return %arg0, %c0_i32, %c0_i32_0 : i32, i32, i32
  }
}

</mosaic_0001>

<llo_original>
// kernel: tpu_custom_call.1
$region0: #{tpu_custom_call.1}
  #allocation0 [shape = 'u32[]', space=smem, size = 0x4, offset = 0x4, fixed_abs, tag = 'smem constant byte address 0x4 - core index']
  #allocation1 [shape = 'u32[144,128]{1,0:T(1,128)}', space=vmem, size = 0x12000, scoped, tag = 'internal scratch']
  %s0 = inlined_call_operand.vmem [shape: f32[2,3,256], index: 0, kind: input, shape index: {}]
  %s1 = inlined_call_operand.vmem [shape: f32[2,256], index: 1, kind: input, shape index: {}]
  %s2 = inlined_call_operand.vmem [shape: f32[12,27], index: 2, kind: input, shape index: {}]
  %s3 = inlined_call_operand.vmem [shape: f32[12,1], index: 3, kind: input, shape index: {}]
  %s4 = inlined_call_operand.vmem [shape: f32[4,12,108], index: 4, kind: input, shape index: {}]
  %s5 = inlined_call_operand.vmem [shape: f32[4,12,1], index: 5, kind: input, shape index: {}]
  %s6 = inlined_call_operand.vmem [shape: f32[24,108], index: 6, kind: input, shape index: {}]
  %s7 = inlined_call_operand.vmem [shape: f32[24,1], index: 7, kind: input, shape index: {}]
  %s8 = inlined_call_operand.vmem [shape: f32[3,108], index: 8, kind: input, shape index: {}]
  %s9 = inlined_call_operand.vmem [shape: f32[3,1], index: 9, kind: input, shape index: {}]
  %s10 = inlined_call_operand.vmem [shape: f32[2,3,256], index: 10, kind: output, shape index: {}]
  %s11 = sld [smem:[#allocation0]]
  $region73: #{tpu_custom_call.1} parent=0
    _
  %s13 = ssub.s32 1, %s11
  %s14 = scalar_select 0, %s13, %s11
  loop: start=0, step=1, limit=4
  $region2: #{tpu_custom_call.1} parent=0 // loop_pre_header
    _
  $region3: #{tpu_custom_call.1} parent=0 // loop_header
    %s16 = sphi 0, %s20
    %p17 = scmp.ge.s32.totalorder %s16, 4
    %s26 = sphi 0, %s28
    %s29 = sphi 0, %s26
    %s30 = sphi 0, %s29
    %s46 = sphi 0, %s30
    %s50 = sphi 0, %s50
    %s52 = sphi 0, %s50
    %s53 = sphi 0, %s52
    %s67 = sphi 0, %s53
    %s71 = sphi 0, %s71
    %s73 = sphi 0, %s71
    %s74 = sphi 0, %s73
    %s88 = sphi 0, %s74
    %s92 = sphi 0, %s92
    %s94 = sphi 0, %s92
    %s95 = sphi 0, %s94
    %s109 = sphi 0, %s95
    %s113 = sphi 0, %s113
    %s115 = sphi 0, %s113
    %s116 = sphi 0, %s115
    %s130 = sphi 0, %s116
    %s134 = sphi 0, %s134
    %s136 = sphi 0, %s134
    %s137 = sphi 0, %s136
    %s151 = sphi 0, %s137
    %s155 = sphi 0, %s155
    %s157 = sphi 0, %s155
    %s158 = sphi 0, %s157
    %s172 = sphi 0, %s158
    %s176 = sphi 0, %s176
    %s178 = sphi 0, %s176
    %s179 = sphi 0, %s178
    %s193 = sphi 0, %s179
    %s197 = sphi 0, %s197
    %s199 = sphi 0, %s197
    %s200 = sphi 0, %s199
    %s214 = sphi 0, %s200
    %s218 = sphi 0, %s218
    %s220 = sphi 0, %s218
    %s221 = sphi 0, %s220
    %s235 = sphi 0, %s221
    %s241 = sphi 0, %s243
    %s244 = sphi 0, %s241
    %s245 = sphi 0, %s244
    %s261 = sphi 0, %s245
  $region4: #{tpu_custom_call.1} parent=0 // loop_header_branch
    %19 = sbr.rel (%p17) target = $region8
  $region5: #{tpu_custom_call.1} parent=0 // loop_body
    %s21 = ssub.s32 %s16, 1
    %s22 = ssub.s32 %s16, 2
    %s23 = sadd.s32 %s16, 1
    %s24 = ssub.s32 %s16, %s23
    %p25 = scmp.eq.s32.totalorder %s24, 0
    %s27 = sadd.s32 %s26, 1
    %s28 = scalar_select %p25, %s26, %s27
    %p31 = pneg %p25
    %p32 = scmp.eq.s32.totalorder %s16, 1
    %p33 = por %p31, %p32
    %p34 = scmp.ne.s32.totalorder %s26, %s29
    %p35 = scmp.eq.s32.totalorder %s16, 0
    %p36 = por %p34, %p35
    %p37 = scmp.ne.s32.totalorder %s26, %s29
    %p38 = scmp.eq.s32.totalorder %s21, 1
    %p39 = por %p37, %p38
    %p40 = scmp.ne.s32.totalorder %s29, %s30
    %p41 = scmp.eq.s32.totalorder %s21, 0
    %p42 = por %p40, %p41
    %p43 = scmp.ne.s32.totalorder %s29, %s30
    %p44 = scmp.eq.s32.totalorder %s22, 1
    %p45 = por %p43, %p44
    %p47 = scmp.ne.s32.totalorder %s30, %s46
    %p48 = scmp.eq.s32.totalorder %s22, 0
    %p49 = por %p47, %p48
    %s51 = sadd.s32 %s50, 1
    %p54 = scmp.eq.s32.totalorder %s16, 1
    %p55 = scmp.ne.s32.totalorder %s50, %s52
    %p56 = scmp.eq.s32.totalorder %s16, 0
    %p57 = por %p55, %p56
    %p58 = scmp.ne.s32.totalorder %s50, %s52
    %p59 = scmp.eq.s32.totalorder %s21, 1
    %p60 = por %p58, %p59
    %p61 = scmp.ne.s32.totalorder %s52, %s53
    %p62 = scmp.eq.s32.totalorder %s21, 0
    %p63 = por %p61, %p62
    %p64 = scmp.ne.s32.totalorder %s52, %s53
    %p65 = scmp.eq.s32.totalorder %s22, 1
    %p66 = por %p64, %p65
    %p68 = scmp.ne.s32.totalorder %s53, %s67
    %p69 = scmp.eq.s32.totalorder %s22, 0
    %p70 = por %p68, %p69
    %s72 = sadd.s32 %s71, 1
    %p75 = scmp.eq.s32.totalorder %s16, 1
    %p76 = scmp.ne.s32.totalorder %s71, %s73
    %p77 = scmp.eq.s32.totalorder %s16, 0
    %p78 = por %p76, %p77
    %p79 = scmp.ne.s32.totalorder %s71, %s73
    %p80 = scmp.eq.s32.totalorder %s21, 1
    %p81 = por %p79, %p80
    %p82 = scmp.ne.s32.totalorder %s73, %s74
    %p83 = scmp.eq.s32.totalorder %s21, 0
    %p84 = por %p82, %p83
    %p85 = scmp.ne.s32.totalorder %s73, %s74
    %p86 = scmp.eq.s32.totalorder %s22, 1
    %p87 = por %p85, %p86
    %p89 = scmp.ne.s32.totalorder %s74, %s88
    %p90 = scmp.eq.s32.totalorder %s22, 0
    %p91 = por %p89, %p90
    %s93 = sadd.s32 %s92, 1
    %p96 = scmp.eq.s32.totalorder %s16, 1
    %p97 = scmp.ne.s32.totalorder %s92, %s94
    %p98 = scmp.eq.s32.totalorder %s16, 0
    %p99 = por %p97, %p98
    %p100 = scmp.ne.s32.totalorder %s92, %s94
    %p101 = scmp.eq.s32.totalorder %s21, 1
    %p102 = por %p100, %p101
    %p103 = scmp.ne.s32.totalorder %s94, %s95
    %p104 = scmp.eq.s32.totalorder %s21, 0
    %p105 = por %p103, %p104
    %p106 = scmp.ne.s32.totalorder %s94, %s95
    %p107 = scmp.eq.s32.totalorder %s22, 1
    %p108 = por %p106, %p107
    %p110 = scmp.ne.s32.totalorder %s95, %s109
    %p111 = scmp.eq.s32.totalorder %s22, 0
    %p112 = por %p110, %p111
    %s114 = sadd.s32 %s113, 1
    %p117 = scmp.eq.s32.totalorder %s16, 1
    %p118 = scmp.ne.s32.totalorder %s113, %s115
    %p119 = scmp.eq.s32.totalorder %s16, 0
    %p120 = por %p118, %p119
    %p121 = scmp.ne.s32.totalorder %s113, %s115
    %p122 = scmp.eq.s32.totalorder %s21, 1
    %p123 = por %p121, %p122
    %p124 = scmp.ne.s32.totalorder %s115, %s116
    %p125 = scmp.eq.s32.totalorder %s21, 0
    %p126 = por %p124, %p125
    %p127 = scmp.ne.s32.totalorder %s115, %s116
    %p128 = scmp.eq.s32.totalorder %s22, 1
    %p129 = por %p127, %p128
    %p131 = scmp.ne.s32.totalorder %s116, %s130
    %p132 = scmp.eq.s32.totalorder %s22, 0
    %p133 = por %p131, %p132
    %s135 = sadd.s32 %s134, 1
    %p138 = scmp.eq.s32.totalorder %s16, 1
    %p139 = scmp.ne.s32.totalorder %s134, %s136
    %p140 = scmp.eq.s32.totalorder %s16, 0
    %p141 = por %p139, %p140
    %p142 = scmp.ne.s32.totalorder %s134, %s136
    %p143 = scmp.eq.s32.totalorder %s21, 1
    %p144 = por %p142, %p143
    %p145 = scmp.ne.s32.totalorder %s136, %s137
    %p146 = scmp.eq.s32.totalorder %s21, 0
    %p147 = por %p145, %p146
    %p148 = scmp.ne.s32.totalorder %s136, %s137
    %p149 = scmp.eq.s32.totalorder %s22, 1
    %p150 = por %p148, %p149
    %p152 = scmp.ne.s32.totalorder %s137, %s151
    %p153 = scmp.eq.s32.totalorder %s22, 0
    %p154 = por %p152, %p153
    %s156 = sadd.s32 %s155, 1
    %p159 = scmp.eq.s32.totalorder %s16, 1
    %p160 = scmp.ne.s32.totalorder %s155, %s157
    %p161 = scmp.eq.s32.totalorder %s16, 0
    %p162 = por %p160, %p161
    %p163 = scmp.ne.s32.totalorder %s155, %s157
    %p164 = scmp.eq.s32.totalorder %s21, 1
    %p165 = por %p163, %p164
    %p166 = scmp.ne.s32.totalorder %s157, %s158
    %p167 = scmp.eq.s32.totalorder %s21, 0
    %p168 = por %p166, %p167
    %p169 = scmp.ne.s32.totalorder %s157, %s158
    %p170 = scmp.eq.s32.totalorder %s22, 1
    %p171 = por %p169, %p170
    %p173 = scmp.ne.s32.totalorder %s158, %s172
    %p174 = scmp.eq.s32.totalorder %s22, 0
    %p175 = por %p173, %p174
    %s177 = sadd.s32 %s176, 1
    %p180 = scmp.eq.s32.totalorder %s16, 1
    %p181 = scmp.ne.s32.totalorder %s176, %s178
    %p182 = scmp.eq.s32.totalorder %s16, 0
    %p183 = por %p181, %p182
    %p184 = scmp.ne.s32.totalorder %s176, %s178
    %p185 = scmp.eq.s32.totalorder %s21, 1
    %p186 = por %p184, %p185
    %p187 = scmp.ne.s32.totalorder %s178, %s179
    %p188 = scmp.eq.s32.totalorder %s21, 0
    %p189 = por %p187, %p188
    %p190 = scmp.ne.s32.totalorder %s178, %s179
    %p191 = scmp.eq.s32.totalorder %s22, 1
    %p192 = por %p190, %p191
    %p194 = scmp.ne.s32.totalorder %s179, %s193
    %p195 = scmp.eq.s32.totalorder %s22, 0
    %p196 = por %p194, %p195
    %s198 = sadd.s32 %s197, 1
    %p201 = scmp.eq.s32.totalorder %s16, 1
    %p202 = scmp.ne.s32.totalorder %s197, %s199
    %p203 = scmp.eq.s32.totalorder %s16, 0
    %p204 = por %p202, %p203
    %p205 = scmp.ne.s32.totalorder %s197, %s199
    %p206 = scmp.eq.s32.totalorder %s21, 1
    %p207 = por %p205, %p206
    %p208 = scmp.ne.s32.totalorder %s199, %s200
    %p209 = scmp.eq.s32.totalorder %s21, 0
    %p210 = por %p208, %p209
    %p211 = scmp.ne.s32.totalorder %s199, %s200
    %p212 = scmp.eq.s32.totalorder %s22, 1
    %p213 = por %p211, %p212
    %p215 = scmp.ne.s32.totalorder %s200, %s214
    %p216 = scmp.eq.s32.totalorder %s22, 0
    %p217 = por %p215, %p216
    %s219 = sadd.s32 %s218, 1
    %p222 = scmp.eq.s32.totalorder %s16, 1
    %p223 = scmp.ne.s32.totalorder %s218, %s220
    %p224 = scmp.eq.s32.totalorder %s16, 0
    %p225 = por %p223, %p224
    %p226 = scmp.ne.s32.totalorder %s218, %s220
    %p227 = scmp.eq.s32.totalorder %s21, 1
    %p228 = por %p226, %p227
    %p229 = scmp.ne.s32.totalorder %s220, %s221
    %p230 = scmp.eq.s32.totalorder %s21, 0
    %p231 = por %p229, %p230
    %p232 = scmp.ne.s32.totalorder %s220, %s221
    %p233 = scmp.eq.s32.totalorder %s22, 1
    %p234 = por %p232, %p233
    %p236 = scmp.ne.s32.totalorder %s221, %s235
    %p237 = scmp.eq.s32.totalorder %s22, 0
    %p238 = por %p236, %p237
    %s239 = ssub.s32 %s16, %s23
    %p240 = scmp.eq.s32.totalorder %s239, 0
    %s242 = sadd.s32 %s241, 1
    %s243 = scalar_select %p240, %s241, %s242
    %p246 = pneg %p240
    %p247 = scmp.eq.s32.totalorder %s16, 1
    %p248 = por %p246, %p247
    %p249 = scmp.ne.s32.totalorder %s241, %s244
    %p250 = scmp.eq.s32.totalorder %s16, 0
    %p251 = por %p249, %p250
    %p252 = scmp.ne.s32.totalorder %s241, %s244
    %p253 = scmp.eq.s32.totalorder %s21, 1
    %p254 = por %p252, %p253
    %p255 = scmp.ne.s32.totalorder %s244, %s245
    %p256 = scmp.eq.s32.totalorder %s21, 0
    %p257 = por %p255, %p256
    %p258 = scmp.ne.s32.totalorder %s244, %s245
    %p259 = scmp.eq.s32.totalorder %s22, 1
    %p260 = por %p258, %p259
    %p262 = scmp.ne.s32.totalorder %s245, %s261
    %p263 = scmp.eq.s32.totalorder %s22, 0
    %p264 = por %p262, %p263
    %p265 = scmp.le.s32.totalorder 1, %s16
    %p266 = scmp.lt.s32.totalorder %s16, 3
    %p267 = pnand %p265, %p266
    %p268 = pneg %p267
    // Predicated region
    $region9: #{tpu_custom_call.1} parent=5 // pred_check
      _
    $region10: #{tpu_custom_call.1} parent=5 // pred_check_branch
      %270 = sbr.rel (%p267) target = $region12
    $region11: #{tpu_custom_call.1} parent=5 // pred_region
      %s271 = ssub.s32 %s16, 1
      // Predicated region
      $region13: #{tpu_custom_call.1} parent=11 // pred_check
        %p272 = pneg %p63
      $region14: #{tpu_custom_call.1} parent=11 // pred_check_branch
        %274 = sbr.rel (%p272) target = $region16
      $region15: #{tpu_custom_call.1} parent=11 // pred_region
        _
      $region16: #{tpu_custom_call.1} parent=11 // pred_fallthru
        _
      // Predicated region
      $region17: #{tpu_custom_call.1} parent=11 // pred_check
        %p275 = pneg %p84
      $region18: #{tpu_custom_call.1} parent=11 // pred_check_branch
        %277 = sbr.rel (%p275) target = $region20
      $region19: #{tpu_custom_call.1} parent=11 // pred_region
        _
      $region20: #{tpu_custom_call.1} parent=11 // pred_fallthru
        _
      // Predicated region
      $region21: #{tpu_custom_call.1} parent=11 // pred_check
        %p278 = pneg %p105
      $region22: #{tpu_custom_call.1} parent=11 // pred_check_branch
        %280 = sbr.rel (%p278) target = $region24
      $region23: #{tpu_custom_call.1} parent=11 // pred_region
        _
      $region24: #{tpu_custom_call.1} parent=11 // pred_fallthru
        _
      // Predicated region
      $region25: #{tpu_custom_call.1} parent=11 // pred_check
        %p281 = pneg %p126
      $region26: #{tpu_custom_call.1} parent=11 // pred_check_branch
        %283 = sbr.rel (%p281) target = $region28
      $region27: #{tpu_custom_call.1} parent=11 // pred_region
        _
      $region28: #{tpu_custom_call.1} parent=11 // pred_fallthru
        _
      // Predicated region
      $region29: #{tpu_custom_call.1} parent=11 // pred_check
        %p284 = pneg %p147
      $region30: #{tpu_custom_call.1} parent=11 // pred_check_branch
        %286 = sbr.rel (%p284) target = $region32
      $region31: #{tpu_custom_call.1} parent=11 // pred_region
        _
      $region32: #{tpu_custom_call.1} parent=11 // pred_fallthru
        _
      // Predicated region
      $region33: #{tpu_custom_call.1} parent=11 // pred_check
        %p287 = pneg %p168
      $region34: #{tpu_custom_call.1} parent=11 // pred_check_branch
        %289 = sbr.rel (%p287) target = $region36
      $region35: #{tpu_custom_call.1} parent=11 // pred_region
        _
      $region36: #{tpu_custom_call.1} parent=11 // pred_fallthru
        _
      // Predicated region
      $region37: #{tpu_custom_call.1} parent=11 // pred_check
        %p290 = pneg %p189
      $region38: #{tpu_custom_call.1} parent=11 // pred_check_branch
        %292 = sbr.rel (%p290) target = $region40
      $region39: #{tpu_custom_call.1} parent=11 // pred_region
        _
      $region40: #{tpu_custom_call.1} parent=11 // pred_fallthru
        _
      // Predicated region
      $region41: #{tpu_custom_call.1} parent=11 // pred_check
        %p293 = pneg %p210
      $region42: #{tpu_custom_call.1} parent=11 // pred_check_branch
        %295 = sbr.rel (%p293) target = $region44
      $region43: #{tpu_custom_call.1} parent=11 // pred_region
        _
      $region44: #{tpu_custom_call.1} parent=11 // pred_fallthru
        _
      // Predicated region
      $region45: #{tpu_custom_call.1} parent=11 // pred_check
        %p296 = pneg %p231
      $region46: #{tpu_custom_call.1} parent=11 // pred_check_branch
        %298 = sbr.rel (%p296) target = $region48
      $region47: #{tpu_custom_call.1} parent=11 // pred_region
        _
      $region48: #{tpu_custom_call.1} parent=11 // pred_fallthru
        _
    $region12: #{tpu_custom_call.1} parent=5 // pred_fallthru
      _
    %p299 = scmp.lt.s32.totalorder %s16, 2
    // Predicated region
    $region49: #{tpu_custom_call.1} parent=5 // pred_check
      %p300 = pneg %p299
    $region50: #{tpu_custom_call.1} parent=5 // pred_check_branch
      %302 = sbr.rel (%p300) target = $region52
    $region51: #{tpu_custom_call.1} parent=5 // pred_region
      // Predicated region
      $region53: #{tpu_custom_call.1} parent=51 // pred_check
        %p303 = pneg %p36
      $region54: #{tpu_custom_call.1} parent=51 // pred_check_branch
        %305 = sbr.rel (%p303) target = $region56
      $region55: #{tpu_custom_call.1} parent=51 // pred_region
        %p306 = scmp.lt.s32.totalorder %s16, 1
        %s307 = scalar_select %p306, %s16, 1
        %s308 = smul.addr %s307, 2
        %s309 = smul.addr %s308, 4
        %s310 = scalar_lea.vmem %s0, %s309
      $region56: #{tpu_custom_call.1} parent=51 // pred_fallthru
        _
    $region52: #{tpu_custom_call.1} parent=5 // pred_fallthru
      _
    %p311 = scmp.le.s32.totalorder 1, %s16
    %p312 = scmp.lt.s32.totalorder %s16, 3
    %p313 = pnand %p311, %p312
    %p314 = pneg %p313
    // Predicated region
    $region57: #{tpu_custom_call.1} parent=5 // pred_check
      _
    $region58: #{tpu_custom_call.1} parent=5 // pred_check_branch
      %316 = sbr.rel (%p313) target = $region60
    $region59: #{tpu_custom_call.1} parent=5 // pred_region
      %s317 = ssub.s32 %s16, 1
      %p318 = scmp.lt.s32.totalorder %s21, 1
      %s319 = scalar_select %p318, %s21, 1
      %s320 = smul.addr %s319, 2
      %s321 = smul.addr %s320, 4
      %s322 = scalar_lea.vmem %s0, %s321
      %p323 = pneg %p42
      %p324 = pneg %p39
      %p325 = pneg %p63
      %p326 = pneg %p60
      %p327 = pneg %p84
      %p328 = pneg %p81
      %p329 = pneg %p105
      %p330 = pneg %p102
      %p331 = pneg %p126
      %p332 = pneg %p123
      %p333 = pneg %p147
      %p334 = pneg %p144
      %p335 = pneg %p168
      %p336 = pneg %p165
      %p337 = pneg %p189
      %p338 = pneg %p186
      %p339 = pneg %p210
      %p340 = pneg %p207
      %p341 = pneg %p231
      %p342 = pneg %p228
      %p343 = pneg %p257
      %p344 = pneg %p254
      %p345 = scmp.lt.s32.totalorder %s21, 1
      %s346 = scalar_select %p345, %s21, 1
      %s347 = smul.addr %s346, 2
      %s348 = smul.addr %s347, 4
      %s349 = scalar_lea.vmem %s10, %s348
      %p350 = scmp.lt.s32.totalorder %s21, 1
      %s351 = scalar_select %p350, %s21, 1
      %s352 = smul.addr %s351, 2
      %s353 = smul.addr %s352, 4
      %s354 = scalar_lea.vmem %s0, %s353
      %p355 = scmp.lt.s32.totalorder %s21, 1
      %s356 = scalar_select %p355, %s21, 1
      %s357 = smul.addr %s356, 2
      %s358 = smul.addr %s357, 4
      %s359 = scalar_lea.vmem %s10, %s358
      %v360 = vld [vmem:[%s1] sm:$0xf]
      %v361 = vld [vmem:[%s354] sm:$0x77]
      %v363 = vcombine.high %v361, %v361
      %364 = vrot.lane.b32.xlu0 %v361, 17
      %v365 = vpop.permute.xlu0 %364
      %366 = vrot.lane.b32.xlu0 %v363, 17
      %v367 = vpop.permute.xlu0 %366
      %vm368 = vcmask 138240
      %v369 = vsel %vm368, %v365, %v367
      %v373 = vsel %vm368, 0.0, %v365
      %v374 = vsel %vm368, %v367, 0.0
      %v375 = vmul.f32 %v361, 8.0
      %v377 = vlaneseq
      %v378 = vshrl.u32 %v377, 7
      %v379 = vsub.s32 0, %v378
      %v380 = vrot.slane %v360, %v379
      %v381 = vlaneseq
      %v382 = vshrl.u32 %v381, 7
      %v383 = vsub.s32 2, %v382
      %v384 = vrot.slane %v360, %v383
      %v387 = vlaneseq
      %v388 = vshrl.u32 %v387, 7
      %v389 = vsub.s32 0, %v388
      %v390 = vrot.slane %v380, %v389
      %v391 = vlaneseq
      %v392 = vshrl.u32 %v391, 7
      %v393 = vsub.s32 0, %v392
      %v394 = vrot.slane %v384, %v393
      %v395 = vmul.f32 %v373, %v390
      %v396 = vmul.f32 %v369, %v394
      %v399 = vcombine.low %v395, %v396
      %v401 = vsub.f32 %v375, %v399
      %v404 = vcombine.low %v373, %v369
      %405 = vrot.lane.b32.xlu0 %v404, 127
      %v406 = vpop.permute.xlu0 %405
      %407 = vrot.lane.b32.xlu0 %v374, 127
      %v408 = vpop.permute.xlu0 %407
      %v409 = vrot.slane %v406, 4
      %v410 = vrot.slane %v408, 4
      %vm411 = vcmask 1043456
      %v412 = vsel %vm411, %v409, %v410
      %vm413 = vcmask 1039360
      %v414 = vsel %vm413, %v406, %v412
      %v416 = vsub.f32 %v401, %v414
      %v417 = vlaneseq
      %v418 = vshrl.u32 %v417, 7
      %v419 = vsub.s32 1, %v418
      %v420 = vrot.slane %v360, %v419
      %v421 = vlaneseq
      %v422 = vshrl.u32 %v421, 7
      %v423 = vsub.s32 3, %v422
      %v424 = vrot.slane %v360, %v423
      %v427 = vlaneseq
      %v428 = vshrl.u32 %v427, 7
      %v429 = vsub.s32 1, %v428
      %v430 = vrot.slane %v420, %v429
      %v431 = vlaneseq
      %v432 = vshrl.u32 %v431, 7
      %v433 = vsub.s32 1, %v432
      %v434 = vrot.slane %v424, %v433
      %437 = vrot.lane.b32.xlu0 %v430, 2
      %v438 = vpop.permute.xlu0 %437
      %439 = vrot.lane.b32.xlu0 %v434, 2
      %v440 = vpop.permute.xlu0 %439
      %vm441 = vcmask 15360
      %v442 = vsel %vm441, %v438, %v440
      %v446 = vmul.f32 %v373, %v438
      %v447 = vmul.f32 %v369, %v442
      %v448 = vmul.f32 %v374, %v440
      %v452 = vcombine.low %v446, %v447
      %453 = vrot.lane.b32.xlu0 %v452, 126
      %v454 = vpop.permute.xlu0 %453
      %455 = vrot.lane.b32.xlu0 %v448, 126
      %v456 = vpop.permute.xlu0 %455
      %v457 = vrot.slane %v454, 4
      %v458 = vrot.slane %v456, 4
      %v459 = vsel %vm411, %v457, %v458
      %vm460 = vcmask 1031168
      %v461 = vsel %vm460, %v454, %v459
      %v463 = vsub.f32 %v416, %v461
      %466 = vrot.lane.b32.xlu0 %v390, 16
      %v467 = vpop.permute.xlu0 %466
      %468 = vrot.lane.b32.xlu0 %v394, 16
      %v469 = vpop.permute.xlu0 %468
      %vm470 = vcmask 130048
      %v471 = vsel %vm470, %v467, %v469
      %v475 = vmul.f32 %v373, %v467
      %v476 = vmul.f32 %v369, %v471
      %v477 = vmul.f32 %v374, %v469
      %v481 = vcombine.low %v475, %v476
      %482 = vrot.lane.b32.xlu0 %v481, 112
      %v483 = vpop.permute.xlu0 %482
      %484 = vrot.lane.b32.xlu0 %v477, 112
      %v485 = vpop.permute.xlu0 %484
      %v486 = vrot.slane %v483, 4
      %v487 = vrot.slane %v485, 4
      %v488 = vsel %vm411, %v486, %v487
      %vm489 = vcmask 916480
      %v490 = vsel %vm489, %v483, %v488
      %v492 = vsub.f32 %v463, %v490
      %493 = vrot.lane.b32.xlu0 %v430, 18
      %v494 = vpop.permute.xlu0 %493
      %495 = vrot.lane.b32.xlu0 %v434, 18
      %v496 = vpop.permute.xlu0 %495
      %vm497 = vcmask 146432
      %v498 = vsel %vm497, %v494, %v496
      %v502 = vmul.f32 %v373, %v494
      %v503 = vmul.f32 %v369, %v498
      %v504 = vmul.f32 %v374, %v496
      %v508 = vcombine.low %v502, %v503
      %509 = vrot.lane.b32.xlu0 %v508, 110
      %v510 = vpop.permute.xlu0 %509
      %511 = vrot.lane.b32.xlu0 %v504, 110
      %v512 = vpop.permute.xlu0 %511
      %v513 = vrot.slane %v510, 4
      %v514 = vrot.slane %v512, 4
      %v515 = vsel %vm411, %v513, %v514
      %vm516 = vcmask 900096
      %v517 = vsel %vm516, %v510, %v515
      %v519 = vsub.f32 %v492, %v517
      %520 = vrot.lane.b32.xlu0 %v390, 32
      %v521 = vpop.permute.xlu0 %520
      %522 = vrot.lane.b32.xlu0 %v394, 32
      %v523 = vpop.permute.xlu0 %522
      %vm524 = vcmask 261120
      %v525 = vsel %vm524, %v521, %v523
      %v529 = vmul.f32 %v373, %v521
      %v530 = vmul.f32 %v369, %v525
      %v531 = vmul.f32 %v374, %v523
      %v535 = vcombine.low %v529, %v530
      %536 = vrot.lane.b32.xlu0 %v535, 96
      %v537 = vpop.permute.xlu0 %536
      %538 = vrot.lane.b32.xlu0 %v531, 96
      %v539 = vpop.permute.xlu0 %538
      %v540 = vrot.slane %v537, 4
      %v541 = vrot.slane %v539, 4
      %v542 = vsel %vm411, %v540, %v541
      %vm543 = vcmask 785408
      %v544 = vsel %vm543, %v537, %v542
      %v546 = vsub.f32 %v519, %v544
      %547 = vrot.lane.b32.xlu0 %v404, 95
      %v548 = vpop.permute.xlu0 %547
      %549 = vrot.lane.b32.xlu0 %v374, 95
      %v550 = vpop.permute.xlu0 %549
      %v551 = vrot.slane %v548, 4
      %v552 = vrot.slane %v550, 4
      %v553 = vsel %vm411, %v551, %v552
      %vm554 = vcmask 777216
      %v555 = vsel %vm554, %v548, %v553
      %v557 = vsub.f32 %v546, %v555
      %558 = vrot.lane.b32.xlu0 %v430, 34
      %v559 = vpop.permute.xlu0 %558
      %560 = vrot.lane.b32.xlu0 %v434, 34
      %v561 = vpop.permute.xlu0 %560
      %vm562 = vcmask 277504
      %v563 = vsel %vm562, %v559, %v561
      %v567 = vmul.f32 %v373, %v559
      %v568 = vmul.f32 %v369, %v563
      %v569 = vmul.f32 %v374, %v561
      %v573 = vcombine.low %v567, %v568
      %574 = vrot.lane.b32.xlu0 %v573, 94
      %v575 = vpop.permute.xlu0 %574
      %576 = vrot.lane.b32.xlu0 %v569, 94
      %v577 = vpop.permute.xlu0 %576
      %v578 = vrot.slane %v575, 4
      %v579 = vrot.slane %v577, 4
      %v580 = vsel %vm411, %v578, %v579
      %vm581 = vcmask 769024
      %v582 = vsel %vm581, %v575, %v580
      %v584 = vsub.f32 %v557, %v582
      %v585 = vld [vmem:[%s2] sm:$0xff]
      %v586 = vld [vmem:[%s2 + $0x8] sm:$0xf]
      %v588 = vcombine.high %v584, %v584
      %589 = vrot.lane.b32.xlu0 %v584, 17
      %v590 = vpop.permute.xlu0 %589
      %591 = vrot.lane.b32.xlu0 %v588, 17
      %v592 = vpop.permute.xlu0 %591
      %v593 = vsel %vm368, %v590, %v592
      %v597 = vsel %vm368, 0.0, %v590
      %v598 = vsel %vm368, %v592, 0.0
      %v599 = vmul.f32 %v597, %v390
      %v600 = vmul.f32 %v593, %v394
      %v601 = vmul.f32 %v597, %v438
      %v602 = vmul.f32 %v593, %v442
      %v603 = vmul.f32 %v598, %v440
      %v604 = vmul.f32 %v597, %v467
      %v605 = vmul.f32 %v593, %v471
      %v606 = vmul.f32 %v598, %v469
      %v607 = vmul.f32 %v597, %v494
      %v608 = vmul.f32 %v593, %v498
      %v609 = vmul.f32 %v598, %v496
      %v610 = vmul.f32 %v597, %v521
      %v611 = vmul.f32 %v593, %v525
      %v612 = vmul.f32 %v598, %v523
      %v613 = vmul.f32 %v597, %v559
      %v614 = vmul.f32 %v593, %v563
      %v615 = vmul.f32 %v598, %v561
      %v618 = vrot.slane %v597, 5
      %v619 = vrot.slane %v593, 5
      %v620 = vrot.slane %v598, 5
      %621 = vrot.lane.b32.xlu0 %v618, 127
      %v622 = vpop.permute.xlu0 %621
      %623 = vrot.lane.b32.xlu0 %v619, 127
      %v624 = vpop.permute.xlu0 %623
      %625 = vrot.lane.b32.xlu0 %v620, 127
      %v626 = vpop.permute.xlu0 %625
      %v627 = vsel %vm413, %v622, %v624
      %v628 = vsel %vm413, %v624, %v626
      %v634 = vrot.slane %v601, 2
      %v635 = vrot.slane %v602, 2
      %v636 = vrot.slane %v603, 2
      %637 = vrot.lane.b32.xlu0 %v634, 126
      %v638 = vpop.permute.xlu0 %637
      %639 = vrot.lane.b32.xlu0 %v635, 126
      %v640 = vpop.permute.xlu0 %639
      %641 = vrot.lane.b32.xlu0 %v636, 126
      %v642 = vpop.permute.xlu0 %641
      %v643 = vsel %vm460, %v638, %v640
      %v644 = vsel %vm460, %v640, %v642
      %v650 = vrot.slane %v604, 7
      %v651 = vrot.slane %v605, 7
      %v652 = vrot.slane %v606, 7
      %653 = vrot.lane.b32.xlu0 %v650, 112
      %v654 = vpop.permute.xlu0 %653
      %655 = vrot.lane.b32.xlu0 %v651, 112
      %v656 = vpop.permute.xlu0 %655
      %657 = vrot.lane.b32.xlu0 %v652, 112
      %v658 = vpop.permute.xlu0 %657
      %v659 = vsel %vm489, %v654, %v656
      %v660 = vsel %vm489, %v656, %v658
      %v663 = vrot.slane %v597, 4
      %v664 = vrot.slane %v593, 4
      %v665 = vrot.slane %v598, 4
      %666 = vrot.lane.b32.xlu0 %v663, 111
      %v667 = vpop.permute.xlu0 %666
      %668 = vrot.lane.b32.xlu0 %v664, 111
      %v669 = vpop.permute.xlu0 %668
      %670 = vrot.lane.b32.xlu0 %v665, 111
      %v671 = vpop.permute.xlu0 %670
      %vm672 = vcmask 908288
      %v673 = vsel %vm672, %v667, %v669
      %v674 = vsel %vm672, %v669, %v671
      %v680 = vrot.slane %v607, 1
      %v681 = vrot.slane %v608, 1
      %v682 = vrot.slane %v609, 1
      %683 = vrot.lane.b32.xlu0 %v680, 110
      %v684 = vpop.permute.xlu0 %683
      %685 = vrot.lane.b32.xlu0 %v681, 110
      %v686 = vpop.permute.xlu0 %685
      %687 = vrot.lane.b32.xlu0 %v682, 110
      %v688 = vpop.permute.xlu0 %687
      %v689 = vsel %vm516, %v684, %v686
      %v690 = vsel %vm516, %v686, %v688
      %v696 = vrot.slane %v610, 6
      %v697 = vrot.slane %v611, 6
      %v698 = vrot.slane %v612, 6
      %699 = vrot.lane.b32.xlu0 %v696, 96
      %v700 = vpop.permute.xlu0 %699
      %701 = vrot.lane.b32.xlu0 %v697, 96
      %v702 = vpop.permute.xlu0 %701
      %703 = vrot.lane.b32.xlu0 %v698, 96
      %v704 = vpop.permute.xlu0 %703
      %v705 = vsel %vm543, %v700, %v702
      %v706 = vsel %vm543, %v702, %v704
      %v709 = vrot.slane %v597, 3
      %v710 = vrot.slane %v593, 3
      %v711 = vrot.slane %v598, 3
      %712 = vrot.lane.b32.xlu0 %v709, 95
      %v713 = vpop.permute.xlu0 %712
      %714 = vrot.lane.b32.xlu0 %v710, 95
      %v715 = vpop.permute.xlu0 %714
      %716 = vrot.lane.b32.xlu0 %v711, 95
      %v717 = vpop.permute.xlu0 %716
      %v718 = vsel %vm554, %v713, %v715
      %v719 = vsel %vm554, %v715, %v717
      %725 = vrot.lane.b32.xlu0 %v613, 94
      %v726 = vpop.permute.xlu0 %725
      %727 = vrot.lane.b32.xlu0 %v614, 94
      %v728 = vpop.permute.xlu0 %727
      %729 = vrot.lane.b32.xlu0 %v615, 94
      %v730 = vpop.permute.xlu0 %729
      %v731 = vsel %vm581, %v726, %v728
      %v732 = vsel %vm581, %v728, %v730
      %vm733 = vcmask 1042432
      %v734 = vsel %vm733, %v599, %v627
      %v735 = vsel %vm733, %v600, %v628
      %vm736 = vcmask 1045504
      %v737 = vsel %vm736, %v734, %v643
      %v738 = vsel %vm736, %v735, %v644
      %vm739 = vcmask 1040384
      %v740 = vsel %vm739, %v643, %v659
      %v741 = vsel %vm739, %v644, %v660
      %v742 = vsel %vm411, %v740, %v673
      %v743 = vsel %vm411, %v741, %v674
      %vm744 = vcmask 1046528
      %v745 = vsel %vm744, %v742, %v689
      %v746 = vsel %vm744, %v743, %v690
      %vm747 = vcmask 1041408
      %v748 = vsel %vm747, %v689, %v705
      %v749 = vsel %vm747, %v690, %v706
      %vm750 = vcmask 1044480
      %v751 = vsel %vm750, %v748, %v718
      %v752 = vsel %vm750, %v749, %v719
      %v753 = vld [vmem:[%s3] sm:$0xff]
      %v754 = vld [vmem:[%s3 + $0x8] sm:$0xf]
      %756 = vset.pattern.permute.xlu0 0
      %757 = vperm.xlu0 %756, %v753
      %v758 = vpop.permute.xlu0 %757
      %761 = vset.pattern.permute.xlu0 0
      %762 = vperm.xlu0 %761, %v754
      %v763 = vpop.permute.xlu0 %762
      %vm765 = vcmask 220160
      %v767 = vsel %vm765, %v585, 0
      %v770 = vsel %vm765, %v586, 0
      %v772 = vsel %vm733, %v731, 0
      %v774 = vsel %vm733, %v732, 0
      %776 = vmatprep.subr.mxu0 0.0
      %777 = vmatpush1.msra.mxu0 0.0
      %778 = vmatprep.subr.mxu0 0.0
      %779 = vmatpush1.msra.mxu0 0.0
      %780 = vmatprep.subr.mxu0 0.0
      %781 = vmatpush1.msra.mxu0 0.0
      %782 = vmatprep.subr.mxu0 0.0
      %783 = vmatpush1.msra.mxu0 0.0
      %784 = vmatprep.subr.mxu0 0.0
      %785 = vmatpush1.msra.mxu0 0.0
      %786 = vmatprep.subr.mxu0 0.0
      %787 = vmatpush1.msra.mxu0 0.0
      %788 = vmatprep.subr.mxu0 0.0
      %789 = vmatpush1.msra.mxu0 0.0
      %790 = vmatprep.subr.mxu0 0.0
      %791 = vmatpush1.msra.mxu0 0.0
      %792 = vmatprep.subr.mxu0 0.0
      %793 = vmatpush1.msra.mxu0 0.0
      %794 = vmatprep.subr.mxu0 0.0
      %795 = vmatpush1.msra.mxu0 0.0
      %796 = vmatprep.subr.mxu0 0.0
      %797 = vmatpush1.msra.mxu0 0.0
      %798 = vmatprep.subr.mxu0 0.0
      %799 = vmatpush1.msra.mxu0 0.0
      %800 = vmatprep.subr.mxu0 %v774
      %801 = vmatpush1.msra.mxu0 %v772
      %802 = vmatprep.subr.mxu0 %v752
      %803 = vmatpush1.msra.mxu0 %v751
      %804 = vmatprep.subr.mxu0 %v746
      %805 = vmatpush1.msra.mxu0 %v745
      %806 = vmatprep.subr.mxu0 %v738
      %807 = vmatpush1.msra.mxu0 %v737
      %808 = vmatprep.subr.mxu0 0.0
      %809 = vmatpush2.msra.mxu0 0.0
      %810 = vmatprep.subr.mxu0 0.0
      %811 = vmatpush2.msra.mxu0 0.0
      %812 = vmatprep.subr.mxu0 0.0
      %813 = vmatpush2.msra.mxu0 0.0
      %814 = vmatprep.subr.mxu0 0.0
      %815 = vmatpush2.msra.mxu0 0.0
      %816 = vmatprep.subr.mxu0 0.0
      %817 = vmatpush2.msra.mxu0 0.0
      %818 = vmatprep.subr.mxu0 0.0
      %819 = vmatpush2.msra.mxu0 0.0
      %820 = vmatprep.subr.mxu0 0.0
      %821 = vmatpush2.msra.mxu0 0.0
      %822 = vmatprep.subr.mxu0 0.0
      %823 = vmatpush2.msra.mxu0 0.0
      %824 = vmatprep.subr.mxu0 0.0
      %825 = vmatpush2.msra.mxu0 0.0
      %826 = vmatprep.subr.mxu0 0.0
      %827 = vmatpush2.msra.mxu0 0.0
      %828 = vmatprep.subr.mxu0 0.0
      %829 = vmatpush2.msra.mxu0 0.0
      %830 = vmatprep.subr.mxu0 0.0
      %831 = vmatpush2.msra.mxu0 0.0
      %832 = vmatprep.subr.mxu0 0.0
      %833 = vmatpush2.msra.mxu0 0.0
      %834 = vmatprep.subr.mxu0 0.0
      %835 = vmatpush2.msra.mxu0 0.0
      %836 = vmatprep.subr.mxu0 0.0
      %837 = vmatpush2.msra.mxu0 0.0
      %838 = vmatprep.subr.mxu0 0.0
      %839 = vmatpush2.msra.mxu0 0.0
      %840 = vmatprep.mubr.f32.mxu0 0.0
      %841 = vmatmul.mubr.f32.gmra.mxu0 %v767
      %v842 = vpop.f32.mrf.mxu0
      %v843 = vadd.f32 %v758, %v842
      %v844 = vpop.f32.mrf.mxu0
      %v845 = vadd.f32 %v758, %v844
      %846 = vmatprep.mubr.f32.mxu0 0.0
      %847 = vmatmul.mubr.f32.gmra.mxu0 %v770
      %v848 = vpop.f32.mrf.mxu0
      %v849 = vadd.f32 %v763, %v848
      %v850 = vpop.f32.mrf.mxu0
      %v851 = vadd.f32 %v763, %v850
      %852 = vdwg.mxu0
      %v853 = vmax.f32 %v843, 0.0
      %v854 = vmax.f32 %v845, 0.0
      %v855 = vmax.f32 %v849, 0.0
      %v856 = vmax.f32 %v851, 0.0
      %v857 = vld [vmem:[%s4] sm:$0xff]
      %v858 = vld [vmem:[%s4 + $0x8] sm:$0xf]
      %863 = vrot.lane.b32.xlu0 %v853, 17
      %v864 = vpop.permute.xlu0 %863
      %865 = vrot.lane.b32.xlu0 %v854, 17
      %v866 = vpop.permute.xlu0 %865
      %867 = vrot.lane.b32.xlu0 %v855, 17
      %v868 = vpop.permute.xlu0 %867
      %869 = vrot.lane.b32.xlu0 %v856, 17
      %v870 = vpop.permute.xlu0 %869
      %v871 = vsel %vm368, %v864, %v866
      %v872 = vsel %vm368, %v868, %v870
      %v879 = vsel %vm368, 0.0, %v864
      %v880 = vsel %vm368, 0.0, %v868
      %v881 = vsel %vm368, %v866, 0.0
      %v882 = vsel %vm368, %v870, 0.0
      %v883 = vmul.f32 %v879, %v390
      %v884 = vmul.f32 %v871, %v394
      %v885 = vmul.f32 %v880, %v390
      %v886 = vmul.f32 %v872, %v394
      %v887 = vmul.f32 %v879, %v438
      %v888 = vmul.f32 %v871, %v442
      %v889 = vmul.f32 %v881, %v440
      %v890 = vmul.f32 %v880, %v438
      %v891 = vmul.f32 %v872, %v442
      %v892 = vmul.f32 %v882, %v440
      %v893 = vmul.f32 %v879, %v467
      %v894 = vmul.f32 %v871, %v471
      %v895 = vmul.f32 %v881, %v469
      %v896 = vmul.f32 %v880, %v467
      %v897 = vmul.f32 %v872, %v471
      %v898 = vmul.f32 %v882, %v469
      %v899 = vmul.f32 %v879, %v494
      %v900 = vmul.f32 %v871, %v498
      %v901 = vmul.f32 %v881, %v496
      %v902 = vmul.f32 %v880, %v494
      %v903 = vmul.f32 %v872, %v498
      %v904 = vmul.f32 %v882, %v496
      %v905 = vmul.f32 %v879, %v521
      %v906 = vmul.f32 %v871, %v525
      %v907 = vmul.f32 %v881, %v523
      %v908 = vmul.f32 %v880, %v521
      %v909 = vmul.f32 %v872, %v525
      %v910 = vmul.f32 %v882, %v523
      %v911 = vmul.f32 %v879, %v559
      %v912 = vmul.f32 %v871, %v563
      %v913 = vmul.f32 %v881, %v561
      %v914 = vmul.f32 %v880, %v559
      %v915 = vmul.f32 %v872, %v563
      %v916 = vmul.f32 %v882, %v561
      %v921 = vrot.slane %v879, 4
      %v922 = vrot.slane %v871, 4
      %v923 = vrot.slane %v881, 4
      %v924 = vrot.slane %v880, 4
      %v925 = vsel %vm411, %v921, %v924
      %v926 = vrot.slane %v872, 4
      %v927 = vsel %vm411, %v922, %v926
      %v928 = vrot.slane %v882, 4
      %v929 = vsel %vm411, %v923, %v928
      %930 = vrot.lane.b32.xlu0 %v921, 127
      %v931 = vpop.permute.xlu0 %930
      %932 = vrot.lane.b32.xlu0 %v922, 127
      %v933 = vpop.permute.xlu0 %932
      %934 = vrot.lane.b32.xlu0 %v923, 127
      %v935 = vpop.permute.xlu0 %934
      %936 = vrot.lane.b32.xlu0 %v925, 127
      %v937 = vpop.permute.xlu0 %936
      %938 = vrot.lane.b32.xlu0 %v927, 127
      %v939 = vpop.permute.xlu0 %938
      %940 = vrot.lane.b32.xlu0 %v929, 127
      %v941 = vpop.permute.xlu0 %940
      %v942 = vsel %vm413, %v931, %v933
      %v943 = vsel %vm413, %v933, %v935
      %v944 = vsel %vm413, %v937, %v939
      %v945 = vsel %vm413, %v939, %v941
      %956 = vrot.lane.b32.xlu0 %v887, 126
      %v957 = vpop.permute.xlu0 %956
      %958 = vrot.lane.b32.xlu0 %v888, 126
      %v959 = vpop.permute.xlu0 %958
      %960 = vrot.lane.b32.xlu0 %v889, 126
      %v961 = vpop.permute.xlu0 %960
      %962 = vrot.lane.b32.xlu0 %v890, 126
      %v963 = vpop.permute.xlu0 %962
      %964 = vrot.lane.b32.xlu0 %v891, 126
      %v965 = vpop.permute.xlu0 %964
      %966 = vrot.lane.b32.xlu0 %v892, 126
      %v967 = vpop.permute.xlu0 %966
      %v968 = vsel %vm460, %v957, %v959
      %v969 = vsel %vm460, %v959, %v961
      %v970 = vsel %vm460, %v963, %v965
      %v971 = vsel %vm460, %v965, %v967
      %v982 = vrot.slane %v893, 4
      %v983 = vrot.slane %v894, 4
      %v984 = vrot.slane %v895, 4
      %v985 = vrot.slane %v896, 4
      %v986 = vsel %vm411, %v982, %v985
      %v987 = vrot.slane %v897, 4
      %v988 = vsel %vm411, %v983, %v987
      %v989 = vrot.slane %v898, 4
      %v990 = vsel %vm411, %v984, %v989
      %991 = vrot.lane.b32.xlu0 %v982, 112
      %v992 = vpop.permute.xlu0 %991
      %993 = vrot.lane.b32.xlu0 %v983, 112
      %v994 = vpop.permute.xlu0 %993
      %995 = vrot.lane.b32.xlu0 %v984, 112
      %v996 = vpop.permute.xlu0 %995
      %997 = vrot.lane.b32.xlu0 %v986, 112
      %v998 = vpop.permute.xlu0 %997
      %999 = vrot.lane.b32.xlu0 %v988, 112
      %v1000 = vpop.permute.xlu0 %999
      %1001 = vrot.lane.b32.xlu0 %v990, 112
      %v1002 = vpop.permute.xlu0 %1001
      %v1003 = vsel %vm489, %v992, %v994
      %v1004 = vsel %vm489, %v994, %v996
      %v1005 = vsel %vm489, %v998, %v1000
      %v1006 = vsel %vm489, %v1000, %v1002
      %1011 = vrot.lane.b32.xlu0 %v879, 111
      %v1012 = vpop.permute.xlu0 %1011
      %1013 = vrot.lane.b32.xlu0 %v871, 111
      %v1014 = vpop.permute.xlu0 %1013
      %1015 = vrot.lane.b32.xlu0 %v881, 111
      %v1016 = vpop.permute.xlu0 %1015
      %1017 = vrot.lane.b32.xlu0 %v880, 111
      %v1018 = vpop.permute.xlu0 %1017
      %1019 = vrot.lane.b32.xlu0 %v872, 111
      %v1020 = vpop.permute.xlu0 %1019
      %1021 = vrot.lane.b32.xlu0 %v882, 111
      %v1022 = vpop.permute.xlu0 %1021
      %v1023 = vsel %vm672, %v1012, %v1014
      %v1024 = vsel %vm672, %v1014, %v1016
      %v1025 = vsel %vm672, %v1018, %v1020
      %v1026 = vsel %vm672, %v1020, %v1022
      %v1037 = vrot.slane %v899, 4
      %v1038 = vrot.slane %v900, 4
      %v1039 = vrot.slane %v901, 4
      %v1040 = vrot.slane %v902, 4
      %v1041 = vsel %vm411, %v1037, %v1040
      %v1042 = vrot.slane %v903, 4
      %v1043 = vsel %vm411, %v1038, %v1042
      %v1044 = vrot.slane %v904, 4
      %v1045 = vsel %vm411, %v1039, %v1044
      %1046 = vrot.lane.b32.xlu0 %v1037, 110
      %v1047 = vpop.permute.xlu0 %1046
      %1048 = vrot.lane.b32.xlu0 %v1038, 110
      %v1049 = vpop.permute.xlu0 %1048
      %1050 = vrot.lane.b32.xlu0 %v1039, 110
      %v1051 = vpop.permute.xlu0 %1050
      %1052 = vrot.lane.b32.xlu0 %v1041, 110
      %v1053 = vpop.permute.xlu0 %1052
      %1054 = vrot.lane.b32.xlu0 %v1043, 110
      %v1055 = vpop.permute.xlu0 %1054
      %1056 = vrot.lane.b32.xlu0 %v1045, 110
      %v1057 = vpop.permute.xlu0 %1056
      %v1058 = vsel %vm516, %v1047, %v1049
      %v1059 = vsel %vm516, %v1049, %v1051
      %v1060 = vsel %vm516, %v1053, %v1055
      %v1061 = vsel %vm516, %v1055, %v1057
      %1072 = vrot.lane.b32.xlu0 %v905, 96
      %v1073 = vpop.permute.xlu0 %1072
      %1074 = vrot.lane.b32.xlu0 %v906, 96
      %v1075 = vpop.permute.xlu0 %1074
      %1076 = vrot.lane.b32.xlu0 %v907, 96
      %v1077 = vpop.permute.xlu0 %1076
      %1078 = vrot.lane.b32.xlu0 %v908, 96
      %v1079 = vpop.permute.xlu0 %1078
      %1080 = vrot.lane.b32.xlu0 %v909, 96
      %v1081 = vpop.permute.xlu0 %1080
      %1082 = vrot.lane.b32.xlu0 %v910, 96
      %v1083 = vpop.permute.xlu0 %1082
      %v1084 = vsel %vm543, %v1073, %v1075
      %v1085 = vsel %vm543, %v1075, %v1077
      %v1086 = vsel %vm543, %v1079, %v1081
      %v1087 = vsel %vm543, %v1081, %v1083
      %1092 = vrot.lane.b32.xlu0 %v921, 95
      %v1093 = vpop.permute.xlu0 %1092
      %1094 = vrot.lane.b32.xlu0 %v922, 95
      %v1095 = vpop.permute.xlu0 %1094
      %1096 = vrot.lane.b32.xlu0 %v923, 95
      %v1097 = vpop.permute.xlu0 %1096
      %1098 = vrot.lane.b32.xlu0 %v925, 95
      %v1099 = vpop.permute.xlu0 %1098
      %1100 = vrot.lane.b32.xlu0 %v927, 95
      %v1101 = vpop.permute.xlu0 %1100
      %1102 = vrot.lane.b32.xlu0 %v929, 95
      %v1103 = vpop.permute.xlu0 %1102
      %v1104 = vsel %vm554, %v1093, %v1095
      %v1105 = vsel %vm554, %v1095, %v1097
      %v1106 = vsel %vm554, %v1099, %v1101
      %v1107 = vsel %vm554, %v1101, %v1103
      %1118 = vrot.lane.b32.xlu0 %v911, 94
      %v1119 = vpop.permute.xlu0 %1118
      %1120 = vrot.lane.b32.xlu0 %v912, 94
      %v1121 = vpop.permute.xlu0 %1120
      %1122 = vrot.lane.b32.xlu0 %v913, 94
      %v1123 = vpop.permute.xlu0 %1122
      %1124 = vrot.lane.b32.xlu0 %v914, 94
      %v1125 = vpop.permute.xlu0 %1124
      %1126 = vrot.lane.b32.xlu0 %v915, 94
      %v1127 = vpop.permute.xlu0 %1126
      %1128 = vrot.lane.b32.xlu0 %v916, 94
      %v1129 = vpop.permute.xlu0 %1128
      %v1130 = vsel %vm581, %v1119, %v1121
      %v1131 = vsel %vm581, %v1121, %v1123
      %v1132 = vsel %vm581, %v1125, %v1127
      %v1133 = vsel %vm581, %v1127, %v1129
      %v1136 = vsel %vm411, %v885, %v942
      %v1137 = vsel %vm411, %v886, %v943
      %v1138 = vsel %vm411, %v970, %v1003
      %v1139 = vsel %vm411, %v971, %v1004
      %v1140 = vsel %vm411, %v1025, %v1058
      %v1141 = vsel %vm411, %v1026, %v1059
      %v1142 = vsel %vm411, %v1086, %v1104
      %v1143 = vsel %vm411, %v1087, %v1105
      %v1144 = vld [vmem:[%s5] sm:$0xff]
      %v1145 = vld [vmem:[%s5 + $0x8] sm:$0xf]
      %1147 = vset.pattern.permute.xlu0 0
      %1148 = vperm.xlu0 %1147, %v1144
      %v1149 = vpop.permute.xlu0 %1148
      %1152 = vset.pattern.permute.xlu0 0
      %1153 = vperm.xlu0 %1152, %v1145
      %v1154 = vpop.permute.xlu0 %1153
      %vm1156 = vcmask 883712
      %v1158 = vsel %vm1156, %v857, 0
      %v1161 = vsel %vm1156, %v858, 0
      %v1163 = vsel %vm411, %v1132, 0
      %v1165 = vsel %vm411, %v1133, 0
      %1167 = vmatprep.subr.mxu0 0.0
      %1168 = vmatpush1.msra.mxu0 0.0
      %1169 = vmatprep.subr.mxu0 0.0
      %1170 = vmatpush1.msra.mxu0 0.0
      %1171 = vmatprep.subr.mxu0 %v1165
      %1172 = vmatpush1.msra.mxu0 %v1163
      %1173 = vmatprep.subr.mxu0 %v1131
      %1174 = vmatpush1.msra.mxu0 %v1130
      %1175 = vmatprep.subr.mxu0 %v1107
      %1176 = vmatpush1.msra.mxu0 %v1106
      %1177 = vmatprep.subr.mxu0 %v1143
      %1178 = vmatpush1.msra.mxu0 %v1142
      %1179 = vmatprep.subr.mxu0 %v1085
      %1180 = vmatpush1.msra.mxu0 %v1084
      %1181 = vmatprep.subr.mxu0 %v1061
      %1182 = vmatpush1.msra.mxu0 %v1060
      %1183 = vmatprep.subr.mxu0 %v1141
      %1184 = vmatpush1.msra.mxu0 %v1140
      %1185 = vmatprep.subr.mxu0 %v1024
      %1186 = vmatpush1.msra.mxu0 %v1023
      %1187 = vmatprep.subr.mxu0 %v1006
      %1188 = vmatpush1.msra.mxu0 %v1005
      %1189 = vmatprep.subr.mxu0 %v1139
      %1190 = vmatpush1.msra.mxu0 %v1138
      %1191 = vmatprep.subr.mxu0 %v969
      %1192 = vmatpush1.msra.mxu0 %v968
      %1193 = vmatprep.subr.mxu0 %v945
      %1194 = vmatpush1.msra.mxu0 %v944
      %1195 = vmatprep.subr.mxu0 %v1137
      %1196 = vmatpush1.msra.mxu0 %v1136
      %1197 = vmatprep.subr.mxu0 %v884
      %1198 = vmatpush1.msra.mxu0 %v883
      %1199 = vmatprep.subr.mxu0 0.0
      %1200 = vmatpush2.msra.mxu0 0.0
      %1201 = vmatprep.subr.mxu0 0.0
      %1202 = vmatpush2.msra.mxu0 0.0
      %1203 = vmatprep.subr.mxu0 0.0
      %1204 = vmatpush2.msra.mxu0 0.0
      %1205 = vmatprep.subr.mxu0 0.0
      %1206 = vmatpush2.msra.mxu0 0.0
      %1207 = vmatprep.subr.mxu0 0.0
      %1208 = vmatpush2.msra.mxu0 0.0
      %1209 = vmatprep.subr.mxu0 0.0
      %1210 = vmatpush2.msra.mxu0 0.0
      %1211 = vmatprep.subr.mxu0 0.0
      %1212 = vmatpush2.msra.mxu0 0.0
      %1213 = vmatprep.subr.mxu0 0.0
      %1214 = vmatpush2.msra.mxu0 0.0
      %1215 = vmatprep.subr.mxu0 0.0
      %1216 = vmatpush2.msra.mxu0 0.0
      %1217 = vmatprep.subr.mxu0 0.0
      %1218 = vmatpush2.msra.mxu0 0.0
      %1219 = vmatprep.subr.mxu0 0.0
      %1220 = vmatpush2.msra.mxu0 0.0
      %1221 = vmatprep.subr.mxu0 0.0
      %1222 = vmatpush2.msra.mxu0 0.0
      %1223 = vmatprep.subr.mxu0 0.0
      %1224 = vmatpush2.msra.mxu0 0.0
      %1225 = vmatprep.subr.mxu0 0.0
      %1226 = vmatpush2.msra.mxu0 0.0
      %1227 = vmatprep.subr.mxu0 0.0
      %1228 = vmatpush2.msra.mxu0 0.0
      %1229 = vmatprep.subr.mxu0 0.0
      %1230 = vmatpush2.msra.mxu0 0.0
      %1231 = vmatprep.mubr.f32.mxu0 0.0
      %1232 = vmatmul.mubr.f32.gmra.mxu0 %v1158
      %v1233 = vpop.f32.mrf.mxu0
      %v1234 = vadd.f32 %v1149, %v1233
      %v1235 = vpop.f32.mrf.mxu0
      %v1236 = vadd.f32 %v1149, %v1235
      %1237 = vmatprep.mubr.f32.mxu0 0.0
      %1238 = vmatmul.mubr.f32.gmra.mxu0 %v1161
      %v1239 = vpop.f32.mrf.mxu0
      %v1240 = vadd.f32 %v1154, %v1239
      %v1241 = vpop.f32.mrf.mxu0
      %v1242 = vadd.f32 %v1154, %v1241
      %1243 = vdwg.mxu0
      %v1244 = vmax.f32 %v1234, 0.0
      %v1245 = vmax.f32 %v1236, 0.0
      %v1246 = vmax.f32 %v1240, 0.0
      %v1247 = vmax.f32 %v1242, 0.0
      %s1248 = scalar_lea.vmem %s4, 16
      %v1249 = vld [vmem:[%s1248] sm:$0xff]
      %v1250 = vld [vmem:[%s1248 + $0x8] sm:$0xf]
      %1255 = vrot.lane.b32.xlu0 %v1244, 17
      %v1256 = vpop.permute.xlu0 %1255
      %1257 = vrot.lane.b32.xlu0 %v1245, 17
      %v1258 = vpop.permute.xlu0 %1257
      %1259 = vrot.lane.b32.xlu0 %v1246, 17
      %v1260 = vpop.permute.xlu0 %1259
      %1261 = vrot.lane.b32.xlu0 %v1247, 17
      %v1262 = vpop.permute.xlu0 %1261
      %v1263 = vsel %vm368, %v1256, %v1258
      %v1264 = vsel %vm368, %v1260, %v1262
      %v1271 = vsel %vm368, 0.0, %v1256
      %v1272 = vsel %vm368, 0.0, %v1260
      %v1273 = vsel %vm368, %v1258, 0.0
      %v1274 = vsel %vm368, %v1262, 0.0
      %v1275 = vmul.f32 %v1271, %v390
      %v1276 = vmul.f32 %v1263, %v394
      %v1277 = vmul.f32 %v1272, %v390
      %v1278 = vmul.f32 %v1264, %v394
      %v1279 = vmul.f32 %v1271, %v438
      %v1280 = vmul.f32 %v1263, %v442
      %v1281 = vmul.f32 %v1273, %v440
      %v1282 = vmul.f32 %v1272, %v438
      %v1283 = vmul.f32 %v1264, %v442
      %v1284 = vmul.f32 %v1274, %v440
      %v1285 = vmul.f32 %v1271, %v467
      %v1286 = vmul.f32 %v1263, %v471
      %v1287 = vmul.f32 %v1273, %v469
      %v1288 = vmul.f32 %v1272, %v467
      %v1289 = vmul.f32 %v1264, %v471
      %v1290 = vmul.f32 %v1274, %v469
      %v1291 = vmul.f32 %v1271, %v494
      %v1292 = vmul.f32 %v1263, %v498
      %v1293 = vmul.f32 %v1273, %v496
      %v1294 = vmul.f32 %v1272, %v494
      %v1295 = vmul.f32 %v1264, %v498
      %v1296 = vmul.f32 %v1274, %v496
      %v1297 = vmul.f32 %v1271, %v521
      %v1298 = vmul.f32 %v1263, %v525
      %v1299 = vmul.f32 %v1273, %v523
      %v1300 = vmul.f32 %v1272, %v521
      %v1301 = vmul.f32 %v1264, %v525
      %v1302 = vmul.f32 %v1274, %v523
      %v1303 = vmul.f32 %v1271, %v559
      %v1304 = vmul.f32 %v1263, %v563
      %v1305 = vmul.f32 %v1273, %v561
      %v1306 = vmul.f32 %v1272, %v559
      %v1307 = vmul.f32 %v1264, %v563
      %v1308 = vmul.f32 %v1274, %v561
      %v1313 = vrot.slane %v1271, 4
      %v1314 = vrot.slane %v1263, 4
      %v1315 = vrot.slane %v1273, 4
      %v1316 = vrot.slane %v1272, 4
      %v1317 = vsel %vm411, %v1313, %v1316
      %v1318 = vrot.slane %v1264, 4
      %v1319 = vsel %vm411, %v1314, %v1318
      %v1320 = vrot.slane %v1274, 4
      %v1321 = vsel %vm411, %v1315, %v1320
      %1322 = vrot.lane.b32.xlu0 %v1313, 127
      %v1323 = vpop.permute.xlu0 %1322
      %1324 = vrot.lane.b32.xlu0 %v1314, 127
      %v1325 = vpop.permute.xlu0 %1324
      %1326 = vrot.lane.b32.xlu0 %v1315, 127
      %v1327 = vpop.permute.xlu0 %1326
      %1328 = vrot.lane.b32.xlu0 %v1317, 127
      %v1329 = vpop.permute.xlu0 %1328
      %1330 = vrot.lane.b32.xlu0 %v1319, 127
      %v1331 = vpop.permute.xlu0 %1330
      %1332 = vrot.lane.b32.xlu0 %v1321, 127
      %v1333 = vpop.permute.xlu0 %1332
      %v1334 = vsel %vm413, %v1323, %v1325
      %v1335 = vsel %vm413, %v1325, %v1327
      %v1336 = vsel %vm413, %v1329, %v1331
      %v1337 = vsel %vm413, %v1331, %v1333
      %1348 = vrot.lane.b32.xlu0 %v1279, 126
      %v1349 = vpop.permute.xlu0 %1348
      %1350 = vrot.lane.b32.xlu0 %v1280, 126
      %v1351 = vpop.permute.xlu0 %1350
      %1352 = vrot.lane.b32.xlu0 %v1281, 126
      %v1353 = vpop.permute.xlu0 %1352
      %1354 = vrot.lane.b32.xlu0 %v1282, 126
      %v1355 = vpop.permute.xlu0 %1354
      %1356 = vrot.lane.b32.xlu0 %v1283, 126
      %v1357 = vpop.permute.xlu0 %1356
      %1358 = vrot.lane.b32.xlu0 %v1284, 126
      %v1359 = vpop.permute.xlu0 %1358
      %v1360 = vsel %vm460, %v1349, %v1351
      %v1361 = vsel %vm460, %v1351, %v1353
      %v1362 = vsel %vm460, %v1355, %v1357
      %v1363 = vsel %vm460, %v1357, %v1359
      %v1374 = vrot.slane %v1285, 4
      %v1375 = vrot.slane %v1286, 4
      %v1376 = vrot.slane %v1287, 4
      %v1377 = vrot.slane %v1288, 4
      %v1378 = vsel %vm411, %v1374, %v1377
      %v1379 = vrot.slane %v1289, 4
      %v1380 = vsel %vm411, %v1375, %v1379
      %v1381 = vrot.slane %v1290, 4
      %v1382 = vsel %vm411, %v1376, %v1381
      %1383 = vrot.lane.b32.xlu0 %v1374, 112
      %v1384 = vpop.permute.xlu0 %1383
      %1385 = vrot.lane.b32.xlu0 %v1375, 112
      %v1386 = vpop.permute.xlu0 %1385
      %1387 = vrot.lane.b32.xlu0 %v1376, 112
      %v1388 = vpop.permute.xlu0 %1387
      %1389 = vrot.lane.b32.xlu0 %v1378, 112
      %v1390 = vpop.permute.xlu0 %1389
      %1391 = vrot.lane.b32.xlu0 %v1380, 112
      %v1392 = vpop.permute.xlu0 %1391
      %1393 = vrot.lane.b32.xlu0 %v1382, 112
      %v1394 = vpop.permute.xlu0 %1393
      %v1395 = vsel %vm489, %v1384, %v1386
      %v1396 = vsel %vm489, %v1386, %v1388
      %v1397 = vsel %vm489, %v1390, %v1392
      %v1398 = vsel %vm489, %v1392, %v1394
      %1403 = vrot.lane.b32.xlu0 %v1271, 111
      %v1404 = vpop.permute.xlu0 %1403
      %1405 = vrot.lane.b32.xlu0 %v1263, 111
      %v1406 = vpop.permute.xlu0 %1405
      %1407 = vrot.lane.b32.xlu0 %v1273, 111
      %v1408 = vpop.permute.xlu0 %1407
      %1409 = vrot.lane.b32.xlu0 %v1272, 111
      %v1410 = vpop.permute.xlu0 %1409
      %1411 = vrot.lane.b32.xlu0 %v1264, 111
      %v1412 = vpop.permute.xlu0 %1411
      %1413 = vrot.lane.b32.xlu0 %v1274, 111
      %v1414 = vpop.permute.xlu0 %1413
      %v1415 = vsel %vm672, %v1404, %v1406
      %v1416 = vsel %vm672, %v1406, %v1408
      %v1417 = vsel %vm672, %v1410, %v1412
      %v1418 = vsel %vm672, %v1412, %v1414
      %v1429 = vrot.slane %v1291, 4
      %v1430 = vrot.slane %v1292, 4
      %v1431 = vrot.slane %v1293, 4
      %v1432 = vrot.slane %v1294, 4
      %v1433 = vsel %vm411, %v1429, %v1432
      %v1434 = vrot.slane %v1295, 4
      %v1435 = vsel %vm411, %v1430, %v1434
      %v1436 = vrot.slane %v1296, 4
      %v1437 = vsel %vm411, %v1431, %v1436
      %1438 = vrot.lane.b32.xlu0 %v1429, 110
      %v1439 = vpop.permute.xlu0 %1438
      %1440 = vrot.lane.b32.xlu0 %v1430, 110
      %v1441 = vpop.permute.xlu0 %1440
      %1442 = vrot.lane.b32.xlu0 %v1431, 110
      %v1443 = vpop.permute.xlu0 %1442
      %1444 = vrot.lane.b32.xlu0 %v1433, 110
      %v1445 = vpop.permute.xlu0 %1444
      %1446 = vrot.lane.b32.xlu0 %v1435, 110
      %v1447 = vpop.permute.xlu0 %1446
      %1448 = vrot.lane.b32.xlu0 %v1437, 110
      %v1449 = vpop.permute.xlu0 %1448
      %v1450 = vsel %vm516, %v1439, %v1441
      %v1451 = vsel %vm516, %v1441, %v1443
      %v1452 = vsel %vm516, %v1445, %v1447
      %v1453 = vsel %vm516, %v1447, %v1449
      %1464 = vrot.lane.b32.xlu0 %v1297, 96
      %v1465 = vpop.permute.xlu0 %1464
      %1466 = vrot.lane.b32.xlu0 %v1298, 96
      %v1467 = vpop.permute.xlu0 %1466
      %1468 = vrot.lane.b32.xlu0 %v1299, 96
      %v1469 = vpop.permute.xlu0 %1468
      %1470 = vrot.lane.b32.xlu0 %v1300, 96
      %v1471 = vpop.permute.xlu0 %1470
      %1472 = vrot.lane.b32.xlu0 %v1301, 96
      %v1473 = vpop.permute.xlu0 %1472
      %1474 = vrot.lane.b32.xlu0 %v1302, 96
      %v1475 = vpop.permute.xlu0 %1474
      %v1476 = vsel %vm543, %v1465, %v1467
      %v1477 = vsel %vm543, %v1467, %v1469
      %v1478 = vsel %vm543, %v1471, %v1473
      %v1479 = vsel %vm543, %v1473, %v1475
      %1484 = vrot.lane.b32.xlu0 %v1313, 95
      %v1485 = vpop.permute.xlu0 %1484
      %1486 = vrot.lane.b32.xlu0 %v1314, 95
      %v1487 = vpop.permute.xlu0 %1486
      %1488 = vrot.lane.b32.xlu0 %v1315, 95
      %v1489 = vpop.permute.xlu0 %1488
      %1490 = vrot.lane.b32.xlu0 %v1317, 95
      %v1491 = vpop.permute.xlu0 %1490
      %1492 = vrot.lane.b32.xlu0 %v1319, 95
      %v1493 = vpop.permute.xlu0 %1492
      %1494 = vrot.lane.b32.xlu0 %v1321, 95
      %v1495 = vpop.permute.xlu0 %1494
      %v1496 = vsel %vm554, %v1485, %v1487
      %v1497 = vsel %vm554, %v1487, %v1489
      %v1498 = vsel %vm554, %v1491, %v1493
      %v1499 = vsel %vm554, %v1493, %v1495
      %1510 = vrot.lane.b32.xlu0 %v1303, 94
      %v1511 = vpop.permute.xlu0 %1510
      %1512 = vrot.lane.b32.xlu0 %v1304, 94
      %v1513 = vpop.permute.xlu0 %1512
      %1514 = vrot.lane.b32.xlu0 %v1305, 94
      %v1515 = vpop.permute.xlu0 %1514
      %1516 = vrot.lane.b32.xlu0 %v1306, 94
      %v1517 = vpop.permute.xlu0 %1516
      %1518 = vrot.lane.b32.xlu0 %v1307, 94
      %v1519 = vpop.permute.xlu0 %1518
      %1520 = vrot.lane.b32.xlu0 %v1308, 94
      %v1521 = vpop.permute.xlu0 %1520
      %v1522 = vsel %vm581, %v1511, %v1513
      %v1523 = vsel %vm581, %v1513, %v1515
      %v1524 = vsel %vm581, %v1517, %v1519
      %v1525 = vsel %vm581, %v1519, %v1521
      %v1528 = vsel %vm411, %v1277, %v1334
      %v1529 = vsel %vm411, %v1278, %v1335
      %v1530 = vsel %vm411, %v1362, %v1395
      %v1531 = vsel %vm411, %v1363, %v1396
      %v1532 = vsel %vm411, %v1417, %v1450
      %v1533 = vsel %vm411, %v1418, %v1451
      %v1534 = vsel %vm411, %v1478, %v1496
      %v1535 = vsel %vm411, %v1479, %v1497
      %s1536 = scalar_lea.vmem %s5, 16
      %v1537 = vld [vmem:[%s1536] sm:$0xff]
      %v1538 = vld [vmem:[%s1536 + $0x8] sm:$0xf]
      %1540 = vset.pattern.permute.xlu0 0
      %1541 = vperm.xlu0 %1540, %v1537
      %v1542 = vpop.permute.xlu0 %1541
      %1545 = vset.pattern.permute.xlu0 0
      %1546 = vperm.xlu0 %1545, %v1538
      %v1547 = vpop.permute.xlu0 %1546
      %v1550 = vsel %vm1156, %v1249, 0
      %v1553 = vsel %vm1156, %v1250, 0
      %v1555 = vsel %vm411, %v1524, 0
      %v1557 = vsel %vm411, %v1525, 0
      %1559 = vmatprep.subr.mxu0 0.0
      %1560 = vmatpush1.msra.mxu0 0.0
      %1561 = vmatprep.subr.mxu0 0.0
      %1562 = vmatpush1.msra.mxu0 0.0
      %1563 = vmatprep.subr.mxu0 %v1557
      %1564 = vmatpush1.msra.mxu0 %v1555
      %1565 = vmatprep.subr.mxu0 %v1523
      %1566 = vmatpush1.msra.mxu0 %v1522
      %1567 = vmatprep.subr.mxu0 %v1499
      %1568 = vmatpush1.msra.mxu0 %v1498
      %1569 = vmatprep.subr.mxu0 %v1535
      %1570 = vmatpush1.msra.mxu0 %v1534
      %1571 = vmatprep.subr.mxu0 %v1477
      %1572 = vmatpush1.msra.mxu0 %v1476
      %1573 = vmatprep.subr.mxu0 %v1453
      %1574 = vmatpush1.msra.mxu0 %v1452
      %1575 = vmatprep.subr.mxu0 %v1533
      %1576 = vmatpush1.msra.mxu0 %v1532
      %1577 = vmatprep.subr.mxu0 %v1416
      %1578 = vmatpush1.msra.mxu0 %v1415
      %1579 = vmatprep.subr.mxu0 %v1398
      %1580 = vmatpush1.msra.mxu0 %v1397
      %1581 = vmatprep.subr.mxu0 %v1531
      %1582 = vmatpush1.msra.mxu0 %v1530
      %1583 = vmatprep.subr.mxu0 %v1361
      %1584 = vmatpush1.msra.mxu0 %v1360
      %1585 = vmatprep.subr.mxu0 %v1337
      %1586 = vmatpush1.msra.mxu0 %v1336
      %1587 = vmatprep.subr.mxu0 %v1529
      %1588 = vmatpush1.msra.mxu0 %v1528
      %1589 = vmatprep.subr.mxu0 %v1276
      %1590 = vmatpush1.msra.mxu0 %v1275
      %1591 = vmatprep.subr.mxu0 0.0
      %1592 = vmatpush2.msra.mxu0 0.0
      %1593 = vmatprep.subr.mxu0 0.0
      %1594 = vmatpush2.msra.mxu0 0.0
      %1595 = vmatprep.subr.mxu0 0.0
      %1596 = vmatpush2.msra.mxu0 0.0
      %1597 = vmatprep.subr.mxu0 0.0
      %1598 = vmatpush2.msra.mxu0 0.0
      %1599 = vmatprep.subr.mxu0 0.0
      %1600 = vmatpush2.msra.mxu0 0.0
      %1601 = vmatprep.subr.mxu0 0.0
      %1602 = vmatpush2.msra.mxu0 0.0
      %1603 = vmatprep.subr.mxu0 0.0
      %1604 = vmatpush2.msra.mxu0 0.0
      %1605 = vmatprep.subr.mxu0 0.0
      %1606 = vmatpush2.msra.mxu0 0.0
      %1607 = vmatprep.subr.mxu0 0.0
      %1608 = vmatpush2.msra.mxu0 0.0
      %1609 = vmatprep.subr.mxu0 0.0
      %1610 = vmatpush2.msra.mxu0 0.0
      %1611 = vmatprep.subr.mxu0 0.0
      %1612 = vmatpush2.msra.mxu0 0.0
      %1613 = vmatprep.subr.mxu0 0.0
      %1614 = vmatpush2.msra.mxu0 0.0
      %1615 = vmatprep.subr.mxu0 0.0
      %1616 = vmatpush2.msra.mxu0 0.0
      %1617 = vmatprep.subr.mxu0 0.0
      %1618 = vmatpush2.msra.mxu0 0.0
      %1619 = vmatprep.subr.mxu0 0.0
      %1620 = vmatpush2.msra.mxu0 0.0
      %1621 = vmatprep.subr.mxu0 0.0
      %1622 = vmatpush2.msra.mxu0 0.0
      %1623 = vmatprep.mubr.f32.mxu0 0.0
      %1624 = vmatmul.mubr.f32.gmra.mxu0 %v1550
      %v1625 = vpop.f32.mrf.mxu0
      %v1626 = vadd.f32 %v1542, %v1625
      %v1627 = vpop.f32.mrf.mxu0
      %v1628 = vadd.f32 %v1542, %v1627
      %1629 = vmatprep.mubr.f32.mxu0 0.0
      %1630 = vmatmul.mubr.f32.gmra.mxu0 %v1553
      %v1631 = vpop.f32.mrf.mxu0
      %v1632 = vadd.f32 %v1547, %v1631
      %v1633 = vpop.f32.mrf.mxu0
      %v1634 = vadd.f32 %v1547, %v1633
      %1635 = vdwg.mxu0
      %v1636 = vmax.f32 %v1626, 0.0
      %v1637 = vmax.f32 %v1628, 0.0
      %v1638 = vmax.f32 %v1632, 0.0
      %v1639 = vmax.f32 %v1634, 0.0
      %s1640 = scalar_lea.vmem %s4, 32
      %v1641 = vld [vmem:[%s1640] sm:$0xff]
      %v1642 = vld [vmem:[%s1640 + $0x8] sm:$0xf]
      %1647 = vrot.lane.b32.xlu0 %v1636, 17
      %v1648 = vpop.permute.xlu0 %1647
      %1649 = vrot.lane.b32.xlu0 %v1637, 17
      %v1650 = vpop.permute.xlu0 %1649
      %1651 = vrot.lane.b32.xlu0 %v1638, 17
      %v1652 = vpop.permute.xlu0 %1651
      %1653 = vrot.lane.b32.xlu0 %v1639, 17
      %v1654 = vpop.permute.xlu0 %1653
      %v1655 = vsel %vm368, %v1648, %v1650
      %v1656 = vsel %vm368, %v1652, %v1654
      %v1663 = vsel %vm368, 0.0, %v1648
      %v1664 = vsel %vm368, 0.0, %v1652
      %v1665 = vsel %vm368, %v1650, 0.0
      %v1666 = vsel %vm368, %v1654, 0.0
      %v1667 = vmul.f32 %v1663, %v390
      %v1668 = vmul.f32 %v1655, %v394
      %v1669 = vmul.f32 %v1664, %v390
      %v1670 = vmul.f32 %v1656, %v394
      %v1671 = vmul.f32 %v1663, %v438
      %v1672 = vmul.f32 %v1655, %v442
      %v1673 = vmul.f32 %v1665, %v440
      %v1674 = vmul.f32 %v1664, %v438
      %v1675 = vmul.f32 %v1656, %v442
      %v1676 = vmul.f32 %v1666, %v440
      %v1677 = vmul.f32 %v1663, %v467
      %v1678 = vmul.f32 %v1655, %v471
      %v1679 = vmul.f32 %v1665, %v469
      %v1680 = vmul.f32 %v1664, %v467
      %v1681 = vmul.f32 %v1656, %v471
      %v1682 = vmul.f32 %v1666, %v469
      %v1683 = vmul.f32 %v1663, %v494
      %v1684 = vmul.f32 %v1655, %v498
      %v1685 = vmul.f32 %v1665, %v496
      %v1686 = vmul.f32 %v1664, %v494
      %v1687 = vmul.f32 %v1656, %v498
      %v1688 = vmul.f32 %v1666, %v496
      %v1689 = vmul.f32 %v1663, %v521
      %v1690 = vmul.f32 %v1655, %v525
      %v1691 = vmul.f32 %v1665, %v523
      %v1692 = vmul.f32 %v1664, %v521
      %v1693 = vmul.f32 %v1656, %v525
      %v1694 = vmul.f32 %v1666, %v523
      %v1695 = vmul.f32 %v1663, %v559
      %v1696 = vmul.f32 %v1655, %v563
      %v1697 = vmul.f32 %v1665, %v561
      %v1698 = vmul.f32 %v1664, %v559
      %v1699 = vmul.f32 %v1656, %v563
      %v1700 = vmul.f32 %v1666, %v561
      %v1705 = vrot.slane %v1663, 4
      %v1706 = vrot.slane %v1655, 4
      %v1707 = vrot.slane %v1665, 4
      %v1708 = vrot.slane %v1664, 4
      %v1709 = vsel %vm411, %v1705, %v1708
      %v1710 = vrot.slane %v1656, 4
      %v1711 = vsel %vm411, %v1706, %v1710
      %v1712 = vrot.slane %v1666, 4
      %v1713 = vsel %vm411, %v1707, %v1712
      %1714 = vrot.lane.b32.xlu0 %v1705, 127
      %v1715 = vpop.permute.xlu0 %1714
      %1716 = vrot.lane.b32.xlu0 %v1706, 127
      %v1717 = vpop.permute.xlu0 %1716
      %1718 = vrot.lane.b32.xlu0 %v1707, 127
      %v1719 = vpop.permute.xlu0 %1718
      %1720 = vrot.lane.b32.xlu0 %v1709, 127
      %v1721 = vpop.permute.xlu0 %1720
      %1722 = vrot.lane.b32.xlu0 %v1711, 127
      %v1723 = vpop.permute.xlu0 %1722
      %1724 = vrot.lane.b32.xlu0 %v1713, 127
      %v1725 = vpop.permute.xlu0 %1724
      %v1726 = vsel %vm413, %v1715, %v1717
      %v1727 = vsel %vm413, %v1717, %v1719
      %v1728 = vsel %vm413, %v1721, %v1723
      %v1729 = vsel %vm413, %v1723, %v1725
      %1740 = vrot.lane.b32.xlu0 %v1671, 126
      %v1741 = vpop.permute.xlu0 %1740
      %1742 = vrot.lane.b32.xlu0 %v1672, 126
      %v1743 = vpop.permute.xlu0 %1742
      %1744 = vrot.lane.b32.xlu0 %v1673, 126
      %v1745 = vpop.permute.xlu0 %1744
      %1746 = vrot.lane.b32.xlu0 %v1674, 126
      %v1747 = vpop.permute.xlu0 %1746
      %1748 = vrot.lane.b32.xlu0 %v1675, 126
      %v1749 = vpop.permute.xlu0 %1748
      %1750 = vrot.lane.b32.xlu0 %v1676, 126
      %v1751 = vpop.permute.xlu0 %1750
      %v1752 = vsel %vm460, %v1741, %v1743
      %v1753 = vsel %vm460, %v1743, %v1745
      %v1754 = vsel %vm460, %v1747, %v1749
      %v1755 = vsel %vm460, %v1749, %v1751
      %v1766 = vrot.slane %v1677, 4
      %v1767 = vrot.slane %v1678, 4
      %v1768 = vrot.slane %v1679, 4
      %v1769 = vrot.slane %v1680, 4
      %v1770 = vsel %vm411, %v1766, %v1769
      %v1771 = vrot.slane %v1681, 4
      %v1772 = vsel %vm411, %v1767, %v1771
      %v1773 = vrot.slane %v1682, 4
      %v1774 = vsel %vm411, %v1768, %v1773
      %1775 = vrot.lane.b32.xlu0 %v1766, 112
      %v1776 = vpop.permute.xlu0 %1775
      %1777 = vrot.lane.b32.xlu0 %v1767, 112
      %v1778 = vpop.permute.xlu0 %1777
      %1779 = vrot.lane.b32.xlu0 %v1768, 112
      %v1780 = vpop.permute.xlu0 %1779
      %1781 = vrot.lane.b32.xlu0 %v1770, 112
      %v1782 = vpop.permute.xlu0 %1781
      %1783 = vrot.lane.b32.xlu0 %v1772, 112
      %v1784 = vpop.permute.xlu0 %1783
      %1785 = vrot.lane.b32.xlu0 %v1774, 112
      %v1786 = vpop.permute.xlu0 %1785
      %v1787 = vsel %vm489, %v1776, %v1778
      %v1788 = vsel %vm489, %v1778, %v1780
      %v1789 = vsel %vm489, %v1782, %v1784
      %v1790 = vsel %vm489, %v1784, %v1786
      %1795 = vrot.lane.b32.xlu0 %v1663, 111
      %v1796 = vpop.permute.xlu0 %1795
      %1797 = vrot.lane.b32.xlu0 %v1655, 111
      %v1798 = vpop.permute.xlu0 %1797
      %1799 = vrot.lane.b32.xlu0 %v1665, 111
      %v1800 = vpop.permute.xlu0 %1799
      %1801 = vrot.lane.b32.xlu0 %v1664, 111
      %v1802 = vpop.permute.xlu0 %1801
      %1803 = vrot.lane.b32.xlu0 %v1656, 111
      %v1804 = vpop.permute.xlu0 %1803
      %1805 = vrot.lane.b32.xlu0 %v1666, 111
      %v1806 = vpop.permute.xlu0 %1805
      %v1807 = vsel %vm672, %v1796, %v1798
      %v1808 = vsel %vm672, %v1798, %v1800
      %v1809 = vsel %vm672, %v1802, %v1804
      %v1810 = vsel %vm672, %v1804, %v1806
      %v1821 = vrot.slane %v1683, 4
      %v1822 = vrot.slane %v1684, 4
      %v1823 = vrot.slane %v1685, 4
      %v1824 = vrot.slane %v1686, 4
      %v1825 = vsel %vm411, %v1821, %v1824
      %v1826 = vrot.slane %v1687, 4
      %v1827 = vsel %vm411, %v1822, %v1826
      %v1828 = vrot.slane %v1688, 4
      %v1829 = vsel %vm411, %v1823, %v1828
      %1830 = vrot.lane.b32.xlu0 %v1821, 110
      %v1831 = vpop.permute.xlu0 %1830
      %1832 = vrot.lane.b32.xlu0 %v1822, 110
      %v1833 = vpop.permute.xlu0 %1832
      %1834 = vrot.lane.b32.xlu0 %v1823, 110
      %v1835 = vpop.permute.xlu0 %1834
      %1836 = vrot.lane.b32.xlu0 %v1825, 110
      %v1837 = vpop.permute.xlu0 %1836
      %1838 = vrot.lane.b32.xlu0 %v1827, 110
      %v1839 = vpop.permute.xlu0 %1838
      %1840 = vrot.lane.b32.xlu0 %v1829, 110
      %v1841 = vpop.permute.xlu0 %1840
      %v1842 = vsel %vm516, %v1831, %v1833
      %v1843 = vsel %vm516, %v1833, %v1835
      %v1844 = vsel %vm516, %v1837, %v1839
      %v1845 = vsel %vm516, %v1839, %v1841
      %1856 = vrot.lane.b32.xlu0 %v1689, 96
      %v1857 = vpop.permute.xlu0 %1856
      %1858 = vrot.lane.b32.xlu0 %v1690, 96
      %v1859 = vpop.permute.xlu0 %1858
      %1860 = vrot.lane.b32.xlu0 %v1691, 96
      %v1861 = vpop.permute.xlu0 %1860
      %1862 = vrot.lane.b32.xlu0 %v1692, 96
      %v1863 = vpop.permute.xlu0 %1862
      %1864 = vrot.lane.b32.xlu0 %v1693, 96
      %v1865 = vpop.permute.xlu0 %1864
      %1866 = vrot.lane.b32.xlu0 %v1694, 96
      %v1867 = vpop.permute.xlu0 %1866
      %v1868 = vsel %vm543, %v1857, %v1859
      %v1869 = vsel %vm543, %v1859, %v1861
      %v1870 = vsel %vm543, %v1863, %v1865
      %v1871 = vsel %vm543, %v1865, %v1867
      %1876 = vrot.lane.b32.xlu0 %v1705, 95
      %v1877 = vpop.permute.xlu0 %1876
      %1878 = vrot.lane.b32.xlu0 %v1706, 95
      %v1879 = vpop.permute.xlu0 %1878
      %1880 = vrot.lane.b32.xlu0 %v1707, 95
      %v1881 = vpop.permute.xlu0 %1880
      %1882 = vrot.lane.b32.xlu0 %v1709, 95
      %v1883 = vpop.permute.xlu0 %1882
      %1884 = vrot.lane.b32.xlu0 %v1711, 95
      %v1885 = vpop.permute.xlu0 %1884
      %1886 = vrot.lane.b32.xlu0 %v1713, 95
      %v1887 = vpop.permute.xlu0 %1886
      %v1888 = vsel %vm554, %v1877, %v1879
      %v1889 = vsel %vm554, %v1879, %v1881
      %v1890 = vsel %vm554, %v1883, %v1885
      %v1891 = vsel %vm554, %v1885, %v1887
      %1902 = vrot.lane.b32.xlu0 %v1695, 94
      %v1903 = vpop.permute.xlu0 %1902
      %1904 = vrot.lane.b32.xlu0 %v1696, 94
      %v1905 = vpop.permute.xlu0 %1904
      %1906 = vrot.lane.b32.xlu0 %v1697, 94
      %v1907 = vpop.permute.xlu0 %1906
      %1908 = vrot.lane.b32.xlu0 %v1698, 94
      %v1909 = vpop.permute.xlu0 %1908
      %1910 = vrot.lane.b32.xlu0 %v1699, 94
      %v1911 = vpop.permute.xlu0 %1910
      %1912 = vrot.lane.b32.xlu0 %v1700, 94
      %v1913 = vpop.permute.xlu0 %1912
      %v1914 = vsel %vm581, %v1903, %v1905
      %v1915 = vsel %vm581, %v1905, %v1907
      %v1916 = vsel %vm581, %v1909, %v1911
      %v1917 = vsel %vm581, %v1911, %v1913
      %v1920 = vsel %vm411, %v1669, %v1726
      %v1921 = vsel %vm411, %v1670, %v1727
      %v1922 = vsel %vm411, %v1754, %v1787
      %v1923 = vsel %vm411, %v1755, %v1788
      %v1924 = vsel %vm411, %v1809, %v1842
      %v1925 = vsel %vm411, %v1810, %v1843
      %v1926 = vsel %vm411, %v1870, %v1888
      %v1927 = vsel %vm411, %v1871, %v1889
      %s1928 = scalar_lea.vmem %s5, 32
      %v1929 = vld [vmem:[%s1928] sm:$0xff]
      %v1930 = vld [vmem:[%s1928 + $0x8] sm:$0xf]
      %1932 = vset.pattern.permute.xlu0 0
      %1933 = vperm.xlu0 %1932, %v1929
      %v1934 = vpop.permute.xlu0 %1933
      %1937 = vset.pattern.permute.xlu0 0
      %1938 = vperm.xlu0 %1937, %v1930
      %v1939 = vpop.permute.xlu0 %1938
      %v1942 = vsel %vm1156, %v1641, 0
      %v1945 = vsel %vm1156, %v1642, 0
      %v1947 = vsel %vm411, %v1916, 0
      %v1949 = vsel %vm411, %v1917, 0
      %1951 = vmatprep.subr.mxu0 0.0
      %1952 = vmatpush1.msra.mxu0 0.0
      %1953 = vmatprep.subr.mxu0 0.0
      %1954 = vmatpush1.msra.mxu0 0.0
      %1955 = vmatprep.subr.mxu0 %v1949
      %1956 = vmatpush1.msra.mxu0 %v1947
      %1957 = vmatprep.subr.mxu0 %v1915
      %1958 = vmatpush1.msra.mxu0 %v1914
      %1959 = vmatprep.subr.mxu0 %v1891
      %1960 = vmatpush1.msra.mxu0 %v1890
      %1961 = vmatprep.subr.mxu0 %v1927
      %1962 = vmatpush1.msra.mxu0 %v1926
      %1963 = vmatprep.subr.mxu0 %v1869
      %1964 = vmatpush1.msra.mxu0 %v1868
      %1965 = vmatprep.subr.mxu0 %v1845
      %1966 = vmatpush1.msra.mxu0 %v1844
      %1967 = vmatprep.subr.mxu0 %v1925
      %1968 = vmatpush1.msra.mxu0 %v1924
      %1969 = vmatprep.subr.mxu0 %v1808
      %1970 = vmatpush1.msra.mxu0 %v1807
      %1971 = vmatprep.subr.mxu0 %v1790
      %1972 = vmatpush1.msra.mxu0 %v1789
      %1973 = vmatprep.subr.mxu0 %v1923
      %1974 = vmatpush1.msra.mxu0 %v1922
      %1975 = vmatprep.subr.mxu0 %v1753
      %1976 = vmatpush1.msra.mxu0 %v1752
      %1977 = vmatprep.subr.mxu0 %v1729
      %1978 = vmatpush1.msra.mxu0 %v1728
      %1979 = vmatprep.subr.mxu0 %v1921
      %1980 = vmatpush1.msra.mxu0 %v1920
      %1981 = vmatprep.subr.mxu0 %v1668
      %1982 = vmatpush1.msra.mxu0 %v1667
      %1983 = vmatprep.subr.mxu0 0.0
      %1984 = vmatpush2.msra.mxu0 0.0
      %1985 = vmatprep.subr.mxu0 0.0
      %1986 = vmatpush2.msra.mxu0 0.0
      %1987 = vmatprep.subr.mxu0 0.0
      %1988 = vmatpush2.msra.mxu0 0.0
      %1989 = vmatprep.subr.mxu0 0.0
      %1990 = vmatpush2.msra.mxu0 0.0
      %1991 = vmatprep.subr.mxu0 0.0
      %1992 = vmatpush2.msra.mxu0 0.0
      %1993 = vmatprep.subr.mxu0 0.0
      %1994 = vmatpush2.msra.mxu0 0.0
      %1995 = vmatprep.subr.mxu0 0.0
      %1996 = vmatpush2.msra.mxu0 0.0
      %1997 = vmatprep.subr.mxu0 0.0
      %1998 = vmatpush2.msra.mxu0 0.0
      %1999 = vmatprep.subr.mxu0 0.0
      %2000 = vmatpush2.msra.mxu0 0.0
      %2001 = vmatprep.subr.mxu0 0.0
      %2002 = vmatpush2.msra.mxu0 0.0
      %2003 = vmatprep.subr.mxu0 0.0
      %2004 = vmatpush2.msra.mxu0 0.0
      %2005 = vmatprep.subr.mxu0 0.0
      %2006 = vmatpush2.msra.mxu0 0.0
      %2007 = vmatprep.subr.mxu0 0.0
      %2008 = vmatpush2.msra.mxu0 0.0
      %2009 = vmatprep.subr.mxu0 0.0
      %2010 = vmatpush2.msra.mxu0 0.0
      %2011 = vmatprep.subr.mxu0 0.0
      %2012 = vmatpush2.msra.mxu0 0.0
      %2013 = vmatprep.subr.mxu0 0.0
      %2014 = vmatpush2.msra.mxu0 0.0
      %2015 = vmatprep.mubr.f32.mxu0 0.0
      %2016 = vmatmul.mubr.f32.gmra.mxu0 %v1942
      %v2017 = vpop.f32.mrf.mxu0
      %v2018 = vadd.f32 %v1934, %v2017
      %v2019 = vpop.f32.mrf.mxu0
      %v2020 = vadd.f32 %v1934, %v2019
      %2021 = vmatprep.mubr.f32.mxu0 0.0
      %2022 = vmatmul.mubr.f32.gmra.mxu0 %v1945
      %v2023 = vpop.f32.mrf.mxu0
      %v2024 = vadd.f32 %v1939, %v2023
      %v2025 = vpop.f32.mrf.mxu0
      %v2026 = vadd.f32 %v1939, %v2025
      %2027 = vdwg.mxu0
      %v2028 = vmax.f32 %v2018, 0.0
      %v2029 = vmax.f32 %v2020, 0.0
      %v2030 = vmax.f32 %v2024, 0.0
      %v2031 = vmax.f32 %v2026, 0.0
      %v2032 = vld [vmem:[%s6] sm:$0xff]
      %v2033 = vld [vmem:[%s6 + $0x8] sm:$0xff]
      %v2034 = vld [vmem:[%s6 + $0x10] sm:$0xff]
      %2039 = vrot.lane.b32.xlu0 %v2028, 17
      %v2040 = vpop.permute.xlu0 %2039
      %2041 = vrot.lane.b32.xlu0 %v2029, 17
      %v2042 = vpop.permute.xlu0 %2041
      %2043 = vrot.lane.b32.xlu0 %v2030, 17
      %v2044 = vpop.permute.xlu0 %2043
      %2045 = vrot.lane.b32.xlu0 %v2031, 17
      %v2046 = vpop.permute.xlu0 %2045
      %v2047 = vsel %vm368, %v2040, %v2042
      %v2048 = vsel %vm368, %v2044, %v2046
      %v2055 = vsel %vm368, 0.0, %v2040
      %v2056 = vsel %vm368, 0.0, %v2044
      %v2057 = vsel %vm368, %v2042, 0.0
      %v2058 = vsel %vm368, %v2046, 0.0
      %v2059 = vmul.f32 %v2055, %v390
      %v2060 = vmul.f32 %v2047, %v394
      %v2061 = vmul.f32 %v2056, %v390
      %v2062 = vmul.f32 %v2048, %v394
      %v2063 = vmul.f32 %v2055, %v438
      %v2064 = vmul.f32 %v2047, %v442
      %v2065 = vmul.f32 %v2057, %v440
      %v2066 = vmul.f32 %v2056, %v438
      %v2067 = vmul.f32 %v2048, %v442
      %v2068 = vmul.f32 %v2058, %v440
      %v2069 = vmul.f32 %v2055, %v467
      %v2070 = vmul.f32 %v2047, %v471
      %v2071 = vmul.f32 %v2057, %v469
      %v2072 = vmul.f32 %v2056, %v467
      %v2073 = vmul.f32 %v2048, %v471
      %v2074 = vmul.f32 %v2058, %v469
      %v2075 = vmul.f32 %v2055, %v494
      %v2076 = vmul.f32 %v2047, %v498
      %v2077 = vmul.f32 %v2057, %v496
      %v2078 = vmul.f32 %v2056, %v494
      %v2079 = vmul.f32 %v2048, %v498
      %v2080 = vmul.f32 %v2058, %v496
      %v2081 = vmul.f32 %v2055, %v521
      %v2082 = vmul.f32 %v2047, %v525
      %v2083 = vmul.f32 %v2057, %v523
      %v2084 = vmul.f32 %v2056, %v521
      %v2085 = vmul.f32 %v2048, %v525
      %v2086 = vmul.f32 %v2058, %v523
      %v2087 = vmul.f32 %v2055, %v559
      %v2088 = vmul.f32 %v2047, %v563
      %v2089 = vmul.f32 %v2057, %v561
      %v2090 = vmul.f32 %v2056, %v559
      %v2091 = vmul.f32 %v2048, %v563
      %v2092 = vmul.f32 %v2058, %v561
      %v2097 = vrot.slane %v2055, 4
      %v2098 = vrot.slane %v2047, 4
      %v2099 = vrot.slane %v2057, 4
      %v2100 = vrot.slane %v2056, 4
      %v2101 = vsel %vm411, %v2097, %v2100
      %v2102 = vrot.slane %v2048, 4
      %v2103 = vsel %vm411, %v2098, %v2102
      %v2104 = vrot.slane %v2058, 4
      %v2105 = vsel %vm411, %v2099, %v2104
      %2106 = vrot.lane.b32.xlu0 %v2097, 127
      %v2107 = vpop.permute.xlu0 %2106
      %2108 = vrot.lane.b32.xlu0 %v2098, 127
      %v2109 = vpop.permute.xlu0 %2108
      %2110 = vrot.lane.b32.xlu0 %v2099, 127
      %v2111 = vpop.permute.xlu0 %2110
      %2112 = vrot.lane.b32.xlu0 %v2101, 127
      %v2113 = vpop.permute.xlu0 %2112
      %2114 = vrot.lane.b32.xlu0 %v2103, 127
      %v2115 = vpop.permute.xlu0 %2114
      %2116 = vrot.lane.b32.xlu0 %v2105, 127
      %v2117 = vpop.permute.xlu0 %2116
      %v2118 = vsel %vm413, %v2107, %v2109
      %v2119 = vsel %vm413, %v2109, %v2111
      %v2120 = vsel %vm413, %v2113, %v2115
      %v2121 = vsel %vm413, %v2115, %v2117
      %2132 = vrot.lane.b32.xlu0 %v2063, 126
      %v2133 = vpop.permute.xlu0 %2132
      %2134 = vrot.lane.b32.xlu0 %v2064, 126
      %v2135 = vpop.permute.xlu0 %2134
      %2136 = vrot.lane.b32.xlu0 %v2065, 126
      %v2137 = vpop.permute.xlu0 %2136
      %2138 = vrot.lane.b32.xlu0 %v2066, 126
      %v2139 = vpop.permute.xlu0 %2138
      %2140 = vrot.lane.b32.xlu0 %v2067, 126
      %v2141 = vpop.permute.xlu0 %2140
      %2142 = vrot.lane.b32.xlu0 %v2068, 126
      %v2143 = vpop.permute.xlu0 %2142
      %v2144 = vsel %vm460, %v2133, %v2135
      %v2145 = vsel %vm460, %v2135, %v2137
      %v2146 = vsel %vm460, %v2139, %v2141
      %v2147 = vsel %vm460, %v2141, %v2143
      %v2158 = vrot.slane %v2069, 4
      %v2159 = vrot.slane %v2070, 4
      %v2160 = vrot.slane %v2071, 4
      %v2161 = vrot.slane %v2072, 4
      %v2162 = vsel %vm411, %v2158, %v2161
      %v2163 = vrot.slane %v2073, 4
      %v2164 = vsel %vm411, %v2159, %v2163
      %v2165 = vrot.slane %v2074, 4
      %v2166 = vsel %vm411, %v2160, %v2165
      %2167 = vrot.lane.b32.xlu0 %v2158, 112
      %v2168 = vpop.permute.xlu0 %2167
      %2169 = vrot.lane.b32.xlu0 %v2159, 112
      %v2170 = vpop.permute.xlu0 %2169
      %2171 = vrot.lane.b32.xlu0 %v2160, 112
      %v2172 = vpop.permute.xlu0 %2171
      %2173 = vrot.lane.b32.xlu0 %v2162, 112
      %v2174 = vpop.permute.xlu0 %2173
      %2175 = vrot.lane.b32.xlu0 %v2164, 112
      %v2176 = vpop.permute.xlu0 %2175
      %2177 = vrot.lane.b32.xlu0 %v2166, 112
      %v2178 = vpop.permute.xlu0 %2177
      %v2179 = vsel %vm489, %v2168, %v2170
      %v2180 = vsel %vm489, %v2170, %v2172
      %v2181 = vsel %vm489, %v2174, %v2176
      %v2182 = vsel %vm489, %v2176, %v2178
      %2187 = vrot.lane.b32.xlu0 %v2055, 111
      %v2188 = vpop.permute.xlu0 %2187
      %2189 = vrot.lane.b32.xlu0 %v2047, 111
      %v2190 = vpop.permute.xlu0 %2189
      %2191 = vrot.lane.b32.xlu0 %v2057, 111
      %v2192 = vpop.permute.xlu0 %2191
      %2193 = vrot.lane.b32.xlu0 %v2056, 111
      %v2194 = vpop.permute.xlu0 %2193
      %2195 = vrot.lane.b32.xlu0 %v2048, 111
      %v2196 = vpop.permute.xlu0 %2195
      %2197 = vrot.lane.b32.xlu0 %v2058, 111
      %v2198 = vpop.permute.xlu0 %2197
      %v2199 = vsel %vm672, %v2188, %v2190
      %v2200 = vsel %vm672, %v2190, %v2192
      %v2201 = vsel %vm672, %v2194, %v2196
      %v2202 = vsel %vm672, %v2196, %v2198
      %v2213 = vrot.slane %v2075, 4
      %v2214 = vrot.slane %v2076, 4
      %v2215 = vrot.slane %v2077, 4
      %v2216 = vrot.slane %v2078, 4
      %v2217 = vsel %vm411, %v2213, %v2216
      %v2218 = vrot.slane %v2079, 4
      %v2219 = vsel %vm411, %v2214, %v2218
      %v2220 = vrot.slane %v2080, 4
      %v2221 = vsel %vm411, %v2215, %v2220
      %2222 = vrot.lane.b32.xlu0 %v2213, 110
      %v2223 = vpop.permute.xlu0 %2222
      %2224 = vrot.lane.b32.xlu0 %v2214, 110
      %v2225 = vpop.permute.xlu0 %2224
      %2226 = vrot.lane.b32.xlu0 %v2215, 110
      %v2227 = vpop.permute.xlu0 %2226
      %2228 = vrot.lane.b32.xlu0 %v2217, 110
      %v2229 = vpop.permute.xlu0 %2228
      %2230 = vrot.lane.b32.xlu0 %v2219, 110
      %v2231 = vpop.permute.xlu0 %2230
      %2232 = vrot.lane.b32.xlu0 %v2221, 110
      %v2233 = vpop.permute.xlu0 %2232
      %v2234 = vsel %vm516, %v2223, %v2225
      %v2235 = vsel %vm516, %v2225, %v2227
      %v2236 = vsel %vm516, %v2229, %v2231
      %v2237 = vsel %vm516, %v2231, %v2233
      %2248 = vrot.lane.b32.xlu0 %v2081, 96
      %v2249 = vpop.permute.xlu0 %2248
      %2250 = vrot.lane.b32.xlu0 %v2082, 96
      %v2251 = vpop.permute.xlu0 %2250
      %2252 = vrot.lane.b32.xlu0 %v2083, 96
      %v2253 = vpop.permute.xlu0 %2252
      %2254 = vrot.lane.b32.xlu0 %v2084, 96
      %v2255 = vpop.permute.xlu0 %2254
      %2256 = vrot.lane.b32.xlu0 %v2085, 96
      %v2257 = vpop.permute.xlu0 %2256
      %2258 = vrot.lane.b32.xlu0 %v2086, 96
      %v2259 = vpop.permute.xlu0 %2258
      %v2260 = vsel %vm543, %v2249, %v2251
      %v2261 = vsel %vm543, %v2251, %v2253
      %v2262 = vsel %vm543, %v2255, %v2257
      %v2263 = vsel %vm543, %v2257, %v2259
      %2268 = vrot.lane.b32.xlu0 %v2097, 95
      %v2269 = vpop.permute.xlu0 %2268
      %2270 = vrot.lane.b32.xlu0 %v2098, 95
      %v2271 = vpop.permute.xlu0 %2270
      %2272 = vrot.lane.b32.xlu0 %v2099, 95
      %v2273 = vpop.permute.xlu0 %2272
      %2274 = vrot.lane.b32.xlu0 %v2101, 95
      %v2275 = vpop.permute.xlu0 %2274
      %2276 = vrot.lane.b32.xlu0 %v2103, 95
      %v2277 = vpop.permute.xlu0 %2276
      %2278 = vrot.lane.b32.xlu0 %v2105, 95
      %v2279 = vpop.permute.xlu0 %2278
      %v2280 = vsel %vm554, %v2269, %v2271
      %v2281 = vsel %vm554, %v2271, %v2273
      %v2282 = vsel %vm554, %v2275, %v2277
      %v2283 = vsel %vm554, %v2277, %v2279
      %2294 = vrot.lane.b32.xlu0 %v2087, 94
      %v2295 = vpop.permute.xlu0 %2294
      %2296 = vrot.lane.b32.xlu0 %v2088, 94
      %v2297 = vpop.permute.xlu0 %2296
      %2298 = vrot.lane.b32.xlu0 %v2089, 94
      %v2299 = vpop.permute.xlu0 %2298
      %2300 = vrot.lane.b32.xlu0 %v2090, 94
      %v2301 = vpop.permute.xlu0 %2300
      %2302 = vrot.lane.b32.xlu0 %v2091, 94
      %v2303 = vpop.permute.xlu0 %2302
      %2304 = vrot.lane.b32.xlu0 %v2092, 94
      %v2305 = vpop.permute.xlu0 %2304
      %v2306 = vsel %vm581, %v2295, %v2297
      %v2307 = vsel %vm581, %v2297, %v2299
      %v2308 = vsel %vm581, %v2301, %v2303
      %v2309 = vsel %vm581, %v2303, %v2305
      %v2312 = vsel %vm411, %v2061, %v2118
      %v2313 = vsel %vm411, %v2062, %v2119
      %v2314 = vsel %vm411, %v2146, %v2179
      %v2315 = vsel %vm411, %v2147, %v2180
      %v2316 = vsel %vm411, %v2201, %v2234
      %v2317 = vsel %vm411, %v2202, %v2235
      %v2318 = vsel %vm411, %v2262, %v2280
      %v2319 = vsel %vm411, %v2263, %v2281
      %v2320 = vld [vmem:[%s7] sm:$0xff]
      %v2321 = vld [vmem:[%s7 + $0x8] sm:$0xff]
      %v2322 = vld [vmem:[%s7 + $0x10] sm:$0xff]
      %2324 = vset.pattern.permute.xlu0 0
      %2325 = vperm.xlu0 %2324, %v2320
      %v2326 = vpop.permute.xlu0 %2325
      %2329 = vset.pattern.permute.xlu0 0
      %2330 = vperm.xlu0 %2329, %v2321
      %v2331 = vpop.permute.xlu0 %2330
      %2334 = vset.pattern.permute.xlu0 0
      %2335 = vperm.xlu0 %2334, %v2322
      %v2336 = vpop.permute.xlu0 %2335
      %v2339 = vsel %vm1156, %v2032, 0
      %v2342 = vsel %vm1156, %v2033, 0
      %v2345 = vsel %vm1156, %v2034, 0
      %v2347 = vsel %vm411, %v2308, 0
      %v2349 = vsel %vm411, %v2309, 0
      %2351 = vmatprep.subr.mxu0 0.0
      %2352 = vmatpush1.msra.mxu0 0.0
      %2353 = vmatprep.subr.mxu0 0.0
      %2354 = vmatpush1.msra.mxu0 0.0
      %2355 = vmatprep.subr.mxu0 %v2349
      %2356 = vmatpush1.msra.mxu0 %v2347
      %2357 = vmatprep.subr.mxu0 %v2307
      %2358 = vmatpush1.msra.mxu0 %v2306
      %2359 = vmatprep.subr.mxu0 %v2283
      %2360 = vmatpush1.msra.mxu0 %v2282
      %2361 = vmatprep.subr.mxu0 %v2319
      %2362 = vmatpush1.msra.mxu0 %v2318
      %2363 = vmatprep.subr.mxu0 %v2261
      %2364 = vmatpush1.msra.mxu0 %v2260
      %2365 = vmatprep.subr.mxu0 %v2237
      %2366 = vmatpush1.msra.mxu0 %v2236
      %2367 = vmatprep.subr.mxu0 %v2317
      %2368 = vmatpush1.msra.mxu0 %v2316
      %2369 = vmatprep.subr.mxu0 %v2200
      %2370 = vmatpush1.msra.mxu0 %v2199
      %2371 = vmatprep.subr.mxu0 %v2182
      %2372 = vmatpush1.msra.mxu0 %v2181
      %2373 = vmatprep.subr.mxu0 %v2315
      %2374 = vmatpush1.msra.mxu0 %v2314
      %2375 = vmatprep.subr.mxu0 %v2145
      %2376 = vmatpush1.msra.mxu0 %v2144
      %2377 = vmatprep.subr.mxu0 %v2121
      %2378 = vmatpush1.msra.mxu0 %v2120
      %2379 = vmatprep.subr.mxu0 %v2313
      %2380 = vmatpush1.msra.mxu0 %v2312
      %2381 = vmatprep.subr.mxu0 %v2060
      %2382 = vmatpush1.msra.mxu0 %v2059
      %2383 = vmatprep.subr.mxu0 0.0
      %2384 = vmatpush2.msra.mxu0 0.0
      %2385 = vmatprep.subr.mxu0 0.0
      %2386 = vmatpush2.msra.mxu0 0.0
      %2387 = vmatprep.subr.mxu0 0.0
      %2388 = vmatpush2.msra.mxu0 0.0
      %2389 = vmatprep.subr.mxu0 0.0
      %2390 = vmatpush2.msra.mxu0 0.0
      %2391 = vmatprep.subr.mxu0 0.0
      %2392 = vmatpush2.msra.mxu0 0.0
      %2393 = vmatprep.subr.mxu0 0.0
      %2394 = vmatpush2.msra.mxu0 0.0
      %2395 = vmatprep.subr.mxu0 0.0
      %2396 = vmatpush2.msra.mxu0 0.0
      %2397 = vmatprep.subr.mxu0 0.0
      %2398 = vmatpush2.msra.mxu0 0.0
      %2399 = vmatprep.subr.mxu0 0.0
      %2400 = vmatpush2.msra.mxu0 0.0
      %2401 = vmatprep.subr.mxu0 0.0
      %2402 = vmatpush2.msra.mxu0 0.0
      %2403 = vmatprep.subr.mxu0 0.0
      %2404 = vmatpush2.msra.mxu0 0.0
      %2405 = vmatprep.subr.mxu0 0.0
      %2406 = vmatpush2.msra.mxu0 0.0
      %2407 = vmatprep.subr.mxu0 0.0
      %2408 = vmatpush2.msra.mxu0 0.0
      %2409 = vmatprep.subr.mxu0 0.0
      %2410 = vmatpush2.msra.mxu0 0.0
      %2411 = vmatprep.subr.mxu0 0.0
      %2412 = vmatpush2.msra.mxu0 0.0
      %2413 = vmatprep.subr.mxu0 0.0
      %2414 = vmatpush2.msra.mxu0 0.0
      %2415 = vmatprep.mubr.f32.mxu0 0.0
      %2416 = vmatmul.mubr.f32.gmra.mxu0 %v2339
      %v2417 = vpop.f32.mrf.mxu0
      %v2418 = vadd.f32 %v2326, %v2417
      %v2419 = vpop.f32.mrf.mxu0
      %v2420 = vadd.f32 %v2326, %v2419
      %2421 = vmatprep.mubr.f32.mxu0 0.0
      %2422 = vmatmul.mubr.f32.gmra.mxu0 %v2342
      %v2423 = vpop.f32.mrf.mxu0
      %v2424 = vadd.f32 %v2331, %v2423
      %v2425 = vpop.f32.mrf.mxu0
      %v2426 = vadd.f32 %v2331, %v2425
      %2427 = vmatprep.mubr.f32.mxu0 0.0
      %2428 = vmatmul.mubr.f32.gmra.mxu0 %v2345
      %v2429 = vpop.f32.mrf.mxu0
      %v2430 = vadd.f32 %v2336, %v2429
      %v2431 = vpop.f32.mrf.mxu0
      %v2432 = vadd.f32 %v2336, %v2431
      %2433 = vdwg.mxu0
      %v2434 = vxor.u32 %v2418, 2147483648
      %v2435 = vxor.u32 %v2420, 2147483648
      %v2436 = vxor.u32 %v2424, 2147483648
      %v2437 = vxor.u32 %v2426, 2147483648
      %v2438 = vmul.f32 %v2434, 1.442695
      %v2439 = vpow.pop %v2438
      %v2440 = vmul.f32 %v2435, 1.442695
      %v2441 = vpow.pop %v2440
      %v2442 = vmul.f32 %v2436, 1.442695
      %v2443 = vpow.pop %v2442
      %v2444 = vmul.f32 %v2437, 1.442695
      %v2445 = vpow.pop %v2444
      %v2446 = vadd.f32 %v2439, 1.0
      %v2447 = vadd.f32 %v2441, 1.0
      %v2448 = vadd.f32 %v2443, 1.0
      %v2449 = vadd.f32 %v2445, 1.0
      %v2450 = vrcp.pop %v2446
      %v2451 = vmul.f32 1.0, %v2450
      %v2452 = vrcp.pop %v2447
      %v2453 = vmul.f32 1.0, %v2452
      %v2454 = vrcp.pop %v2448
      %v2455 = vmul.f32 1.0, %v2454
      %v2456 = vrcp.pop %v2449
      %v2457 = vmul.f32 1.0, %v2456
      %s2458 = scalar_lea.vmem %s4, 48
      %v2459 = vld [vmem:[%s2458] sm:$0xff]
      %v2460 = vld [vmem:[%s2458 + $0x8] sm:$0xf]
      %v2465 = vrot.slane %v2451, 4
      %v2466 = vrot.slane %v2453, 4
      %v2467 = vrot.slane %v2455, 4
      %v2468 = vsel %vm411, %v2465, %v2467
      %v2469 = vrot.slane %v2457, 4
      %v2470 = vsel %vm411, %v2466, %v2469
      %v2475 = vmul.f32 %v2424, %v2465
      %v2476 = vmul.f32 %v2426, %v2466
      %v2477 = vmul.f32 %v2430, %v2468
      %v2478 = vmul.f32 %v2432, %v2470
      %v2483 = vrot.slane %v2475, 4
      %v2484 = vrot.slane %v2477, 4
      %v2485 = vsel %vm411, %v2483, %v2484
      %v2486 = vrot.slane %v2476, 4
      %v2487 = vrot.slane %v2478, 4
      %v2488 = vsel %vm411, %v2486, %v2487
      %2489 = vrot.lane.b32.xlu0 %v2485, 17
      %v2490 = vpop.permute.xlu0 %2489
      %2491 = vrot.lane.b32.xlu0 %v2488, 17
      %v2492 = vpop.permute.xlu0 %2491
      %2493 = vrot.lane.b32.xlu0 %v2484, 17
      %v2494 = vpop.permute.xlu0 %2493
      %2495 = vrot.lane.b32.xlu0 %v2487, 17
      %v2496 = vpop.permute.xlu0 %2495
      %v2497 = vsel %vm368, %v2490, %v2492
      %v2498 = vsel %vm368, %v2494, %v2496
      %v2505 = vsel %vm368, 0.0, %v2490
      %v2506 = vsel %vm368, 0.0, %v2494
      %v2507 = vsel %vm368, %v2492, 0.0
      %v2508 = vsel %vm368, %v2496, 0.0
      %v2509 = vmul.f32 %v2505, %v390
      %v2510 = vmul.f32 %v2497, %v394
      %v2511 = vmul.f32 %v2506, %v390
      %v2512 = vmul.f32 %v2498, %v394
      %v2513 = vmul.f32 %v2505, %v438
      %v2514 = vmul.f32 %v2497, %v442
      %v2515 = vmul.f32 %v2507, %v440
      %v2516 = vmul.f32 %v2506, %v438
      %v2517 = vmul.f32 %v2498, %v442
      %v2518 = vmul.f32 %v2508, %v440
      %v2519 = vmul.f32 %v2505, %v467
      %v2520 = vmul.f32 %v2497, %v471
      %v2521 = vmul.f32 %v2507, %v469
      %v2522 = vmul.f32 %v2506, %v467
      %v2523 = vmul.f32 %v2498, %v471
      %v2524 = vmul.f32 %v2508, %v469
      %v2525 = vmul.f32 %v2505, %v494
      %v2526 = vmul.f32 %v2497, %v498
      %v2527 = vmul.f32 %v2507, %v496
      %v2528 = vmul.f32 %v2506, %v494
      %v2529 = vmul.f32 %v2498, %v498
      %v2530 = vmul.f32 %v2508, %v496
      %v2531 = vmul.f32 %v2505, %v521
      %v2532 = vmul.f32 %v2497, %v525
      %v2533 = vmul.f32 %v2507, %v523
      %v2534 = vmul.f32 %v2506, %v521
      %v2535 = vmul.f32 %v2498, %v525
      %v2536 = vmul.f32 %v2508, %v523
      %v2537 = vmul.f32 %v2505, %v559
      %v2538 = vmul.f32 %v2497, %v563
      %v2539 = vmul.f32 %v2507, %v561
      %v2540 = vmul.f32 %v2506, %v559
      %v2541 = vmul.f32 %v2498, %v563
      %v2542 = vmul.f32 %v2508, %v561
      %v2547 = vrot.slane %v2505, 4
      %v2548 = vrot.slane %v2497, 4
      %v2549 = vrot.slane %v2507, 4
      %v2550 = vrot.slane %v2506, 4
      %v2551 = vsel %vm411, %v2547, %v2550
      %v2552 = vrot.slane %v2498, 4
      %v2553 = vsel %vm411, %v2548, %v2552
      %v2554 = vrot.slane %v2508, 4
      %v2555 = vsel %vm411, %v2549, %v2554
      %2556 = vrot.lane.b32.xlu0 %v2547, 127
      %v2557 = vpop.permute.xlu0 %2556
      %2558 = vrot.lane.b32.xlu0 %v2548, 127
      %v2559 = vpop.permute.xlu0 %2558
      %2560 = vrot.lane.b32.xlu0 %v2549, 127
      %v2561 = vpop.permute.xlu0 %2560
      %2562 = vrot.lane.b32.xlu0 %v2551, 127
      %v2563 = vpop.permute.xlu0 %2562
      %2564 = vrot.lane.b32.xlu0 %v2553, 127
      %v2565 = vpop.permute.xlu0 %2564
      %2566 = vrot.lane.b32.xlu0 %v2555, 127
      %v2567 = vpop.permute.xlu0 %2566
      %v2568 = vsel %vm413, %v2557, %v2559
      %v2569 = vsel %vm413, %v2559, %v2561
      %v2570 = vsel %vm413, %v2563, %v2565
      %v2571 = vsel %vm413, %v2565, %v2567
      %2582 = vrot.lane.b32.xlu0 %v2513, 126
      %v2583 = vpop.permute.xlu0 %2582
      %2584 = vrot.lane.b32.xlu0 %v2514, 126
      %v2585 = vpop.permute.xlu0 %2584
      %2586 = vrot.lane.b32.xlu0 %v2515, 126
      %v2587 = vpop.permute.xlu0 %2586
      %2588 = vrot.lane.b32.xlu0 %v2516, 126
      %v2589 = vpop.permute.xlu0 %2588
      %2590 = vrot.lane.b32.xlu0 %v2517, 126
      %v2591 = vpop.permute.xlu0 %2590
      %2592 = vrot.lane.b32.xlu0 %v2518, 126
      %v2593 = vpop.permute.xlu0 %2592
      %v2594 = vsel %vm460, %v2583, %v2585
      %v2595 = vsel %vm460, %v2585, %v2587
      %v2596 = vsel %vm460, %v2589, %v2591
      %v2597 = vsel %vm460, %v2591, %v2593
      %v2608 = vrot.slane %v2519, 4
      %v2609 = vrot.slane %v2520, 4
      %v2610 = vrot.slane %v2521, 4
      %v2611 = vrot.slane %v2522, 4
      %v2612 = vsel %vm411, %v2608, %v2611
      %v2613 = vrot.slane %v2523, 4
      %v2614 = vsel %vm411, %v2609, %v2613
      %v2615 = vrot.slane %v2524, 4
      %v2616 = vsel %vm411, %v2610, %v2615
      %2617 = vrot.lane.b32.xlu0 %v2608, 112
      %v2618 = vpop.permute.xlu0 %2617
      %2619 = vrot.lane.b32.xlu0 %v2609, 112
      %v2620 = vpop.permute.xlu0 %2619
      %2621 = vrot.lane.b32.xlu0 %v2610, 112
      %v2622 = vpop.permute.xlu0 %2621
      %2623 = vrot.lane.b32.xlu0 %v2612, 112
      %v2624 = vpop.permute.xlu0 %2623
      %2625 = vrot.lane.b32.xlu0 %v2614, 112
      %v2626 = vpop.permute.xlu0 %2625
      %2627 = vrot.lane.b32.xlu0 %v2616, 112
      %v2628 = vpop.permute.xlu0 %2627
      %v2629 = vsel %vm489, %v2618, %v2620
      %v2630 = vsel %vm489, %v2620, %v2622
      %v2631 = vsel %vm489, %v2624, %v2626
      %v2632 = vsel %vm489, %v2626, %v2628
      %2637 = vrot.lane.b32.xlu0 %v2505, 111
      %v2638 = vpop.permute.xlu0 %2637
      %2639 = vrot.lane.b32.xlu0 %v2497, 111
      %v2640 = vpop.permute.xlu0 %2639
      %2641 = vrot.lane.b32.xlu0 %v2507, 111
      %v2642 = vpop.permute.xlu0 %2641
      %2643 = vrot.lane.b32.xlu0 %v2506, 111
      %v2644 = vpop.permute.xlu0 %2643
      %2645 = vrot.lane.b32.xlu0 %v2498, 111
      %v2646 = vpop.permute.xlu0 %2645
      %2647 = vrot.lane.b32.xlu0 %v2508, 111
      %v2648 = vpop.permute.xlu0 %2647
      %v2649 = vsel %vm672, %v2638, %v2640
      %v2650 = vsel %vm672, %v2640, %v2642
      %v2651 = vsel %vm672, %v2644, %v2646
      %v2652 = vsel %vm672, %v2646, %v2648
      %v2663 = vrot.slane %v2525, 4
      %v2664 = vrot.slane %v2526, 4
      %v2665 = vrot.slane %v2527, 4
      %v2666 = vrot.slane %v2528, 4
      %v2667 = vsel %vm411, %v2663, %v2666
      %v2668 = vrot.slane %v2529, 4
      %v2669 = vsel %vm411, %v2664, %v2668
      %v2670 = vrot.slane %v2530, 4
      %v2671 = vsel %vm411, %v2665, %v2670
      %2672 = vrot.lane.b32.xlu0 %v2663, 110
      %v2673 = vpop.permute.xlu0 %2672
      %2674 = vrot.lane.b32.xlu0 %v2664, 110
      %v2675 = vpop.permute.xlu0 %2674
      %2676 = vrot.lane.b32.xlu0 %v2665, 110
      %v2677 = vpop.permute.xlu0 %2676
      %2678 = vrot.lane.b32.xlu0 %v2667, 110
      %v2679 = vpop.permute.xlu0 %2678
      %2680 = vrot.lane.b32.xlu0 %v2669, 110
      %v2681 = vpop.permute.xlu0 %2680
      %2682 = vrot.lane.b32.xlu0 %v2671, 110
      %v2683 = vpop.permute.xlu0 %2682
      %v2684 = vsel %vm516, %v2673, %v2675
      %v2685 = vsel %vm516, %v2675, %v2677
      %v2686 = vsel %vm516, %v2679, %v2681
      %v2687 = vsel %vm516, %v2681, %v2683
      %2698 = vrot.lane.b32.xlu0 %v2531, 96
      %v2699 = vpop.permute.xlu0 %2698
      %2700 = vrot.lane.b32.xlu0 %v2532, 96
      %v2701 = vpop.permute.xlu0 %2700
      %2702 = vrot.lane.b32.xlu0 %v2533, 96
      %v2703 = vpop.permute.xlu0 %2702
      %2704 = vrot.lane.b32.xlu0 %v2534, 96
      %v2705 = vpop.permute.xlu0 %2704
      %2706 = vrot.lane.b32.xlu0 %v2535, 96
      %v2707 = vpop.permute.xlu0 %2706
      %2708 = vrot.lane.b32.xlu0 %v2536, 96
      %v2709 = vpop.permute.xlu0 %2708
      %v2710 = vsel %vm543, %v2699, %v2701
      %v2711 = vsel %vm543, %v2701, %v2703
      %v2712 = vsel %vm543, %v2705, %v2707
      %v2713 = vsel %vm543, %v2707, %v2709
      %2718 = vrot.lane.b32.xlu0 %v2547, 95
      %v2719 = vpop.permute.xlu0 %2718
      %2720 = vrot.lane.b32.xlu0 %v2548, 95
      %v2721 = vpop.permute.xlu0 %2720
      %2722 = vrot.lane.b32.xlu0 %v2549, 95
      %v2723 = vpop.permute.xlu0 %2722
      %2724 = vrot.lane.b32.xlu0 %v2551, 95
      %v2725 = vpop.permute.xlu0 %2724
      %2726 = vrot.lane.b32.xlu0 %v2553, 95
      %v2727 = vpop.permute.xlu0 %2726
      %2728 = vrot.lane.b32.xlu0 %v2555, 95
      %v2729 = vpop.permute.xlu0 %2728
      %v2730 = vsel %vm554, %v2719, %v2721
      %v2731 = vsel %vm554, %v2721, %v2723
      %v2732 = vsel %vm554, %v2725, %v2727
      %v2733 = vsel %vm554, %v2727, %v2729
      %2744 = vrot.lane.b32.xlu0 %v2537, 94
      %v2745 = vpop.permute.xlu0 %2744
      %2746 = vrot.lane.b32.xlu0 %v2538, 94
      %v2747 = vpop.permute.xlu0 %2746
      %2748 = vrot.lane.b32.xlu0 %v2539, 94
      %v2749 = vpop.permute.xlu0 %2748
      %2750 = vrot.lane.b32.xlu0 %v2540, 94
      %v2751 = vpop.permute.xlu0 %2750
      %2752 = vrot.lane.b32.xlu0 %v2541, 94
      %v2753 = vpop.permute.xlu0 %2752
      %2754 = vrot.lane.b32.xlu0 %v2542, 94
      %v2755 = vpop.permute.xlu0 %2754
      %v2756 = vsel %vm581, %v2745, %v2747
      %v2757 = vsel %vm581, %v2747, %v2749
      %v2758 = vsel %vm581, %v2751, %v2753
      %v2759 = vsel %vm581, %v2753, %v2755
      %v2762 = vsel %vm411, %v2511, %v2568
      %v2763 = vsel %vm411, %v2512, %v2569
      %v2764 = vsel %vm411, %v2596, %v2629
      %v2765 = vsel %vm411, %v2597, %v2630
      %v2766 = vsel %vm411, %v2651, %v2684
      %v2767 = vsel %vm411, %v2652, %v2685
      %v2768 = vsel %vm411, %v2712, %v2730
      %v2769 = vsel %vm411, %v2713, %v2731
      %s2770 = scalar_lea.vmem %s5, 48
      %v2771 = vld [vmem:[%s2770] sm:$0xff]
      %v2772 = vld [vmem:[%s2770 + $0x8] sm:$0xf]
      %2774 = vset.pattern.permute.xlu0 0
      %2775 = vperm.xlu0 %2774, %v2771
      %v2776 = vpop.permute.xlu0 %2775
      %2779 = vset.pattern.permute.xlu0 0
      %2780 = vperm.xlu0 %2779, %v2772
      %v2781 = vpop.permute.xlu0 %2780
      %v2784 = vsel %vm1156, %v2459, 0
      %v2787 = vsel %vm1156, %v2460, 0
      %v2789 = vsel %vm411, %v2758, 0
      %v2791 = vsel %vm411, %v2759, 0
      %2793 = vmatprep.subr.mxu0 0.0
      %2794 = vmatpush1.msra.mxu0 0.0
      %2795 = vmatprep.subr.mxu0 0.0
      %2796 = vmatpush1.msra.mxu0 0.0
      %2797 = vmatprep.subr.mxu0 %v2791
      %2798 = vmatpush1.msra.mxu0 %v2789
      %2799 = vmatprep.subr.mxu0 %v2757
      %2800 = vmatpush1.msra.mxu0 %v2756
      %2801 = vmatprep.subr.mxu0 %v2733
      %2802 = vmatpush1.msra.mxu0 %v2732
      %2803 = vmatprep.subr.mxu0 %v2769
      %2804 = vmatpush1.msra.mxu0 %v2768
      %2805 = vmatprep.subr.mxu0 %v2711
      %2806 = vmatpush1.msra.mxu0 %v2710
      %2807 = vmatprep.subr.mxu0 %v2687
      %2808 = vmatpush1.msra.mxu0 %v2686
      %2809 = vmatprep.subr.mxu0 %v2767
      %2810 = vmatpush1.msra.mxu0 %v2766
      %2811 = vmatprep.subr.mxu0 %v2650
      %2812 = vmatpush1.msra.mxu0 %v2649
      %2813 = vmatprep.subr.mxu0 %v2632
      %2814 = vmatpush1.msra.mxu0 %v2631
      %2815 = vmatprep.subr.mxu0 %v2765
      %2816 = vmatpush1.msra.mxu0 %v2764
      %2817 = vmatprep.subr.mxu0 %v2595
      %2818 = vmatpush1.msra.mxu0 %v2594
      %2819 = vmatprep.subr.mxu0 %v2571
      %2820 = vmatpush1.msra.mxu0 %v2570
      %2821 = vmatprep.subr.mxu0 %v2763
      %2822 = vmatpush1.msra.mxu0 %v2762
      %2823 = vmatprep.subr.mxu0 %v2510
      %2824 = vmatpush1.msra.mxu0 %v2509
      %2825 = vmatprep.subr.mxu0 0.0
      %2826 = vmatpush2.msra.mxu0 0.0
      %2827 = vmatprep.subr.mxu0 0.0
      %2828 = vmatpush2.msra.mxu0 0.0
      %2829 = vmatprep.subr.mxu0 0.0
      %2830 = vmatpush2.msra.mxu0 0.0
      %2831 = vmatprep.subr.mxu0 0.0
      %2832 = vmatpush2.msra.mxu0 0.0
      %2833 = vmatprep.subr.mxu0 0.0
      %2834 = vmatpush2.msra.mxu0 0.0
      %2835 = vmatprep.subr.mxu0 0.0
      %2836 = vmatpush2.msra.mxu0 0.0
      %2837 = vmatprep.subr.mxu0 0.0
      %2838 = vmatpush2.msra.mxu0 0.0
      %2839 = vmatprep.subr.mxu0 0.0
      %2840 = vmatpush2.msra.mxu0 0.0
      %2841 = vmatprep.subr.mxu0 0.0
      %2842 = vmatpush2.msra.mxu0 0.0
      %2843 = vmatprep.subr.mxu0 0.0
      %2844 = vmatpush2.msra.mxu0 0.0
      %2845 = vmatprep.subr.mxu0 0.0
      %2846 = vmatpush2.msra.mxu0 0.0
      %2847 = vmatprep.subr.mxu0 0.0
      %2848 = vmatpush2.msra.mxu0 0.0
      %2849 = vmatprep.subr.mxu0 0.0
      %2850 = vmatpush2.msra.mxu0 0.0
      %2851 = vmatprep.subr.mxu0 0.0
      %2852 = vmatpush2.msra.mxu0 0.0
      %2853 = vmatprep.subr.mxu0 0.0
      %2854 = vmatpush2.msra.mxu0 0.0
      %2855 = vmatprep.subr.mxu0 0.0
      %2856 = vmatpush2.msra.mxu0 0.0
      %2857 = vmatprep.mubr.f32.mxu0 0.0
      %2858 = vmatmul.mubr.f32.gmra.mxu0 %v2784
      %v2859 = vpop.f32.mrf.mxu0
      %v2860 = vadd.f32 %v2776, %v2859
      %v2861 = vpop.f32.mrf.mxu0
      %v2862 = vadd.f32 %v2776, %v2861
      %2863 = vmatprep.mubr.f32.mxu0 0.0
      %2864 = vmatmul.mubr.f32.gmra.mxu0 %v2787
      %v2865 = vpop.f32.mrf.mxu0
      %v2866 = vadd.f32 %v2781, %v2865
      %v2867 = vpop.f32.mrf.mxu0
      %v2868 = vadd.f32 %v2781, %v2867
      %2869 = vdwg.mxu0
      %v2870 = vmax.f32 %v2860, 0.0
      %v2871 = vmax.f32 %v2862, 0.0
      %v2872 = vmax.f32 %v2866, 0.0
      %v2873 = vmax.f32 %v2868, 0.0
      %v2874 = vld [vmem:[%s8] sm:$0x7]
      %2879 = vrot.lane.b32.xlu0 %v2870, 17
      %v2880 = vpop.permute.xlu0 %2879
      %2881 = vrot.lane.b32.xlu0 %v2871, 17
      %v2882 = vpop.permute.xlu0 %2881
      %2883 = vrot.lane.b32.xlu0 %v2872, 17
      %v2884 = vpop.permute.xlu0 %2883
      %2885 = vrot.lane.b32.xlu0 %v2873, 17
      %v2886 = vpop.permute.xlu0 %2885
      %v2887 = vsel %vm368, %v2880, %v2882
      %v2888 = vsel %vm368, %v2884, %v2886
      %v2895 = vsel %vm368, 0.0, %v2880
      %v2896 = vsel %vm368, 0.0, %v2884
      %v2897 = vsel %vm368, %v2882, 0.0
      %v2898 = vsel %vm368, %v2886, 0.0
      %v2899 = vmul.f32 %v2895, %v390
      %v2900 = vmul.f32 %v2887, %v394
      %v2901 = vmul.f32 %v2896, %v390
      %v2902 = vmul.f32 %v2888, %v394
      %v2903 = vmul.f32 %v2895, %v438
      %v2904 = vmul.f32 %v2887, %v442
      %v2905 = vmul.f32 %v2897, %v440
      %v2906 = vmul.f32 %v2896, %v438
      %v2907 = vmul.f32 %v2888, %v442
      %v2908 = vmul.f32 %v2898, %v440
      %v2909 = vmul.f32 %v2895, %v467
      %v2910 = vmul.f32 %v2887, %v471
      %v2911 = vmul.f32 %v2897, %v469
      %v2912 = vmul.f32 %v2896, %v467
      %v2913 = vmul.f32 %v2888, %v471
      %v2914 = vmul.f32 %v2898, %v469
      %v2915 = vmul.f32 %v2895, %v494
      %v2916 = vmul.f32 %v2887, %v498
      %v2917 = vmul.f32 %v2897, %v496
      %v2918 = vmul.f32 %v2896, %v494
      %v2919 = vmul.f32 %v2888, %v498
      %v2920 = vmul.f32 %v2898, %v496
      %v2921 = vmul.f32 %v2895, %v521
      %v2922 = vmul.f32 %v2887, %v525
      %v2923 = vmul.f32 %v2897, %v523
      %v2924 = vmul.f32 %v2896, %v521
      %v2925 = vmul.f32 %v2888, %v525
      %v2926 = vmul.f32 %v2898, %v523
      %v2927 = vmul.f32 %v2895, %v559
      %v2928 = vmul.f32 %v2887, %v563
      %v2929 = vmul.f32 %v2897, %v561
      %v2930 = vmul.f32 %v2896, %v559
      %v2931 = vmul.f32 %v2888, %v563
      %v2932 = vmul.f32 %v2898, %v561
      %v2937 = vrot.slane %v2895, 4
      %v2938 = vrot.slane %v2887, 4
      %v2939 = vrot.slane %v2897, 4
      %v2940 = vrot.slane %v2896, 4
      %v2941 = vsel %vm411, %v2937, %v2940
      %v2942 = vrot.slane %v2888, 4
      %v2943 = vsel %vm411, %v2938, %v2942
      %v2944 = vrot.slane %v2898, 4
      %v2945 = vsel %vm411, %v2939, %v2944
      %2946 = vrot.lane.b32.xlu0 %v2937, 127
      %v2947 = vpop.permute.xlu0 %2946
      %2948 = vrot.lane.b32.xlu0 %v2938, 127
      %v2949 = vpop.permute.xlu0 %2948
      %2950 = vrot.lane.b32.xlu0 %v2939, 127
      %v2951 = vpop.permute.xlu0 %2950
      %2952 = vrot.lane.b32.xlu0 %v2941, 127
      %v2953 = vpop.permute.xlu0 %2952
      %2954 = vrot.lane.b32.xlu0 %v2943, 127
      %v2955 = vpop.permute.xlu0 %2954
      %2956 = vrot.lane.b32.xlu0 %v2945, 127
      %v2957 = vpop.permute.xlu0 %2956
      %v2958 = vsel %vm413, %v2947, %v2949
      %v2959 = vsel %vm413, %v2949, %v2951
      %v2960 = vsel %vm413, %v2953, %v2955
      %v2961 = vsel %vm413, %v2955, %v2957
      %2972 = vrot.lane.b32.xlu0 %v2903, 126
      %v2973 = vpop.permute.xlu0 %2972
      %2974 = vrot.lane.b32.xlu0 %v2904, 126
      %v2975 = vpop.permute.xlu0 %2974
      %2976 = vrot.lane.b32.xlu0 %v2905, 126
      %v2977 = vpop.permute.xlu0 %2976
      %2978 = vrot.lane.b32.xlu0 %v2906, 126
      %v2979 = vpop.permute.xlu0 %2978
      %2980 = vrot.lane.b32.xlu0 %v2907, 126
      %v2981 = vpop.permute.xlu0 %2980
      %2982 = vrot.lane.b32.xlu0 %v2908, 126
      %v2983 = vpop.permute.xlu0 %2982
      %v2984 = vsel %vm460, %v2973, %v2975
      %v2985 = vsel %vm460, %v2975, %v2977
      %v2986 = vsel %vm460, %v2979, %v2981
      %v2987 = vsel %vm460, %v2981, %v2983
      %v2998 = vrot.slane %v2909, 4
      %v2999 = vrot.slane %v2910, 4
      %v3000 = vrot.slane %v2911, 4
      %v3001 = vrot.slane %v2912, 4
      %v3002 = vsel %vm411, %v2998, %v3001
      %v3003 = vrot.slane %v2913, 4
      %v3004 = vsel %vm411, %v2999, %v3003
      %v3005 = vrot.slane %v2914, 4
      %v3006 = vsel %vm411, %v3000, %v3005
      %3007 = vrot.lane.b32.xlu0 %v2998, 112
      %v3008 = vpop.permute.xlu0 %3007
      %3009 = vrot.lane.b32.xlu0 %v2999, 112
      %v3010 = vpop.permute.xlu0 %3009
      %3011 = vrot.lane.b32.xlu0 %v3000, 112
      %v3012 = vpop.permute.xlu0 %3011
      %3013 = vrot.lane.b32.xlu0 %v3002, 112
      %v3014 = vpop.permute.xlu0 %3013
      %3015 = vrot.lane.b32.xlu0 %v3004, 112
      %v3016 = vpop.permute.xlu0 %3015
      %3017 = vrot.lane.b32.xlu0 %v3006, 112
      %v3018 = vpop.permute.xlu0 %3017
      %v3019 = vsel %vm489, %v3008, %v3010
      %v3020 = vsel %vm489, %v3010, %v3012
      %v3021 = vsel %vm489, %v3014, %v3016
      %v3022 = vsel %vm489, %v3016, %v3018
      %3027 = vrot.lane.b32.xlu0 %v2895, 111
      %v3028 = vpop.permute.xlu0 %3027
      %3029 = vrot.lane.b32.xlu0 %v2887, 111
      %v3030 = vpop.permute.xlu0 %3029
      %3031 = vrot.lane.b32.xlu0 %v2897, 111
      %v3032 = vpop.permute.xlu0 %3031
      %3033 = vrot.lane.b32.xlu0 %v2896, 111
      %v3034 = vpop.permute.xlu0 %3033
      %3035 = vrot.lane.b32.xlu0 %v2888, 111
      %v3036 = vpop.permute.xlu0 %3035
      %3037 = vrot.lane.b32.xlu0 %v2898, 111
      %v3038 = vpop.permute.xlu0 %3037
      %v3039 = vsel %vm672, %v3028, %v3030
      %v3040 = vsel %vm672, %v3030, %v3032
      %v3041 = vsel %vm672, %v3034, %v3036
      %v3042 = vsel %vm672, %v3036, %v3038
      %v3053 = vrot.slane %v2915, 4
      %v3054 = vrot.slane %v2916, 4
      %v3055 = vrot.slane %v2917, 4
      %v3056 = vrot.slane %v2918, 4
      %v3057 = vsel %vm411, %v3053, %v3056
      %v3058 = vrot.slane %v2919, 4
      %v3059 = vsel %vm411, %v3054, %v3058
      %v3060 = vrot.slane %v2920, 4
      %v3061 = vsel %vm411, %v3055, %v3060
      %3062 = vrot.lane.b32.xlu0 %v3053, 110
      %v3063 = vpop.permute.xlu0 %3062
      %3064 = vrot.lane.b32.xlu0 %v3054, 110
      %v3065 = vpop.permute.xlu0 %3064
      %3066 = vrot.lane.b32.xlu0 %v3055, 110
      %v3067 = vpop.permute.xlu0 %3066
      %3068 = vrot.lane.b32.xlu0 %v3057, 110
      %v3069 = vpop.permute.xlu0 %3068
      %3070 = vrot.lane.b32.xlu0 %v3059, 110
      %v3071 = vpop.permute.xlu0 %3070
      %3072 = vrot.lane.b32.xlu0 %v3061, 110
      %v3073 = vpop.permute.xlu0 %3072
      %v3074 = vsel %vm516, %v3063, %v3065
      %v3075 = vsel %vm516, %v3065, %v3067
      %v3076 = vsel %vm516, %v3069, %v3071
      %v3077 = vsel %vm516, %v3071, %v3073
      %3088 = vrot.lane.b32.xlu0 %v2921, 96
      %v3089 = vpop.permute.xlu0 %3088
      %3090 = vrot.lane.b32.xlu0 %v2922, 96
      %v3091 = vpop.permute.xlu0 %3090
      %3092 = vrot.lane.b32.xlu0 %v2923, 96
      %v3093 = vpop.permute.xlu0 %3092
      %3094 = vrot.lane.b32.xlu0 %v2924, 96
      %v3095 = vpop.permute.xlu0 %3094
      %3096 = vrot.lane.b32.xlu0 %v2925, 96
      %v3097 = vpop.permute.xlu0 %3096
      %3098 = vrot.lane.b32.xlu0 %v2926, 96
      %v3099 = vpop.permute.xlu0 %3098
      %v3100 = vsel %vm543, %v3089, %v3091
      %v3101 = vsel %vm543, %v3091, %v3093
      %v3102 = vsel %vm543, %v3095, %v3097
      %v3103 = vsel %vm543, %v3097, %v3099
      %3108 = vrot.lane.b32.xlu0 %v2937, 95
      %v3109 = vpop.permute.xlu0 %3108
      %3110 = vrot.lane.b32.xlu0 %v2938, 95
      %v3111 = vpop.permute.xlu0 %3110
      %3112 = vrot.lane.b32.xlu0 %v2939, 95
      %v3113 = vpop.permute.xlu0 %3112
      %3114 = vrot.lane.b32.xlu0 %v2941, 95
      %v3115 = vpop.permute.xlu0 %3114
      %3116 = vrot.lane.b32.xlu0 %v2943, 95
      %v3117 = vpop.permute.xlu0 %3116
      %3118 = vrot.lane.b32.xlu0 %v2945, 95
      %v3119 = vpop.permute.xlu0 %3118
      %v3120 = vsel %vm554, %v3109, %v3111
      %v3121 = vsel %vm554, %v3111, %v3113
      %v3122 = vsel %vm554, %v3115, %v3117
      %v3123 = vsel %vm554, %v3117, %v3119
      %3134 = vrot.lane.b32.xlu0 %v2927, 94
      %v3135 = vpop.permute.xlu0 %3134
      %3136 = vrot.lane.b32.xlu0 %v2928, 94
      %v3137 = vpop.permute.xlu0 %3136
      %3138 = vrot.lane.b32.xlu0 %v2929, 94
      %v3139 = vpop.permute.xlu0 %3138
      %3140 = vrot.lane.b32.xlu0 %v2930, 94
      %v3141 = vpop.permute.xlu0 %3140
      %3142 = vrot.lane.b32.xlu0 %v2931, 94
      %v3143 = vpop.permute.xlu0 %3142
      %3144 = vrot.lane.b32.xlu0 %v2932, 94
      %v3145 = vpop.permute.xlu0 %3144
      %v3146 = vsel %vm581, %v3135, %v3137
      %v3147 = vsel %vm581, %v3137, %v3139
      %v3148 = vsel %vm581, %v3141, %v3143
      %v3149 = vsel %vm581, %v3143, %v3145
      %v3152 = vsel %vm411, %v2901, %v2958
      %v3153 = vsel %vm411, %v2902, %v2959
      %v3154 = vsel %vm411, %v2986, %v3019
      %v3155 = vsel %vm411, %v2987, %v3020
      %v3156 = vsel %vm411, %v3041, %v3074
      %v3157 = vsel %vm411, %v3042, %v3075
      %v3158 = vsel %vm411, %v3102, %v3120
      %v3159 = vsel %vm411, %v3103, %v3121
      %v3160 = vld [vmem:[%s9] sm:$0x7]
      %3162 = vset.pattern.permute.xlu0 0
      %3163 = vperm.xlu0 %3162, %v3160
      %v3164 = vpop.permute.xlu0 %3163
      %v3167 = vsel %vm1156, %v2874, 0
      %v3169 = vsel %vm411, %v3148, 0
      %v3171 = vsel %vm411, %v3149, 0
      %3173 = vmatprep.subr.mxu0 0.0
      %3174 = vmatpush1.msra.mxu0 0.0
      %3175 = vmatprep.subr.mxu0 0.0
      %3176 = vmatpush1.msra.mxu0 0.0
      %3177 = vmatprep.subr.mxu0 %v3171
      %3178 = vmatpush1.msra.mxu0 %v3169
      %3179 = vmatprep.subr.mxu0 %v3147
      %3180 = vmatpush1.msra.mxu0 %v3146
      %3181 = vmatprep.subr.mxu0 %v3123
      %3182 = vmatpush1.msra.mxu0 %v3122
      %3183 = vmatprep.subr.mxu0 %v3159
      %3184 = vmatpush1.msra.mxu0 %v3158
      %3185 = vmatprep.subr.mxu0 %v3101
      %3186 = vmatpush1.msra.mxu0 %v3100
      %3187 = vmatprep.subr.mxu0 %v3077
      %3188 = vmatpush1.msra.mxu0 %v3076
      %3189 = vmatprep.subr.mxu0 %v3157
      %3190 = vmatpush1.msra.mxu0 %v3156
      %3191 = vmatprep.subr.mxu0 %v3040
      %3192 = vmatpush1.msra.mxu0 %v3039
      %3193 = vmatprep.subr.mxu0 %v3022
      %3194 = vmatpush1.msra.mxu0 %v3021
      %3195 = vmatprep.subr.mxu0 %v3155
      %3196 = vmatpush1.msra.mxu0 %v3154
      %3197 = vmatprep.subr.mxu0 %v2985
      %3198 = vmatpush1.msra.mxu0 %v2984
      %3199 = vmatprep.subr.mxu0 %v2961
      %3200 = vmatpush1.msra.mxu0 %v2960
      %3201 = vmatprep.subr.mxu0 %v3153
      %3202 = vmatpush1.msra.mxu0 %v3152
      %3203 = vmatprep.subr.mxu0 %v2900
      %3204 = vmatpush1.msra.mxu0 %v2899
      %3205 = vmatprep.subr.mxu0 0.0
      %3206 = vmatpush2.msra.mxu0 0.0
      %3207 = vmatprep.subr.mxu0 0.0
      %3208 = vmatpush2.msra.mxu0 0.0
      %3209 = vmatprep.subr.mxu0 0.0
      %3210 = vmatpush2.msra.mxu0 0.0
      %3211 = vmatprep.subr.mxu0 0.0
      %3212 = vmatpush2.msra.mxu0 0.0
      %3213 = vmatprep.subr.mxu0 0.0
      %3214 = vmatpush2.msra.mxu0 0.0
      %3215 = vmatprep.subr.mxu0 0.0
      %3216 = vmatpush2.msra.mxu0 0.0
      %3217 = vmatprep.subr.mxu0 0.0
      %3218 = vmatpush2.msra.mxu0 0.0
      %3219 = vmatprep.subr.mxu0 0.0
      %3220 = vmatpush2.msra.mxu0 0.0
      %3221 = vmatprep.subr.mxu0 0.0
      %3222 = vmatpush2.msra.mxu0 0.0
      %3223 = vmatprep.subr.mxu0 0.0
      %3224 = vmatpush2.msra.mxu0 0.0
      %3225 = vmatprep.subr.mxu0 0.0
      %3226 = vmatpush2.msra.mxu0 0.0
      %3227 = vmatprep.subr.mxu0 0.0
      %3228 = vmatpush2.msra.mxu0 0.0
      %3229 = vmatprep.subr.mxu0 0.0
      %3230 = vmatpush2.msra.mxu0 0.0
      %3231 = vmatprep.subr.mxu0 0.0
      %3232 = vmatpush2.msra.mxu0 0.0
      %3233 = vmatprep.subr.mxu0 0.0
      %3234 = vmatpush2.msra.mxu0 0.0
      %3235 = vmatprep.subr.mxu0 0.0
      %3236 = vmatpush2.msra.mxu0 0.0
      %3237 = vmatprep.mubr.f32.mxu0 0.0
      %3238 = vmatmul.mubr.f32.gmra.mxu0 %v3167
      %v3239 = vpop.f32.mrf.mxu0
      %v3240 = vadd.f32 %v3164, %v3239
      %v3241 = vpop.f32.mrf.mxu0
      %v3242 = vadd.f32 %v3164, %v3241
      %3243 = vdwg.mxu0
      %v3246 = vcombine.low %v3240, %v3242
      %3248 = vst [vmem:[%s359] sm:$0x77] %v3246
      %p3249 = scmp.lt.s32.totalorder %s21, 1
      %s3250 = scalar_select %p3249, %s21, 1
      %s3251 = smul.addr %s3250, 2
      %s3252 = smul.addr %s3251, 4
      %s3253 = scalar_lea.vmem %s10, %s3252
      // Predicated region
      $region61: #{tpu_custom_call.1} parent=59 // pred_check
        %p3254 = pneg %p254
      $region62: #{tpu_custom_call.1} parent=59 // pred_check_branch
        %3256 = sbr.rel (%p3254) target = $region64
      $region63: #{tpu_custom_call.1} parent=59 // pred_region
        _
      $region64: #{tpu_custom_call.1} parent=59 // pred_fallthru
        _
    $region60: #{tpu_custom_call.1} parent=5 // pred_fallthru
      _
    %p3257 = scmp.le.s32.totalorder 2, %s16
    // Predicated region
    $region65: #{tpu_custom_call.1} parent=5 // pred_check
      %p3258 = pneg %p3257
    $region66: #{tpu_custom_call.1} parent=5 // pred_check_branch
      %3260 = sbr.rel (%p3258) target = $region68
    $region67: #{tpu_custom_call.1} parent=5 // pred_region
      %s3261 = ssub.s32 %s16, 2
      // Predicated region
      $region69: #{tpu_custom_call.1} parent=67 // pred_check
        %p3262 = pneg %p260
      $region70: #{tpu_custom_call.1} parent=67 // pred_check_branch
        %3264 = sbr.rel (%p3262) target = $region72
      $region71: #{tpu_custom_call.1} parent=67 // pred_region
        %p3265 = scmp.lt.s32.totalorder %s22, 1
        %s3266 = scalar_select %p3265, %s22, 1
        %s3267 = smul.addr %s3266, 2
        %s3268 = smul.addr %s3267, 4
        %s3269 = scalar_lea.vmem %s10, %s3268
      $region72: #{tpu_custom_call.1} parent=67 // pred_fallthru
        _
    $region68: #{tpu_custom_call.1} parent=5 // pred_fallthru
      _
  $region6: #{tpu_custom_call.1} parent=0 // loop_footer
    %s20 = sadd.s32 1, %s16
  $region7: #{tpu_custom_call.1} parent=0 // loop_footer_branch
    %15 = sbr.rel target = $region3
  $region8: #{tpu_custom_call.1} parent=0 // loop_exit
    _

</llo_original>
